<compile_context>
chip_gen: v7x
topology: tpu7x:2x2x1
jax: 0.10.0
libtpu: 0.0.40
codegen_flags: <defaults>
</compile_context>

<pallas_src>
import jax
import jax.numpy as jnp
from jax.experimental import pallas as pl
from jax.experimental.pallas import tpu as pltpu

LANE = 128

# Small compatibility shim (newer jax: CompilerParams; older: TPUCompilerParams).
_CompilerParams = getattr(pltpu, "CompilerParams", None)
if _CompilerParams is None:                       # pragma: no cover
    _CompilerParams = pltpu.TPUCompilerParams


def _round_up(x, m):
    return ((x + m - 1) // m) * m


def _pad2d(a, rows, cols):
    """Zero-pad a 2-D array up to (rows, cols)."""
    return jnp.pad(a, ((0, rows - a.shape[0]), (0, cols - a.shape[1])))


def _pick_tile(m, tmax, sub=8):
    """Tile size: multiple of `sub`, <= tmax, and chosen so the (parallel)
    grid has >=2 steps whenever m allows it (v7x shards across 2 TCs)."""
    if m <= sub:
        return sub
    return max(sub, min(tmax, _round_up((m + 1) // 2, sub)))


# ----------------------------------------------------------------------------
# Pallas kernels
# ----------------------------------------------------------------------------
def _conv_relu_pool_kernel(p_ref, w_ref, b_ref, o_ref):
    """Fused conv-as-matmul + bias + ReLU + 2x2 max-pool for one M tile.

    p_ref: (4, TM, Kp) bf16  -- im2col patches grouped by pool-window parity
    w_ref: (Kp, OCP)   bf16  -- conv weights, K and OC zero-padded
    b_ref: (1, OCP)    f32
    o_ref: (TM, OCP)   bf16  -- pooled activation rows (batch-flattened)
    """
    w = w_ref[...]
    a0 = jnp.dot(p_ref[0], w, preferred_element_type=jnp.float32)
    a1 = jnp.dot(p_ref[1], w, preferred_element_type=jnp.float32)
    a2 = jnp.dot(p_ref[2], w, preferred_element_type=jnp.float32)
    a3 = jnp.dot(p_ref[3], w, preferred_element_type=jnp.float32)
    # max-pool over the 4 window positions; commutes with (monotone) bias+ReLU
    m = jnp.maximum(jnp.maximum(a0, a1), jnp.maximum(a2, a3))
    o_ref[...] = jnp.maximum(m + b_ref[...], 0.0).astype(o_ref.dtype)


def conv_relu_pool(p4, w_pad, b_pad, *, tm=512):
    """relu(maxpool2x2(conv(x))) with the batch flattened into M."""
    four, M, Kp = p4.shape
    assert four == 4
    OCP = w_pad.shape[1]
    TM = _pick_tile(M, tm)
    Mp = _round_up(M, TM)
    p4p = jnp.pad(p4, ((0, 0), (0, Mp - M), (0, 0)))
    out = pl.pallas_call(
        _conv_relu_pool_kernel,
        grid=(Mp // TM,),
        out_shape=jax.ShapeDtypeStruct((Mp, OCP), jnp.bfloat16),
        in_specs=[
            pl.BlockSpec((4, TM, Kp), lambda m: (0, m, 0)),
            pl.BlockSpec((Kp, OCP), lambda m: (0, 0)),
            pl.BlockSpec((1, OCP), lambda m: (0, 0)),
        ],
        out_specs=pl.BlockSpec((TM, OCP), lambda m: (m, 0)),
        compiler_params=_CompilerParams(
            dimension_semantics=("parallel",),
            # let XLA fuse the im2col producer into the patches input DMA
            allow_input_fusion=[True, False, False],
        ),
    )(p4p, w_pad, b_pad)
    return out[:M]


def _mlp2_relu_kernel(x_ref, w1_ref, b1_ref, w2_ref, b2_ref, o_ref):
    """Fused fc1 + ReLU + fc2 + ReLU; the intermediate stays in VMEM/vregs."""
    h = jnp.dot(x_ref[...], w1_ref[...], preferred_element_type=jnp.float32)
    h = jnp.maximum(h + b1_ref[...], 0.0)
    o = jnp.dot(h.astype(w2_ref.dtype), w2_ref[...],
                preferred_element_type=jnp.float32)
    o_ref[...] = jnp.maximum(o + b2_ref[...], 0.0).astype(o_ref.dtype)


def fused_mlp_relu(x, w1_pad, b1_pad, w2_pad, b2_pad, *, tm=512):
    """relu(relu(x @ w1 + b1) @ w2 + b2), tiled over M with a parallel grid."""
    M, K1p = x.shape
    H1 = w1_pad.shape[1]
    H2 = w2_pad.shape[1]
    TM = _pick_tile(M, tm)
    Mp = _round_up(M, TM)
    xp = jnp.pad(x, ((0, Mp - M), (0, 0)))
    out = pl.pallas_call(
        _mlp2_relu_kernel,
        grid=(Mp // TM,),
        out_shape=jax.ShapeDtypeStruct((Mp, H2), jnp.bfloat16),
        in_specs=[
            pl.BlockSpec((TM, K1p), lambda i: (i, 0)),
            pl.BlockSpec((K1p, H1), lambda i: (0, 0)),
            pl.BlockSpec((1, H1), lambda i: (0, 0)),
            pl.BlockSpec((H1, H2), lambda i: (0, 0)),
            pl.BlockSpec((1, H2), lambda i: (0, 0)),
        ],
        out_specs=pl.BlockSpec((TM, H2), lambda i: (i, 0)),
        compiler_params=_CompilerParams(dimension_semantics=("parallel",)),
    )(xp, w1_pad, b1_pad, w2_pad, b2_pad)
    return out[:M]


# ----------------------------------------------------------------------------
# Host-side glue: im2col with pool-parity grouping (layout plumbing only)
# ----------------------------------------------------------------------------
def im2col_pool_grouped(x_nhwc, kh, kw, k_pad):
    """Conv patches grouped by 2x2 pool-window position, batch-flattened.

    Returns (4, N*OH2*OW2, k_pad); feature order is (c, i, j), matching
    torch's Conv2d weight.reshape(OC, IC*KH*KW); K is zero-padded to k_pad.
    """
    N, H, W, C = x_nhwc.shape
    OH, OW = H - kh + 1, W - kw + 1
    OH2, OW2 = OH // 2, OW // 2          # floor, like nn.MaxPool2d(2, 2)
    K = C * kh * kw
    cols = [x_nhwc[:, i:i + OH, j:j + OW, :]
            for i in range(kh) for j in range(kw)]
    p = jnp.stack(cols, axis=-1)                         # (N, OH, OW, C, kh*kw)
    p = p.reshape(N, OH, OW, K)                          # feature idx = c*kh*kw + i*kw + j
    parts = [p[:, dy::2, dx::2, :][:, :OH2, :OW2, :]
             for dy in (0, 1) for dx in (0, 1)]          # 4 window positions
    p4 = jnp.stack(parts, axis=0)                        # (4, N, OH2, OW2, K)
    p4 = p4.reshape(4, N * OH2 * OW2, K)
    p4 = jnp.pad(p4, ((0, 0), (0, 0), (0, k_pad - K)))   # lane-align contraction
    return p4, OH2, OW2


# ----------------------------------------------------------------------------
# Model
# ----------------------------------------------------------------------------
def init_params(key, input_dim=400, hidden_dims=(120, 84)):
    def uniform(k, shape, fan_in):
        bound = 1.0 / jnp.sqrt(fan_in)
        return jax.random.uniform(k, shape, jnp.float32, -bound, bound)

    ks = jax.random.split(key, 8)
    return {
        "conv1_w": uniform(ks[0], (6, 3, 5, 5), 3 * 5 * 5),
        "conv1_b": uniform(ks[1], (6,), 3 * 5 * 5),
        "conv2_w": uniform(ks[2], (16, 6, 5, 5), 6 * 5 * 5),
        "conv2_b": uniform(ks[3], (16,), 6 * 5 * 5),
        "fc1_w": uniform(ks[4], (hidden_dims[0], input_dim), input_dim),
        "fc1_b": uniform(ks[5], (hidden_dims[0],), input_dim),
        "fc2_w": uniform(ks[6], (hidden_dims[1], hidden_dims[0]), hidden_dims[0]),
        "fc2_b": uniform(ks[7], (hidden_dims[1],), hidden_dims[0]),
    }


def simple_cnn_header_forward(params, x_nchw):
    N, C, H, W = x_nchw.shape
    assert (C, H, W) == (3, 32, 32), "architecture requires 3x32x32 inputs"
    cdt = jnp.bfloat16

    oc1 = params["conv1_w"].shape[0]
    oc2 = params["conv2_w"].shape[0]
    ocp1 = _round_up(oc1, LANE)          # 128 (do not pad wider than 128)
    ocp2 = _round_up(oc2, LANE)          # 128

    x = jnp.transpose(x_nchw, (0, 2, 3, 1)).astype(cdt)        # NCHW -> NHWC

    # conv1 (3->6, 5x5) + ReLU + 2x2 max-pool (one fused, M-tiled Pallas kernel)
    k1 = C * 25
    k1p = _round_up(k1, LANE)                                   # 75 -> 128
    w1 = _pad2d(params["conv1_w"].reshape(oc1, -1).T.astype(cdt), k1p, ocp1)
    b1 = _pad2d(params["conv1_b"].reshape(1, -1).astype(jnp.float32), 1, ocp1)
    p4, oh2, ow2 = im2col_pool_grouped(x, 5, 5, k1p)
    y = conv_relu_pool(p4, w1, b1).reshape(N, oh2, ow2, ocp1)[..., :oc1]

    # conv2 (6->16, 5x5) + ReLU + 2x2 max-pool (one fused, M-tiled Pallas kernel)
    k2 = oc1 * 25
    k2p = _round_up(k2, LANE)                                   # 150 -> 256
    w2 = _pad2d(params["conv2_w"].reshape(oc2, -1).T.astype(cdt), k2p, ocp2)
    b2 = _pad2d(params["conv2_b"].reshape(1, -1).astype(jnp.float32), 1, ocp2)
    p4, oh2, ow2 = im2col_pool_grouped(y, 5, 5, k2p)
    y = conv_relu_pool(p4, w2, b2).reshape(N, oh2, ow2, ocp2)[..., :oc2]

    # flatten in NCHW order to match torch's x.view(-1, 16*5*5)
    y = jnp.transpose(y, (0, 3, 1, 2)).reshape(N, oc2 * oh2 * ow2).astype(cdt)

    # fc1 + ReLU -> fc2 + ReLU (single fused, M-tiled Pallas kernel)
    hd0 = params["fc1_w"].shape[0]
    hd1 = params["fc2_w"].shape[0]
    in1 = params["fc1_w"].shape[1]
    k1fp = _round_up(in1, LANE)                                 # 400 -> 512
    h1p = _round_up(hd0, LANE)
    h2p = _round_up(hd1, LANE)
    yflat = jnp.pad(y, ((0, 0), (0, k1fp - in1)))
    fw1 = _pad2d(params["fc1_w"].T.astype(cdt), k1fp, h1p)
    fb1 = _pad2d(params["fc1_b"].reshape(1, -1).astype(jnp.float32), 1, h1p)
    fw2 = _pad2d(params["fc2_w"].T.astype(cdt), h1p, h2p)
    fb2 = _pad2d(params["fc2_b"].reshape(1, -1).astype(jnp.float32), 1, h2p)
    out = fused_mlp_relu(yflat, fw1, fb1, fw2, fb2)
    # module contract is float32; kernel writeback stays bf16 to halve HBM bytes
    return out[:, :hd1].astype(jnp.float32)


# ----------------------------------------------------------------------------
# Pure-JAX f32 reference (PyTorch-equivalent semantics, for correctness check)
# ----------------------------------------------------------------------------
def reference_forward(params, x):
    def conv(x, w, b):
        y = jax.lax.conv_general_dilated(
            x, w, (1, 1), "VALID",
            dimension_numbers=("NCHW", "OIHW", "NCHW"))
        return y + b[None, :, None, None]

    def pool(x):
        return jax.lax.reduce_window(
            x, -jnp.inf, jax.lax.max, (1, 1, 2, 2), (1, 1, 2, 2), "VALID")

    relu = lambda v: jnp.maximum(v, 0.0)
    y = pool(relu(conv(x, params["conv1_w"], params["conv1_b"])))
    y = pool(relu(conv(y, params["conv2_w"], params["conv2_b"])))
    y = y.reshape(-1, 16 * 5 * 5)
    y = relu(y @ params["fc1_w"].T + params["fc1_b"])
    y = relu(y @ params["fc2_w"].T + params["fc2_b"])
    return y


if __name__ == "__main__":
    key = jax.random.PRNGKey(0)
    k_param, k_x = jax.random.split(key)

    # 32x32 RGB input is required by the architecture (view(-1, 16*5*5)).
    x = jax.random.normal(k_x, (2, 3, 32, 32), dtype=jnp.float32)
    params = init_params(k_param, input_dim=16 * 5 * 5, hidden_dims=(120, 84))

    fwd = jax.jit(simple_cnn_header_forward)
    out = jax.block_until_ready(fwd(params, x))
    ref = jax.block_until_ready(reference_forward(params, x))

    assert out.shape == (2, 84), out.shape
    # bf16 MXU operands / bf16 activations (f32 accumulation) vs an all-f32
    # reference: expected relative error ~1e-3..1e-2, compare at bf16 tolerance.
    if not jnp.allclose(out, ref, rtol=3e-2, atol=3e-2):
        raise AssertionError("Pallas output does not match reference")

    print("KERNEL_OK")
</pallas_src>

<mosaic_0001>
module attributes {stable_mosaic.version = 11 : i64} {
  func.func @_conv_relu_pool_kernel(%arg0: i32, %arg1: memref<4x200x128xbf16, #tpu.memory_space<vmem>>, %arg2: memref<128x128xbf16, #tpu.memory_space<vmem>>, %arg3: memref<1x128xf32, #tpu.memory_space<vmem>>, %arg4: memref<200x128xbf16, #tpu.memory_space<vmem>>) attributes {dimension_semantics = [#tpu.dimension_semantics<parallel>], iteration_bounds = array<i64: 2>, scalar_prefetch = 0 : i64, scratch_operands = 0 : i64, tpu.core_type = #tpu.core_type<tc>, window_params = [{transform_indices = @transform_0, window_bounds = array<i64: 4, 200, 128>}, {pipeline_mode = #tpu.pipeline_mode<synchronous>, transform_indices = @transform_1, window_bounds = array<i64: 128, 128>}, {pipeline_mode = #tpu.pipeline_mode<synchronous>, transform_indices = @transform_2, window_bounds = array<i64: 1, 128>}, {transform_indices = @transform_3, window_bounds = array<i64: 200, 128>}]} {
    %c0 = arith.constant 0 : index
    %c0_0 = arith.constant 0 : index
    %0 = vector.load %arg2[%c0, %c0_0] : memref<128x128xbf16, #tpu.memory_space<vmem>>, vector<128x128xbf16>
    %c0_1 = arith.constant 0 : index
    %c0_2 = arith.constant 0 : index
    %c0_3 = arith.constant 0 : index
    %1 = vector.load %arg1[%c0_1, %c0_2, %c0_3] : memref<4x200x128xbf16, #tpu.memory_space<vmem>>, vector<1x200x128xbf16>
    %2 = vector.shape_cast %1 : vector<1x200x128xbf16> to vector<200x128xbf16>
    %cst = arith.constant dense<0.000000e+00> : vector<200x128xf32>
    %3 = tpu.matmul %2, %0, %cst {dimension_numbers = #tpu.dot_dimension_numbers<[1], [0], [0], [1], [0, 0, 1, 1], [], []>} : vector<200x128xbf16>, vector<128x128xbf16>, vector<200x128xf32> -> vector<200x128xf32>
    %c1 = arith.constant 1 : index
    %c0_4 = arith.constant 0 : index
    %c0_5 = arith.constant 0 : index
    %4 = vector.load %arg1[%c1, %c0_4, %c0_5] : memref<4x200x128xbf16, #tpu.memory_space<vmem>>, vector<1x200x128xbf16>
    %5 = vector.shape_cast %4 : vector<1x200x128xbf16> to vector<200x128xbf16>
    %cst_6 = arith.constant dense<0.000000e+00> : vector<200x128xf32>
    %6 = tpu.matmul %5, %0, %cst_6 {dimension_numbers = #tpu.dot_dimension_numbers<[1], [0], [0], [1], [0, 0, 1, 1], [], []>} : vector<200x128xbf16>, vector<128x128xbf16>, vector<200x128xf32> -> vector<200x128xf32>
    %c2 = arith.constant 2 : index
    %c0_7 = arith.constant 0 : index
    %c0_8 = arith.constant 0 : index
    %7 = vector.load %arg1[%c2, %c0_7, %c0_8] : memref<4x200x128xbf16, #tpu.memory_space<vmem>>, vector<1x200x128xbf16>
    %8 = vector.shape_cast %7 : vector<1x200x128xbf16> to vector<200x128xbf16>
    %cst_9 = arith.constant dense<0.000000e+00> : vector<200x128xf32>
    %9 = tpu.matmul %8, %0, %cst_9 {dimension_numbers = #tpu.dot_dimension_numbers<[1], [0], [0], [1], [0, 0, 1, 1], [], []>} : vector<200x128xbf16>, vector<128x128xbf16>, vector<200x128xf32> -> vector<200x128xf32>
    %c3 = arith.constant 3 : index
    %c0_10 = arith.constant 0 : index
    %c0_11 = arith.constant 0 : index
    %10 = vector.load %arg1[%c3, %c0_10, %c0_11] : memref<4x200x128xbf16, #tpu.memory_space<vmem>>, vector<1x200x128xbf16>
    %11 = vector.shape_cast %10 : vector<1x200x128xbf16> to vector<200x128xbf16>
    %cst_12 = arith.constant dense<0.000000e+00> : vector<200x128xf32>
    %12 = tpu.matmul %11, %0, %cst_12 {dimension_numbers = #tpu.dot_dimension_numbers<[1], [0], [0], [1], [0, 0, 1, 1], [], []>} : vector<200x128xbf16>, vector<128x128xbf16>, vector<200x128xf32> -> vector<200x128xf32>
    %13 = arith.maximumf %3, %6 : vector<200x128xf32>
    %14 = arith.maximumf %9, %12 : vector<200x128xf32>
    %15 = arith.maximumf %13, %14 : vector<200x128xf32>
    %c0_13 = arith.constant 0 : index
    %c0_14 = arith.constant 0 : index
    %16 = vector.load %arg3[%c0_13, %c0_14] : memref<1x128xf32, #tpu.memory_space<vmem>>, vector<1x128xf32>
    %17 = vector.broadcast %16 : vector<1x128xf32> to vector<200x128xf32>
    %18 = arith.addf %15, %17 : vector<200x128xf32>
    %cst_15 = arith.constant 0.000000e+00 : f32
    %19 = vector.broadcast %cst_15 : f32 to vector<200x128xf32>
    %20 = arith.maximumf %18, %19 : vector<200x128xf32>
    %21 = arith.truncf %20 : vector<200x128xf32> to vector<200x128xbf16>
    %c0_16 = arith.constant 0 : index
    %c0_17 = arith.constant 0 : index
    %22 = vector.load %arg4[%c0_16, %c0_17] : memref<200x128xbf16, #tpu.memory_space<vmem>>, vector<200x128xbf16>
    tpu.vector_store %arg4[%c0_16, %c0_17], %21 {strides = array<i32>} : memref<200x128xbf16, #tpu.memory_space<vmem>>, vector<200x128xbf16>,
    return
  }
  func.func @transform_0(%arg0: i32) -> (i32, i32, i32) {
    %c0_i32 = arith.constant 0 : i32
    %c0_i32_0 = arith.constant 0 : i32
    %c0_i32_1 = arith.constant 0 : i32
    return %c0_i32, %arg0, %c0_i32_0 : i32, i32, i32
  }
  func.func @transform_1(%arg0: i32) -> (i32, i32) {
    %c0_i32 = arith.constant 0 : i32
    %c0_i32_0 = arith.constant 0 : i32
    %c0_i32_1 = arith.constant 0 : i32
    return %c0_i32, %c0_i32_0 : i32, i32
  }
  func.func @transform_2(%arg0: i32) -> (i32, i32) {
    %c0_i32 = arith.constant 0 : i32
    %c0_i32_0 = arith.constant 0 : i32
    %c0_i32_1 = arith.constant 0 : i32
    return %c0_i32, %c0_i32_0 : i32, i32
  }
  func.func @transform_3(%arg0: i32) -> (i32, i32) {
    %c0_i32 = arith.constant 0 : i32
    %c0_i32_0 = arith.constant 0 : i32
    return %arg0, %c0_i32 : i32, i32
  }
}

module attributes {stable_mosaic.version = 11 : i64} {
  func.func @_conv_relu_pool_kernel(%arg0: i32, %arg1: memref<4x32x256xbf16, #tpu.memory_space<vmem>>, %arg2: memref<256x128xbf16, #tpu.memory_space<vmem>>, %arg3: memref<1x128xf32, #tpu.memory_space<vmem>>, %arg4: memref<32x128xbf16, #tpu.memory_space<vmem>>) attributes {dimension_semantics = [#tpu.dimension_semantics<parallel>], iteration_bounds = array<i64: 2>, scalar_prefetch = 0 : i64, scratch_operands = 0 : i64, tpu.core_type = #tpu.core_type<tc>, window_params = [{transform_indices = @transform_0, window_bounds = array<i64: 4, 32, 256>}, {pipeline_mode = #tpu.pipeline_mode<synchronous>, transform_indices = @transform_1, window_bounds = array<i64: 256, 128>}, {pipeline_mode = #tpu.pipeline_mode<synchronous>, transform_indices = @transform_2, window_bounds = array<i64: 1, 128>}, {transform_indices = @transform_3, window_bounds = array<i64: 32, 128>}]} {
    %c0 = arith.constant 0 : index
    %c0_0 = arith.constant 0 : index
    %0 = vector.load %arg2[%c0, %c0_0] : memref<256x128xbf16, #tpu.memory_space<vmem>>, vector<256x128xbf16>
    %c0_1 = arith.constant 0 : index
    %c0_2 = arith.constant 0 : index
    %c0_3 = arith.constant 0 : index
    %1 = vector.load %arg1[%c0_1, %c0_2, %c0_3] : memref<4x32x256xbf16, #tpu.memory_space<vmem>>, vector<1x32x256xbf16>
    %2 = vector.shape_cast %1 : vector<1x32x256xbf16> to vector<32x256xbf16>
    %cst = arith.constant dense<0.000000e+00> : vector<32x128xf32>
    %3 = tpu.matmul %2, %0, %cst {dimension_numbers = #tpu.dot_dimension_numbers<[1], [0], [0], [1], [0, 0, 1, 1], [], []>} : vector<32x256xbf16>, vector<256x128xbf16>, vector<32x128xf32> -> vector<32x128xf32>
    %c1 = arith.constant 1 : index
    %c0_4 = arith.constant 0 : index
    %c0_5 = arith.constant 0 : index
    %4 = vector.load %arg1[%c1, %c0_4, %c0_5] : memref<4x32x256xbf16, #tpu.memory_space<vmem>>, vector<1x32x256xbf16>
    %5 = vector.shape_cast %4 : vector<1x32x256xbf16> to vector<32x256xbf16>
    %cst_6 = arith.constant dense<0.000000e+00> : vector<32x128xf32>
    %6 = tpu.matmul %5, %0, %cst_6 {dimension_numbers = #tpu.dot_dimension_numbers<[1], [0], [0], [1], [0, 0, 1, 1], [], []>} : vector<32x256xbf16>, vector<256x128xbf16>, vector<32x128xf32> -> vector<32x128xf32>
    %c2 = arith.constant 2 : index
    %c0_7 = arith.constant 0 : index
    %c0_8 = arith.constant 0 : index
    %7 = vector.load %arg1[%c2, %c0_7, %c0_8] : memref<4x32x256xbf16, #tpu.memory_space<vmem>>, vector<1x32x256xbf16>
    %8 = vector.shape_cast %7 : vector<1x32x256xbf16> to vector<32x256xbf16>
    %cst_9 = arith.constant dense<0.000000e+00> : vector<32x128xf32>
    %9 = tpu.matmul %8, %0, %cst_9 {dimension_numbers = #tpu.dot_dimension_numbers<[1], [0], [0], [1], [0, 0, 1, 1], [], []>} : vector<32x256xbf16>, vector<256x128xbf16>, vector<32x128xf32> -> vector<32x128xf32>
    %c3 = arith.constant 3 : index
    %c0_10 = arith.constant 0 : index
    %c0_11 = arith.constant 0 : index
    %10 = vector.load %arg1[%c3, %c0_10, %c0_11] : memref<4x32x256xbf16, #tpu.memory_space<vmem>>, vector<1x32x256xbf16>
    %11 = vector.shape_cast %10 : vector<1x32x256xbf16> to vector<32x256xbf16>
    %cst_12 = arith.constant dense<0.000000e+00> : vector<32x128xf32>
    %12 = tpu.matmul %11, %0, %cst_12 {dimension_numbers = #tpu.dot_dimension_numbers<[1], [0], [0], [1], [0, 0, 1, 1], [], []>} : vector<32x256xbf16>, vector<256x128xbf16>, vector<32x128xf32> -> vector<32x128xf32>
    %13 = arith.maximumf %3, %6 : vector<32x128xf32>
    %14 = arith.maximumf %9, %12 : vector<32x128xf32>
    %15 = arith.maximumf %13, %14 : vector<32x128xf32>
    %c0_13 = arith.constant 0 : index
    %c0_14 = arith.constant 0 : index
    %16 = vector.load %arg3[%c0_13, %c0_14] : memref<1x128xf32, #tpu.memory_space<vmem>>, vector<1x128xf32>
    %17 = vector.broadcast %16 : vector<1x128xf32> to vector<32x128xf32>
    %18 = arith.addf %15, %17 : vector<32x128xf32>
    %cst_15 = arith.constant 0.000000e+00 : f32
    %19 = vector.broadcast %cst_15 : f32 to vector<32x128xf32>
    %20 = arith.maximumf %18, %19 : vector<32x128xf32>
    %21 = arith.truncf %20 : vector<32x128xf32> to vector<32x128xbf16>
    %c0_16 = arith.constant 0 : index
    %c0_17 = arith.constant 0 : index
    %22 = vector.load %arg4[%c0_16, %c0_17] : memref<32x128xbf16, #tpu.memory_space<vmem>>, vector<32x128xbf16>
    tpu.vector_store %arg4[%c0_16, %c0_17], %21 {strides = array<i32>} : memref<32x128xbf16, #tpu.memory_space<vmem>>, vector<32x128xbf16>,
    return
  }
  func.func @transform_0(%arg0: i32) -> (i32, i32, i32) {
    %c0_i32 = arith.constant 0 : i32
    %c0_i32_0 = arith.constant 0 : i32
    %c0_i32_1 = arith.constant 0 : i32
    return %c0_i32, %arg0, %c0_i32_0 : i32, i32, i32
  }
  func.func @transform_1(%arg0: i32) -> (i32, i32) {
    %c0_i32 = arith.constant 0 : i32
    %c0_i32_0 = arith.constant 0 : i32
    %c0_i32_1 = arith.constant 0 : i32
    return %c0_i32, %c0_i32_0 : i32, i32
  }
  func.func @transform_2(%arg0: i32) -> (i32, i32) {
    %c0_i32 = arith.constant 0 : i32
    %c0_i32_0 = arith.constant 0 : i32
    %c0_i32_1 = arith.constant 0 : i32
    return %c0_i32, %c0_i32_0 : i32, i32
  }
  func.func @transform_3(%arg0: i32) -> (i32, i32) {
    %c0_i32 = arith.constant 0 : i32
    %c0_i32_0 = arith.constant 0 : i32
    return %arg0, %c0_i32 : i32, i32
  }
}

module attributes {stable_mosaic.version = 11 : i64} {
  func.func @_mlp2_relu_kernel(%arg0: i32, %arg1: memref<8x512xbf16, #tpu.memory_space<vmem>>, %arg2: memref<512x128xbf16, #tpu.memory_space<vmem>>, %arg3: memref<1x128xf32, #tpu.memory_space<vmem>>, %arg4: memref<128x128xbf16, #tpu.memory_space<vmem>>, %arg5: memref<1x128xf32, #tpu.memory_space<vmem>>, %arg6: memref<8x128xbf16, #tpu.memory_space<vmem>>) attributes {dimension_semantics = [#tpu.dimension_semantics<parallel>], iteration_bounds = array<i64: 1>, scalar_prefetch = 0 : i64, scratch_operands = 0 : i64, tpu.core_type = #tpu.core_type<tc>, window_params = [{transform_indices = @transform_0, window_bounds = array<i64: 8, 512>}, {pipeline_mode = #tpu.pipeline_mode<synchronous>, transform_indices = @transform_1, window_bounds = array<i64: 512, 128>}, {pipeline_mode = #tpu.pipeline_mode<synchronous>, transform_indices = @transform_2, window_bounds = array<i64: 1, 128>}, {pipeline_mode = #tpu.pipeline_mode<synchronous>, transform_indices = @transform_3, window_bounds = array<i64: 128, 128>}, {pipeline_mode = #tpu.pipeline_mode<synchronous>, transform_indices = @transform_4, window_bounds = array<i64: 1, 128>}, {transform_indices = @transform_5, window_bounds = array<i64: 8, 128>}]} {
    %c0 = arith.constant 0 : index
    %c0_0 = arith.constant 0 : index
    %0 = vector.load %arg1[%c0, %c0_0] : memref<8x512xbf16, #tpu.memory_space<vmem>>, vector<8x512xbf16>
    %c0_1 = arith.constant 0 : index
    %c0_2 = arith.constant 0 : index
    %1 = vector.load %arg2[%c0_1, %c0_2] : memref<512x128xbf16, #tpu.memory_space<vmem>>, vector<512x128xbf16>
    %cst = arith.constant dense<0.000000e+00> : vector<8x128xf32>
    %2 = tpu.matmul %0, %1, %cst {dimension_numbers = #tpu.dot_dimension_numbers<[1], [0], [0], [1], [0, 0, 1, 1], [], []>} : vector<8x512xbf16>, vector<512x128xbf16>, vector<8x128xf32> -> vector<8x128xf32>
    %c0_3 = arith.constant 0 : index
    %c0_4 = arith.constant 0 : index
    %3 = vector.load %arg3[%c0_3, %c0_4] : memref<1x128xf32, #tpu.memory_space<vmem>>, vector<1x128xf32>
    %4 = vector.broadcast %3 : vector<1x128xf32> to vector<8x128xf32>
    %5 = arith.addf %2, %4 : vector<8x128xf32>
    %cst_5 = arith.constant 0.000000e+00 : f32
    %6 = vector.broadcast %cst_5 : f32 to vector<8x128xf32>
    %7 = arith.maximumf %5, %6 : vector<8x128xf32>
    %8 = arith.truncf %7 : vector<8x128xf32> to vector<8x128xbf16>
    %c0_6 = arith.constant 0 : index
    %c0_7 = arith.constant 0 : index
    %9 = vector.load %arg4[%c0_6, %c0_7] : memref<128x128xbf16, #tpu.memory_space<vmem>>, vector<128x128xbf16>
    %cst_8 = arith.constant dense<0.000000e+00> : vector<8x128xf32>
    %10 = tpu.matmul %8, %9, %cst_8 {dimension_numbers = #tpu.dot_dimension_numbers<[1], [0], [0], [1], [0, 0, 1, 1], [], []>} : vector<8x128xbf16>, vector<128x128xbf16>, vector<8x128xf32> -> vector<8x128xf32>
    %c0_9 = arith.constant 0 : index
    %c0_10 = arith.constant 0 : index
    %11 = vector.load %arg5[%c0_9, %c0_10] : memref<1x128xf32, #tpu.memory_space<vmem>>, vector<1x128xf32>
    %12 = vector.broadcast %11 : vector<1x128xf32> to vector<8x128xf32>
    %13 = arith.addf %10, %12 : vector<8x128xf32>
    %cst_11 = arith.constant 0.000000e+00 : f32
    %14 = vector.broadcast %cst_11 : f32 to vector<8x128xf32>
    %15 = arith.maximumf %13, %14 : vector<8x128xf32>
    %16 = arith.truncf %15 : vector<8x128xf32> to vector<8x128xbf16>
    %c0_12 = arith.constant 0 : index
    %c0_13 = arith.constant 0 : index
    %17 = vector.load %arg6[%c0_12, %c0_13] : memref<8x128xbf16, #tpu.memory_space<vmem>>, vector<8x128xbf16>
    tpu.vector_store %arg6[%c0_12, %c0_13], %16 {strides = array<i32>} : memref<8x128xbf16, #tpu.memory_space<vmem>>, vector<8x128xbf16>,
    return
  }
  func.func @transform_0(%arg0: i32) -> (i32, i32) {
    %c0_i32 = arith.constant 0 : i32
    %c0_i32_0 = arith.constant 0 : i32
    return %arg0, %c0_i32 : i32, i32
  }
  func.func @transform_1(%arg0: i32) -> (i32, i32) {
    %c0_i32 = arith.constant 0 : i32
    %c0_i32_0 = arith.constant 0 : i32
    %c0_i32_1 = arith.constant 0 : i32
    return %c0_i32, %c0_i32_0 : i32, i32
  }
  func.func @transform_2(%arg0: i32) -> (i32, i32) {
    %c0_i32 = arith.constant 0 : i32
    %c0_i32_0 = arith.constant 0 : i32
    %c0_i32_1 = arith.constant 0 : i32
    return %c0_i32, %c0_i32_0 : i32, i32
  }
  func.func @transform_3(%arg0: i32) -> (i32, i32) {
    %c0_i32 = arith.constant 0 : i32
    %c0_i32_0 = arith.constant 0 : i32
    %c0_i32_1 = arith.constant 0 : i32
    return %c0_i32, %c0_i32_0 : i32, i32
  }
  func.func @transform_4(%arg0: i32) -> (i32, i32) {
    %c0_i32 = arith.constant 0 : i32
    %c0_i32_0 = arith.constant 0 : i32
    %c0_i32_1 = arith.constant 0 : i32
    return %c0_i32, %c0_i32_0 : i32, i32
  }
  func.func @transform_5(%arg0: i32) -> (i32, i32) {
    %c0_i32 = arith.constant 0 : i32
    %c0_i32_0 = arith.constant 0 : i32
    return %arg0, %c0_i32 : i32, i32
  }
}

</mosaic_0001>

<llo_original>
// kernel: simple_cnn_header_forward.6
$region0: #{simple_cnn_header_forward.6}
  #allocation0 [shape = 'u32[]', space=smem, size = 0x4, offset = 0x4, fixed_abs, tag = 'smem constant byte address 0x4 - core index']
  #allocation1 [shape = 'u32[144,128]{1,0:T(1,128)}', space=vmem, size = 0x12000, scoped, tag = 'internal scratch']
  #allocation2 [shape = 'u32[2048]{0}', space=vmem, size = 0x2000, scoped, tag = 'scoped memory for simple_cnn_header_forward.6']
  #allocation3 [shape = 'u32[2048]{0}', space=vmem, size = 0x2000, scoped, tag = 'scoped memory for simple_cnn_header_forward.6']
  #allocation4 [shape = 'u32[2048]{0}', space=vmem, size = 0x2000, scoped, tag = 'scoped memory for simple_cnn_header_forward.6']
  #allocation5 [shape = 'u32[2048]{0}', space=vmem, size = 0x2000, scoped, tag = 'scoped memory for simple_cnn_header_forward.6']
  #allocation6 [shape = 'u32[2048]{0}', space=vmem, size = 0x2000, scoped, tag = 'scoped memory for simple_cnn_header_forward.6']
  %s0 = inlined_call_operand.vmem [shape: bf16[128,128], index: 0, kind: input, shape index: {}]
  %s1 = inlined_call_operand.vmem [shape: f32[1,128], index: 1, kind: input, shape index: {}]
  %s2 = inlined_call_operand.vmem [shape: bf16[4,392,128], index: 2, kind: input, shape index: {}]
  %s3 = inlined_call_operand.<no memory space> [shape: bf16[], index: 3, kind: input, shape index: {}]
  %s4 = inlined_call_operand.vmem [shape: bf16[400,128], index: 4, kind: output, shape index: {}]
  %s5 = sld [smem:[#allocation0]]
  $region45: #{simple_cnn_header_forward.6} parent=0
    _
  %s7 = ssub.s32 1, %s5
  %s8 = scalar_select 0, %s7, %s5
  %v9 = vstv %s3
  %v10 = vunpack.i.l.bf16 %v9
  %v12 = vunpack.i.h.bf16 %v9
  loop: start=0, step=1, limit=4
  $region2: #{simple_cnn_header_forward.6} parent=0 // loop_pre_header
    _
  $region3: #{simple_cnn_header_forward.6} parent=0 // loop_header
    %s15 = sphi 0, %s19
    %p16 = scmp.ge.s32.totalorder %s15, 4
    %s25 = sphi 0, %s27
    %s28 = sphi 0, %s25
    %s29 = sphi 0, %s28
    %s45 = sphi 0, %s29
    %s49 = sphi 0, %s49
    %s51 = sphi 0, %s49
    %s52 = sphi 0, %s51
    %s66 = sphi 0, %s52
    %s70 = sphi 0, %s70
    %s72 = sphi 0, %s70
    %s73 = sphi 0, %s72
    %s87 = sphi 0, %s73
    %s93 = sphi 0, %s95
    %s96 = sphi 0, %s93
    %s97 = sphi 0, %s96
    %s113 = sphi 0, %s97
  $region4: #{simple_cnn_header_forward.6} parent=0 // loop_header_branch
    %18 = sbr.rel (%p16) target = $region8
  $region5: #{simple_cnn_header_forward.6} parent=0 // loop_body
    %s20 = ssub.s32 %s15, 1
    %s21 = ssub.s32 %s15, 2
    %s22 = sadd.s32 %s15, 1
    %s23 = ssub.s32 %s15, %s22
    %p24 = scmp.eq.s32.totalorder %s23, 0
    %s26 = sadd.s32 %s25, 1
    %s27 = scalar_select %p24, %s25, %s26
    %p30 = pneg %p24
    %p31 = scmp.eq.s32.totalorder %s15, 1
    %p32 = por %p30, %p31
    %p33 = scmp.ne.s32.totalorder %s25, %s28
    %p34 = scmp.eq.s32.totalorder %s15, 0
    %p35 = por %p33, %p34
    %p36 = scmp.ne.s32.totalorder %s25, %s28
    %p37 = scmp.eq.s32.totalorder %s20, 1
    %p38 = por %p36, %p37
    %p39 = scmp.ne.s32.totalorder %s28, %s29
    %p40 = scmp.eq.s32.totalorder %s20, 0
    %p41 = por %p39, %p40
    %p42 = scmp.ne.s32.totalorder %s28, %s29
    %p43 = scmp.eq.s32.totalorder %s21, 1
    %p44 = por %p42, %p43
    %p46 = scmp.ne.s32.totalorder %s29, %s45
    %p47 = scmp.eq.s32.totalorder %s21, 0
    %p48 = por %p46, %p47
    %s50 = sadd.s32 %s49, 1
    %p53 = scmp.eq.s32.totalorder %s15, 1
    %p54 = scmp.ne.s32.totalorder %s49, %s51
    %p55 = scmp.eq.s32.totalorder %s15, 0
    %p56 = por %p54, %p55
    %p57 = scmp.ne.s32.totalorder %s49, %s51
    %p58 = scmp.eq.s32.totalorder %s20, 1
    %p59 = por %p57, %p58
    %p60 = scmp.ne.s32.totalorder %s51, %s52
    %p61 = scmp.eq.s32.totalorder %s20, 0
    %p62 = por %p60, %p61
    %p63 = scmp.ne.s32.totalorder %s51, %s52
    %p64 = scmp.eq.s32.totalorder %s21, 1
    %p65 = por %p63, %p64
    %p67 = scmp.ne.s32.totalorder %s52, %s66
    %p68 = scmp.eq.s32.totalorder %s21, 0
    %p69 = por %p67, %p68
    %s71 = sadd.s32 %s70, 1
    %p74 = scmp.eq.s32.totalorder %s15, 1
    %p75 = scmp.ne.s32.totalorder %s70, %s72
    %p76 = scmp.eq.s32.totalorder %s15, 0
    %p77 = por %p75, %p76
    %p78 = scmp.ne.s32.totalorder %s70, %s72
    %p79 = scmp.eq.s32.totalorder %s20, 1
    %p80 = por %p78, %p79
    %p81 = scmp.ne.s32.totalorder %s72, %s73
    %p82 = scmp.eq.s32.totalorder %s20, 0
    %p83 = por %p81, %p82
    %p84 = scmp.ne.s32.totalorder %s72, %s73
    %p85 = scmp.eq.s32.totalorder %s21, 1
    %p86 = por %p84, %p85
    %p88 = scmp.ne.s32.totalorder %s73, %s87
    %p89 = scmp.eq.s32.totalorder %s21, 0
    %p90 = por %p88, %p89
    %s91 = ssub.s32 %s15, %s22
    %p92 = scmp.eq.s32.totalorder %s91, 0
    %s94 = sadd.s32 %s93, 1
    %s95 = scalar_select %p92, %s93, %s94
    %p98 = pneg %p92
    %p99 = scmp.eq.s32.totalorder %s15, 1
    %p100 = por %p98, %p99
    %p101 = scmp.ne.s32.totalorder %s93, %s96
    %p102 = scmp.eq.s32.totalorder %s15, 0
    %p103 = por %p101, %p102
    %p104 = scmp.ne.s32.totalorder %s93, %s96
    %p105 = scmp.eq.s32.totalorder %s20, 1
    %p106 = por %p104, %p105
    %p107 = scmp.ne.s32.totalorder %s96, %s97
    %p108 = scmp.eq.s32.totalorder %s20, 0
    %p109 = por %p107, %p108
    %p110 = scmp.ne.s32.totalorder %s96, %s97
    %p111 = scmp.eq.s32.totalorder %s21, 1
    %p112 = por %p110, %p111
    %p114 = scmp.ne.s32.totalorder %s97, %s113
    %p115 = scmp.eq.s32.totalorder %s21, 0
    %p116 = por %p114, %p115
    %p117 = scmp.le.s32.totalorder 1, %s15
    %p118 = scmp.lt.s32.totalorder %s15, 3
    %p119 = pnand %p117, %p118
    %p120 = pneg %p119
    // Predicated region
    $region9: #{simple_cnn_header_forward.6} parent=5 // pred_check
      _
    $region10: #{simple_cnn_header_forward.6} parent=5 // pred_check_branch
      %122 = sbr.rel (%p119) target = $region12
    $region11: #{simple_cnn_header_forward.6} parent=5 // pred_region
      %s123 = ssub.s32 %s15, 1
      // Predicated region
      $region13: #{simple_cnn_header_forward.6} parent=11 // pred_check
        %p124 = pneg %p62
      $region14: #{simple_cnn_header_forward.6} parent=11 // pred_check_branch
        %126 = sbr.rel (%p124) target = $region16
      $region15: #{simple_cnn_header_forward.6} parent=11 // pred_region
        _
      $region16: #{simple_cnn_header_forward.6} parent=11 // pred_fallthru
        _
      // Predicated region
      $region17: #{simple_cnn_header_forward.6} parent=11 // pred_check
        %p127 = pneg %p83
      $region18: #{simple_cnn_header_forward.6} parent=11 // pred_check_branch
        %129 = sbr.rel (%p127) target = $region20
      $region19: #{simple_cnn_header_forward.6} parent=11 // pred_region
        _
      $region20: #{simple_cnn_header_forward.6} parent=11 // pred_fallthru
        _
    $region12: #{simple_cnn_header_forward.6} parent=5 // pred_fallthru
      _
    %p130 = scmp.lt.s32.totalorder %s15, 2
    // Predicated region
    $region21: #{simple_cnn_header_forward.6} parent=5 // pred_check
      %p131 = pneg %p130
    $region22: #{simple_cnn_header_forward.6} parent=5 // pred_check_branch
      %133 = sbr.rel (%p131) target = $region24
    $region23: #{simple_cnn_header_forward.6} parent=5 // pred_region
      // Predicated region
      $region25: #{simple_cnn_header_forward.6} parent=23 // pred_check
        %p134 = pneg %p35
      $region26: #{simple_cnn_header_forward.6} parent=23 // pred_check_branch
        %136 = sbr.rel (%p134) target = $region28
      $region27: #{simple_cnn_header_forward.6} parent=23 // pred_region
        %s137 = smul.u32 25, %s15
        %s138 = ssub.s32 49, %s137
        %p139 = scmp.lt.s32.totalorder %s138, 25
        %s140 = scalar_select %p139, %s138, 25
        %s141 = smul.u32 256, %s140
        %p142 = scmp.lt.s32.totalorder %s137, 48
        %s143 = scalar_select %p142, %s137, 48
        %s144 = smul.addr %s143, 4
        %s145 = scalar_lea.vmem %s2, %s144
        %s146 = smul.u32 25, %s15
        %s147 = ssub.s32 49, %s146
        %p148 = scmp.lt.s32.totalorder %s147, 25
        %s149 = scalar_select %p148, %s147, 25
        %s150 = smul.u32 256, %s149
      $region28: #{simple_cnn_header_forward.6} parent=23 // pred_fallthru
        _
    $region24: #{simple_cnn_header_forward.6} parent=5 // pred_fallthru
      _
    %p151 = scmp.le.s32.totalorder 1, %s15
    %p152 = scmp.lt.s32.totalorder %s15, 3
    %p153 = pnand %p151, %p152
    %p154 = pneg %p153
    // Predicated region
    $region29: #{simple_cnn_header_forward.6} parent=5 // pred_check
      _
    $region30: #{simple_cnn_header_forward.6} parent=5 // pred_check_branch
      %156 = sbr.rel (%p153) target = $region32
    $region31: #{simple_cnn_header_forward.6} parent=5 // pred_region
      #allocation7 [shape = 'u8[204800]{0}', space=vmem, size = 0x32000, dematerialized = true, scoped, tag = 'FusionAdapter Buffer %fusion.5 = bf16[4,400,128]{2,1,0:T(8,128)(2,1)} fusion(%param_2.13, %param_3.4), kind=kLoop, calls=%fused_computation.6.clone, metadata={op_name="jit(simple_cnn_header_forward)/jit(_pad)/pad" stack_frame_id=24}']
      %s157 = ssub.s32 %s15, 1
      %s158 = smul.u32 25, %s20
      %s159 = ssub.s32 49, %s158
      %p160 = scmp.lt.s32.totalorder %s159, 25
      %s161 = scalar_select %p160, %s159, 25
      %s162 = smul.u32 256, %s161
      %p163 = scmp.lt.s32.totalorder %s158, 48
      %s164 = scalar_select %p163, %s158, 48
      %s165 = smul.addr %s164, 4
      %s166 = scalar_lea.vmem %s2, %s165
      %p167 = pneg %p41
      %p168 = pneg %p38
      %p169 = pneg %p62
      %p170 = pneg %p59
      %p171 = pneg %p83
      %p172 = pneg %p80
      %p173 = pneg %p109
      %p174 = pneg %p106
      %s175 = smul.u32 25, %s20
      %p176 = scmp.lt.s32.totalorder %s175, 49
      %s177 = scalar_select %p176, %s175, 49
      %s178 = smul.addr %s177, 4
      %s179 = scalar_lea.vmem %s4, %s178
      %s180 = smul.u32 25, %s20
      %s181 = ssub.s32 49, %s180
      %p182 = scmp.lt.s32.totalorder %s181, 25
      %s183 = scalar_select %p182, %s181, 25
      %s184 = smul.u32 256, %s183
      %p185 = scmp.lt.s32.totalorder %s180, 48
      %s186 = scalar_select %p185, %s180, 48
      %s187 = smul.addr %s186, 4
      %s188 = scalar_lea.vmem %s2, %s187
      %s189 = smul.u32 25, %s20
      %s190 = ssub.s32 49, %s189
      %p191 = scmp.lt.s32.totalorder %s190, 25
      %s192 = scalar_select %p191, %s190, 25
      %s193 = smul.u32 256, %s192
      %s194 = smul.u32 25, %s20
      %p195 = scmp.lt.s32.totalorder %s194, 49
      %s196 = scalar_select %p195, %s194, 49
      %s197 = smul.addr %s196, 4
      %s198 = scalar_lea.vmem %s4, %s197
      %s199 = smul.u32 25, %s20
      %v200 = vld [vmem:[%s188] sm:$0xf]
      %v201 = vunpack.c.l.bf16 %v200
      %v202 = vunpack.c.h.bf16 %v200
      %v203 = vpack.c.bf16 0.0, %v201
      %205 = vst [vmem:[#allocation7] sm:$0xf] %v203
      %s206 = scalar_lea.vmem %s188, 4
      %v207 = vld [vmem:[%s206] sm:$0xf]
      %v208 = vunpack.c.l.bf16 %v207
      %v209 = vunpack.c.h.bf16 %v207
      %s210 = scalar_lea.vmem [#allocation7], 4
      %v211 = vpack.c.bf16 0.0, %v208
      %213 = vst [vmem:[%s210] sm:$0xf] %v211
      %s214 = scalar_lea.vmem %s188, 8
      %v215 = vld [vmem:[%s214] sm:$0xf]
      %v216 = vunpack.c.l.bf16 %v215
      %v217 = vunpack.c.h.bf16 %v215
      %s218 = scalar_lea.vmem [#allocation7], 8
      %v219 = vpack.c.bf16 0.0, %v216
      %221 = vst [vmem:[%s218] sm:$0xf] %v219
      %s222 = scalar_lea.vmem %s188, 12
      %v223 = vld [vmem:[%s222] sm:$0xf]
      %v224 = vunpack.c.l.bf16 %v223
      %v225 = vunpack.c.h.bf16 %v223
      %s226 = scalar_lea.vmem [#allocation7], 12
      %v227 = vpack.c.bf16 0.0, %v224
      %229 = vst [vmem:[%s226] sm:$0xf] %v227
      %s230 = scalar_lea.vmem %s188, 16
      %v231 = vld [vmem:[%s230] sm:$0xf]
      %v232 = vunpack.c.l.bf16 %v231
      %v233 = vunpack.c.h.bf16 %v231
      %s234 = scalar_lea.vmem [#allocation7], 16
      %v235 = vpack.c.bf16 0.0, %v232
      %237 = vst [vmem:[%s234] sm:$0xf] %v235
      %s238 = scalar_lea.vmem %s188, 20
      %v239 = vld [vmem:[%s238] sm:$0xf]
      %v240 = vunpack.c.l.bf16 %v239
      %v241 = vunpack.c.h.bf16 %v239
      %s242 = scalar_lea.vmem [#allocation7], 20
      %v243 = vpack.c.bf16 0.0, %v240
      %245 = vst [vmem:[%s242] sm:$0xf] %v243
      %s246 = scalar_lea.vmem %s188, 24
      %v247 = vld [vmem:[%s246] sm:$0xf]
      %v248 = vunpack.c.l.bf16 %v247
      %v249 = vunpack.c.h.bf16 %v247
      %s250 = scalar_lea.vmem [#allocation7], 24
      %v251 = vpack.c.bf16 0.0, %v248
      %253 = vst [vmem:[%s250] sm:$0xf] %v251
      %s254 = scalar_lea.vmem %s188, 28
      %v255 = vld [vmem:[%s254] sm:$0xf]
      %v256 = vunpack.c.l.bf16 %v255
      %v257 = vunpack.c.h.bf16 %v255
      %s258 = scalar_lea.vmem [#allocation7], 28
      %v259 = vpack.c.bf16 0.0, %v256
      %261 = vst [vmem:[%s258] sm:$0xf] %v259
      %s262 = scalar_lea.vmem %s188, 32
      %v263 = vld [vmem:[%s262] sm:$0xf]
      %v264 = vunpack.c.l.bf16 %v263
      %v265 = vunpack.c.h.bf16 %v263
      %s266 = scalar_lea.vmem [#allocation7], 32
      %v267 = vpack.c.bf16 0.0, %v264
      %269 = vst [vmem:[%s266] sm:$0xf] %v267
      %s270 = scalar_lea.vmem %s188, 36
      %v271 = vld [vmem:[%s270] sm:$0xf]
      %v272 = vunpack.c.l.bf16 %v271
      %v273 = vunpack.c.h.bf16 %v271
      %s274 = scalar_lea.vmem [#allocation7], 36
      %v275 = vpack.c.bf16 0.0, %v272
      %277 = vst [vmem:[%s274] sm:$0xf] %v275
      %s278 = scalar_lea.vmem %s188, 40
      %v279 = vld [vmem:[%s278] sm:$0xf]
      %v280 = vunpack.c.l.bf16 %v279
      %v281 = vunpack.c.h.bf16 %v279
      %s282 = scalar_lea.vmem [#allocation7], 40
      %v283 = vpack.c.bf16 0.0, %v280
      %285 = vst [vmem:[%s282] sm:$0xf] %v283
      %s286 = scalar_lea.vmem %s188, 44
      %v287 = vld [vmem:[%s286] sm:$0xf]
      %v288 = vunpack.c.l.bf16 %v287
      %v289 = vunpack.c.h.bf16 %v287
      %s290 = scalar_lea.vmem [#allocation7], 44
      %v291 = vpack.c.bf16 0.0, %v288
      %293 = vst [vmem:[%s290] sm:$0xf] %v291
      %s294 = scalar_lea.vmem %s188, 48
      %v295 = vld [vmem:[%s294] sm:$0xf]
      %v296 = vunpack.c.l.bf16 %v295
      %v297 = vunpack.c.h.bf16 %v295
      %s298 = scalar_lea.vmem [#allocation7], 48
      %v299 = vpack.c.bf16 0.0, %v296
      %301 = vst [vmem:[%s298] sm:$0xf] %v299
      %s302 = scalar_lea.vmem %s188, 52
      %v303 = vld [vmem:[%s302] sm:$0xf]
      %v304 = vunpack.c.l.bf16 %v303
      %v305 = vunpack.c.h.bf16 %v303
      %s306 = scalar_lea.vmem [#allocation7], 52
      %v307 = vpack.c.bf16 0.0, %v304
      %309 = vst [vmem:[%s306] sm:$0xf] %v307
      %s310 = scalar_lea.vmem %s188, 56
      %v311 = vld [vmem:[%s310] sm:$0xf]
      %v312 = vunpack.c.l.bf16 %v311
      %v313 = vunpack.c.h.bf16 %v311
      %s314 = scalar_lea.vmem [#allocation7], 56
      %v315 = vpack.c.bf16 0.0, %v312
      %317 = vst [vmem:[%s314] sm:$0xf] %v315
      %s318 = scalar_lea.vmem %s188, 60
      %v319 = vld [vmem:[%s318] sm:$0xf]
      %v320 = vunpack.c.l.bf16 %v319
      %v321 = vunpack.c.h.bf16 %v319
      %s322 = scalar_lea.vmem [#allocation7], 60
      %v323 = vpack.c.bf16 0.0, %v320
      %325 = vst [vmem:[%s322] sm:$0xf] %v323
      %s326 = scalar_lea.vmem %s188, 64
      %v327 = vld [vmem:[%s326] sm:$0xf]
      %v328 = vunpack.c.l.bf16 %v327
      %v329 = vunpack.c.h.bf16 %v327
      %s330 = scalar_lea.vmem [#allocation7], 64
      %v331 = vpack.c.bf16 0.0, %v328
      %333 = vst [vmem:[%s330] sm:$0xf] %v331
      %s334 = scalar_lea.vmem %s188, 68
      %v335 = vld [vmem:[%s334] sm:$0xf]
      %v336 = vunpack.c.l.bf16 %v335
      %v337 = vunpack.c.h.bf16 %v335
      %s338 = scalar_lea.vmem [#allocation7], 68
      %v339 = vpack.c.bf16 0.0, %v336
      %341 = vst [vmem:[%s338] sm:$0xf] %v339
      %s342 = scalar_lea.vmem %s188, 72
      %v343 = vld [vmem:[%s342] sm:$0xf]
      %v344 = vunpack.c.l.bf16 %v343
      %v345 = vunpack.c.h.bf16 %v343
      %s346 = scalar_lea.vmem [#allocation7], 72
      %v347 = vpack.c.bf16 0.0, %v344
      %349 = vst [vmem:[%s346] sm:$0xf] %v347
      %s350 = scalar_lea.vmem %s188, 76
      %v351 = vld [vmem:[%s350] sm:$0xf]
      %v352 = vunpack.c.l.bf16 %v351
      %v353 = vunpack.c.h.bf16 %v351
      %s354 = scalar_lea.vmem [#allocation7], 76
      %v355 = vpack.c.bf16 0.0, %v352
      %357 = vst [vmem:[%s354] sm:$0xf] %v355
      %s358 = scalar_lea.vmem %s188, 80
      %v359 = vld [vmem:[%s358] sm:$0xf]
      %v360 = vunpack.c.l.bf16 %v359
      %v361 = vunpack.c.h.bf16 %v359
      %s362 = scalar_lea.vmem [#allocation7], 80
      %v363 = vpack.c.bf16 0.0, %v360
      %365 = vst [vmem:[%s362] sm:$0xf] %v363
      %s366 = scalar_lea.vmem %s188, 84
      %v367 = vld [vmem:[%s366] sm:$0xf]
      %v368 = vunpack.c.l.bf16 %v367
      %v369 = vunpack.c.h.bf16 %v367
      %s370 = scalar_lea.vmem [#allocation7], 84
      %v371 = vpack.c.bf16 0.0, %v368
      %373 = vst [vmem:[%s370] sm:$0xf] %v371
      %s374 = scalar_lea.vmem %s188, 88
      %v375 = vld [vmem:[%s374] sm:$0xf]
      %v376 = vunpack.c.l.bf16 %v375
      %v377 = vunpack.c.h.bf16 %v375
      %s378 = scalar_lea.vmem [#allocation7], 88
      %v379 = vpack.c.bf16 0.0, %v376
      %381 = vst [vmem:[%s378] sm:$0xf] %v379
      %s382 = scalar_lea.vmem %s188, 92
      %v383 = vld [vmem:[%s382] sm:$0xf]
      %v384 = vunpack.c.l.bf16 %v383
      %v385 = vunpack.c.h.bf16 %v383
      %s386 = scalar_lea.vmem [#allocation7], 92
      %v387 = vpack.c.bf16 0.0, %v384
      %389 = vst [vmem:[%s386] sm:$0xf] %v387
      %s390 = scalar_lea.vmem %s188, 96
      %s391 = sadd.s32 %s189, 24
      %s392 = ssub.s32 48, %s391
      %p393 = scmp.lt.s32.totalorder %s392, 0
      %s394 = scalar_select %p393, 0, 255
      %s395 = sshrl.u32 %s394, 1
      %s396 = sor.u32 %s394, %s395
      %s397 = sand.u32 %s396, 85
      %s398 = sshrl.u32 %s397, 1
      %s399 = sor.u32 %s397, %s398
      %s400 = sand.u32 51, %s399
      %s401 = sshrl.u32 %s400, 2
      %s402 = sor.u32 %s400, %s401
      %s403 = sand.u32 15, %s402
      %v404 = vld [vmem:[%s390] sm:%s403]
      %v405 = vunpack.c.l.bf16 %v404
      %v406 = vunpack.c.h.bf16 %v404
      %s407 = sadd.s32 %s189, 24
      %s408 = ssub.s32 48, %s407
      %v409 = vstv %s408
      %vm410 = vcmp.lt.s32.totalorder %v409, 0
      %v411 = vsel %vm410, %v10, %v405
      %s412 = scalar_lea.vmem [#allocation7], 96
      %v413 = vpack.c.bf16 0.0, %v411
      %415 = vst [vmem:[%s412] sm:$0xf] %v413
      %s416 = scalar_lea.vmem %s188, 196
      %v417 = vld [vmem:[%s416] sm:$0xf]
      %v418 = vunpack.c.l.bf16 %v417
      %v419 = vunpack.c.h.bf16 %v417
      %s420 = scalar_lea.vmem [#allocation7], 100
      %v421 = vpack.c.bf16 0.0, %v418
      %423 = vst [vmem:[%s420] sm:$0xf] %v421
      %s424 = scalar_lea.vmem %s188, 200
      %v425 = vld [vmem:[%s424] sm:$0xf]
      %v426 = vunpack.c.l.bf16 %v425
      %v427 = vunpack.c.h.bf16 %v425
      %s428 = scalar_lea.vmem [#allocation7], 104
      %v429 = vpack.c.bf16 0.0, %v426
      %431 = vst [vmem:[%s428] sm:$0xf] %v429
      %s432 = scalar_lea.vmem %s188, 204
      %v433 = vld [vmem:[%s432] sm:$0xf]
      %v434 = vunpack.c.l.bf16 %v433
      %v435 = vunpack.c.h.bf16 %v433
      %s436 = scalar_lea.vmem [#allocation7], 108
      %v437 = vpack.c.bf16 0.0, %v434
      %439 = vst [vmem:[%s436] sm:$0xf] %v437
      %s440 = scalar_lea.vmem %s188, 208
      %v441 = vld [vmem:[%s440] sm:$0xf]
      %v442 = vunpack.c.l.bf16 %v441
      %v443 = vunpack.c.h.bf16 %v441
      %s444 = scalar_lea.vmem [#allocation7], 112
      %v445 = vpack.c.bf16 0.0, %v442
      %447 = vst [vmem:[%s444] sm:$0xf] %v445
      %s448 = scalar_lea.vmem %s188, 212
      %v449 = vld [vmem:[%s448] sm:$0xf]
      %v450 = vunpack.c.l.bf16 %v449
      %v451 = vunpack.c.h.bf16 %v449
      %s452 = scalar_lea.vmem [#allocation7], 116
      %v453 = vpack.c.bf16 0.0, %v450
      %455 = vst [vmem:[%s452] sm:$0xf] %v453
      %s456 = scalar_lea.vmem %s188, 216
      %v457 = vld [vmem:[%s456] sm:$0xf]
      %v458 = vunpack.c.l.bf16 %v457
      %v459 = vunpack.c.h.bf16 %v457
      %s460 = scalar_lea.vmem [#allocation7], 120
      %v461 = vpack.c.bf16 0.0, %v458
      %463 = vst [vmem:[%s460] sm:$0xf] %v461
      %s464 = scalar_lea.vmem %s188, 220
      %v465 = vld [vmem:[%s464] sm:$0xf]
      %v466 = vunpack.c.l.bf16 %v465
      %v467 = vunpack.c.h.bf16 %v465
      %s468 = scalar_lea.vmem [#allocation7], 124
      %v469 = vpack.c.bf16 0.0, %v466
      %471 = vst [vmem:[%s468] sm:$0xf] %v469
      %s472 = scalar_lea.vmem %s188, 224
      %v473 = vld [vmem:[%s472] sm:$0xf]
      %v474 = vunpack.c.l.bf16 %v473
      %v475 = vunpack.c.h.bf16 %v473
      %s476 = scalar_lea.vmem [#allocation7], 128
      %v477 = vpack.c.bf16 0.0, %v474
      %479 = vst [vmem:[%s476] sm:$0xf] %v477
      %s480 = scalar_lea.vmem %s188, 228
      %v481 = vld [vmem:[%s480] sm:$0xf]
      %v482 = vunpack.c.l.bf16 %v481
      %v483 = vunpack.c.h.bf16 %v481
      %s484 = scalar_lea.vmem [#allocation7], 132
      %v485 = vpack.c.bf16 0.0, %v482
      %487 = vst [vmem:[%s484] sm:$0xf] %v485
      %s488 = scalar_lea.vmem %s188, 232
      %v489 = vld [vmem:[%s488] sm:$0xf]
      %v490 = vunpack.c.l.bf16 %v489
      %v491 = vunpack.c.h.bf16 %v489
      %s492 = scalar_lea.vmem [#allocation7], 136
      %v493 = vpack.c.bf16 0.0, %v490
      %495 = vst [vmem:[%s492] sm:$0xf] %v493
      %s496 = scalar_lea.vmem %s188, 236
      %v497 = vld [vmem:[%s496] sm:$0xf]
      %v498 = vunpack.c.l.bf16 %v497
      %v499 = vunpack.c.h.bf16 %v497
      %s500 = scalar_lea.vmem [#allocation7], 140
      %v501 = vpack.c.bf16 0.0, %v498
      %503 = vst [vmem:[%s500] sm:$0xf] %v501
      %s504 = scalar_lea.vmem %s188, 240
      %v505 = vld [vmem:[%s504] sm:$0xf]
      %v506 = vunpack.c.l.bf16 %v505
      %v507 = vunpack.c.h.bf16 %v505
      %s508 = scalar_lea.vmem [#allocation7], 144
      %v509 = vpack.c.bf16 0.0, %v506
      %511 = vst [vmem:[%s508] sm:$0xf] %v509
      %s512 = scalar_lea.vmem %s188, 244
      %v513 = vld [vmem:[%s512] sm:$0xf]
      %v514 = vunpack.c.l.bf16 %v513
      %v515 = vunpack.c.h.bf16 %v513
      %s516 = scalar_lea.vmem [#allocation7], 148
      %v517 = vpack.c.bf16 0.0, %v514
      %519 = vst [vmem:[%s516] sm:$0xf] %v517
      %s520 = scalar_lea.vmem %s188, 248
      %v521 = vld [vmem:[%s520] sm:$0xf]
      %v522 = vunpack.c.l.bf16 %v521
      %v523 = vunpack.c.h.bf16 %v521
      %s524 = scalar_lea.vmem [#allocation7], 152
      %v525 = vpack.c.bf16 0.0, %v522
      %527 = vst [vmem:[%s524] sm:$0xf] %v525
      %s528 = scalar_lea.vmem %s188, 252
      %v529 = vld [vmem:[%s528] sm:$0xf]
      %v530 = vunpack.c.l.bf16 %v529
      %v531 = vunpack.c.h.bf16 %v529
      %s532 = scalar_lea.vmem [#allocation7], 156
      %v533 = vpack.c.bf16 0.0, %v530
      %535 = vst [vmem:[%s532] sm:$0xf] %v533
      %s536 = scalar_lea.vmem %s188, 256
      %v537 = vld [vmem:[%s536] sm:$0xf]
      %v538 = vunpack.c.l.bf16 %v537
      %v539 = vunpack.c.h.bf16 %v537
      %s540 = scalar_lea.vmem [#allocation7], 160
      %v541 = vpack.c.bf16 0.0, %v538
      %543 = vst [vmem:[%s540] sm:$0xf] %v541
      %s544 = scalar_lea.vmem %s188, 260
      %v545 = vld [vmem:[%s544] sm:$0xf]
      %v546 = vunpack.c.l.bf16 %v545
      %v547 = vunpack.c.h.bf16 %v545
      %s548 = scalar_lea.vmem [#allocation7], 164
      %v549 = vpack.c.bf16 0.0, %v546
      %551 = vst [vmem:[%s548] sm:$0xf] %v549
      %s552 = scalar_lea.vmem %s188, 264
      %v553 = vld [vmem:[%s552] sm:$0xf]
      %v554 = vunpack.c.l.bf16 %v553
      %v555 = vunpack.c.h.bf16 %v553
      %s556 = scalar_lea.vmem [#allocation7], 168
      %v557 = vpack.c.bf16 0.0, %v554
      %559 = vst [vmem:[%s556] sm:$0xf] %v557
      %s560 = scalar_lea.vmem %s188, 268
      %v561 = vld [vmem:[%s560] sm:$0xf]
      %v562 = vunpack.c.l.bf16 %v561
      %v563 = vunpack.c.h.bf16 %v561
      %s564 = scalar_lea.vmem [#allocation7], 172
      %v565 = vpack.c.bf16 0.0, %v562
      %567 = vst [vmem:[%s564] sm:$0xf] %v565
      %s568 = scalar_lea.vmem %s188, 272
      %v569 = vld [vmem:[%s568] sm:$0xf]
      %v570 = vunpack.c.l.bf16 %v569
      %v571 = vunpack.c.h.bf16 %v569
      %s572 = scalar_lea.vmem [#allocation7], 176
      %v573 = vpack.c.bf16 0.0, %v570
      %575 = vst [vmem:[%s572] sm:$0xf] %v573
      %s576 = scalar_lea.vmem %s188, 276
      %v577 = vld [vmem:[%s576] sm:$0xf]
      %v578 = vunpack.c.l.bf16 %v577
      %v579 = vunpack.c.h.bf16 %v577
      %s580 = scalar_lea.vmem [#allocation7], 180
      %v581 = vpack.c.bf16 0.0, %v578
      %583 = vst [vmem:[%s580] sm:$0xf] %v581
      %s584 = scalar_lea.vmem %s188, 280
      %v585 = vld [vmem:[%s584] sm:$0xf]
      %v586 = vunpack.c.l.bf16 %v585
      %v587 = vunpack.c.h.bf16 %v585
      %s588 = scalar_lea.vmem [#allocation7], 184
      %v589 = vpack.c.bf16 0.0, %v586
      %591 = vst [vmem:[%s588] sm:$0xf] %v589
      %s592 = scalar_lea.vmem %s188, 284
      %v593 = vld [vmem:[%s592] sm:$0xf]
      %v594 = vunpack.c.l.bf16 %v593
      %v595 = vunpack.c.h.bf16 %v593
      %s596 = scalar_lea.vmem [#allocation7], 188
      %v597 = vpack.c.bf16 0.0, %v594
      %599 = vst [vmem:[%s596] sm:$0xf] %v597
      %s600 = scalar_lea.vmem %s188, 288
      %v601 = vld [vmem:[%s600] sm:$0xf]
      %v602 = vunpack.c.l.bf16 %v601
      %v603 = vunpack.c.h.bf16 %v601
      %s604 = scalar_lea.vmem [#allocation7], 192
      %v605 = vpack.c.bf16 0.0, %v602
      %607 = vst [vmem:[%s604] sm:$0xf] %v605
      %s608 = scalar_lea.vmem %s188, 292
      %s609 = sadd.s32 %s189, 24
      %s610 = ssub.s32 48, %s609
      %p611 = scmp.lt.s32.totalorder %s610, 0
      %s612 = scalar_select %p611, 0, 255
      %s613 = sshrl.u32 %s612, 1
      %s614 = sor.u32 %s612, %s613
      %s615 = sand.u32 %s614, 85
      %s616 = sshrl.u32 %s615, 1
      %s617 = sor.u32 %s615, %s616
      %s618 = sand.u32 51, %s617
      %s619 = sshrl.u32 %s618, 2
      %s620 = sor.u32 %s618, %s619
      %s621 = sand.u32 15, %s620
      %v622 = vld [vmem:[%s608] sm:%s621]
      %v623 = vunpack.c.l.bf16 %v622
      %v624 = vunpack.c.h.bf16 %v622
      %s625 = sadd.s32 %s189, 24
      %s626 = ssub.s32 48, %s625
      %v627 = vstv %s626
      %vm628 = vcmp.lt.s32.totalorder %v627, 0
      %v629 = vsel %vm628, %v10, %v623
      %s630 = scalar_lea.vmem [#allocation7], 196
      %v631 = vpack.c.bf16 0.0, %v629
      %633 = vst [vmem:[%s630] sm:$0xf] %v631
      %s634 = scalar_lea.vmem %s188, 392
      %v635 = vld [vmem:[%s634] sm:$0xf]
      %v636 = vunpack.c.l.bf16 %v635
      %v637 = vunpack.c.h.bf16 %v635
      %s638 = scalar_lea.vmem [#allocation7], 200
      %v639 = vpack.c.bf16 0.0, %v636
      %641 = vst [vmem:[%s638] sm:$0xf] %v639
      %s642 = scalar_lea.vmem %s188, 396
      %v643 = vld [vmem:[%s642] sm:$0xf]
      %v644 = vunpack.c.l.bf16 %v643
      %v645 = vunpack.c.h.bf16 %v643
      %s646 = scalar_lea.vmem [#allocation7], 204
      %v647 = vpack.c.bf16 0.0, %v644
      %649 = vst [vmem:[%s646] sm:$0xf] %v647
      %s650 = scalar_lea.vmem %s188, 400
      %v651 = vld [vmem:[%s650] sm:$0xf]
      %v652 = vunpack.c.l.bf16 %v651
      %v653 = vunpack.c.h.bf16 %v651
      %s654 = scalar_lea.vmem [#allocation7], 208
      %v655 = vpack.c.bf16 0.0, %v652
      %657 = vst [vmem:[%s654] sm:$0xf] %v655
      %s658 = scalar_lea.vmem %s188, 404
      %v659 = vld [vmem:[%s658] sm:$0xf]
      %v660 = vunpack.c.l.bf16 %v659
      %v661 = vunpack.c.h.bf16 %v659
      %s662 = scalar_lea.vmem [#allocation7], 212
      %v663 = vpack.c.bf16 0.0, %v660
      %665 = vst [vmem:[%s662] sm:$0xf] %v663
      %s666 = scalar_lea.vmem %s188, 408
      %v667 = vld [vmem:[%s666] sm:$0xf]
      %v668 = vunpack.c.l.bf16 %v667
      %v669 = vunpack.c.h.bf16 %v667
      %s670 = scalar_lea.vmem [#allocation7], 216
      %v671 = vpack.c.bf16 0.0, %v668
      %673 = vst [vmem:[%s670] sm:$0xf] %v671
      %s674 = scalar_lea.vmem %s188, 412
      %v675 = vld [vmem:[%s674] sm:$0xf]
      %v676 = vunpack.c.l.bf16 %v675
      %v677 = vunpack.c.h.bf16 %v675
      %s678 = scalar_lea.vmem [#allocation7], 220
      %v679 = vpack.c.bf16 0.0, %v676
      %681 = vst [vmem:[%s678] sm:$0xf] %v679
      %s682 = scalar_lea.vmem %s188, 416
      %v683 = vld [vmem:[%s682] sm:$0xf]
      %v684 = vunpack.c.l.bf16 %v683
      %v685 = vunpack.c.h.bf16 %v683
      %s686 = scalar_lea.vmem [#allocation7], 224
      %v687 = vpack.c.bf16 0.0, %v684
      %689 = vst [vmem:[%s686] sm:$0xf] %v687
      %s690 = scalar_lea.vmem %s188, 420
      %v691 = vld [vmem:[%s690] sm:$0xf]
      %v692 = vunpack.c.l.bf16 %v691
      %v693 = vunpack.c.h.bf16 %v691
      %s694 = scalar_lea.vmem [#allocation7], 228
      %v695 = vpack.c.bf16 0.0, %v692
      %697 = vst [vmem:[%s694] sm:$0xf] %v695
      %s698 = scalar_lea.vmem %s188, 424
      %v699 = vld [vmem:[%s698] sm:$0xf]
      %v700 = vunpack.c.l.bf16 %v699
      %v701 = vunpack.c.h.bf16 %v699
      %s702 = scalar_lea.vmem [#allocation7], 232
      %v703 = vpack.c.bf16 0.0, %v700
      %705 = vst [vmem:[%s702] sm:$0xf] %v703
      %s706 = scalar_lea.vmem %s188, 428
      %v707 = vld [vmem:[%s706] sm:$0xf]
      %v708 = vunpack.c.l.bf16 %v707
      %v709 = vunpack.c.h.bf16 %v707
      %s710 = scalar_lea.vmem [#allocation7], 236
      %v711 = vpack.c.bf16 0.0, %v708
      %713 = vst [vmem:[%s710] sm:$0xf] %v711
      %s714 = scalar_lea.vmem %s188, 432
      %v715 = vld [vmem:[%s714] sm:$0xf]
      %v716 = vunpack.c.l.bf16 %v715
      %v717 = vunpack.c.h.bf16 %v715
      %s718 = scalar_lea.vmem [#allocation7], 240
      %v719 = vpack.c.bf16 0.0, %v716
      %721 = vst [vmem:[%s718] sm:$0xf] %v719
      %s722 = scalar_lea.vmem %s188, 436
      %v723 = vld [vmem:[%s722] sm:$0xf]
      %v724 = vunpack.c.l.bf16 %v723
      %v725 = vunpack.c.h.bf16 %v723
      %s726 = scalar_lea.vmem [#allocation7], 244
      %v727 = vpack.c.bf16 0.0, %v724
      %729 = vst [vmem:[%s726] sm:$0xf] %v727
      %s730 = scalar_lea.vmem %s188, 440
      %v731 = vld [vmem:[%s730] sm:$0xf]
      %v732 = vunpack.c.l.bf16 %v731
      %v733 = vunpack.c.h.bf16 %v731
      %s734 = scalar_lea.vmem [#allocation7], 248
      %v735 = vpack.c.bf16 0.0, %v732
      %737 = vst [vmem:[%s734] sm:$0xf] %v735
      %s738 = scalar_lea.vmem %s188, 444
      %v739 = vld [vmem:[%s738] sm:$0xf]
      %v740 = vunpack.c.l.bf16 %v739
      %v741 = vunpack.c.h.bf16 %v739
      %s742 = scalar_lea.vmem [#allocation7], 252
      %v743 = vpack.c.bf16 0.0, %v740
      %745 = vst [vmem:[%s742] sm:$0xf] %v743
      %s746 = scalar_lea.vmem %s188, 448
      %v747 = vld [vmem:[%s746] sm:$0xf]
      %v748 = vunpack.c.l.bf16 %v747
      %v749 = vunpack.c.h.bf16 %v747
      %s750 = scalar_lea.vmem [#allocation7], 256
      %v751 = vpack.c.bf16 0.0, %v748
      %753 = vst [vmem:[%s750] sm:$0xf] %v751
      %s754 = scalar_lea.vmem %s188, 452
      %v755 = vld [vmem:[%s754] sm:$0xf]
      %v756 = vunpack.c.l.bf16 %v755
      %v757 = vunpack.c.h.bf16 %v755
      %s758 = scalar_lea.vmem [#allocation7], 260
      %v759 = vpack.c.bf16 0.0, %v756
      %761 = vst [vmem:[%s758] sm:$0xf] %v759
      %s762 = scalar_lea.vmem %s188, 456
      %v763 = vld [vmem:[%s762] sm:$0xf]
      %v764 = vunpack.c.l.bf16 %v763
      %v765 = vunpack.c.h.bf16 %v763
      %s766 = scalar_lea.vmem [#allocation7], 264
      %v767 = vpack.c.bf16 0.0, %v764
      %769 = vst [vmem:[%s766] sm:$0xf] %v767
      %s770 = scalar_lea.vmem %s188, 460
      %v771 = vld [vmem:[%s770] sm:$0xf]
      %v772 = vunpack.c.l.bf16 %v771
      %v773 = vunpack.c.h.bf16 %v771
      %s774 = scalar_lea.vmem [#allocation7], 268
      %v775 = vpack.c.bf16 0.0, %v772
      %777 = vst [vmem:[%s774] sm:$0xf] %v775
      %s778 = scalar_lea.vmem %s188, 464
      %v779 = vld [vmem:[%s778] sm:$0xf]
      %v780 = vunpack.c.l.bf16 %v779
      %v781 = vunpack.c.h.bf16 %v779
      %s782 = scalar_lea.vmem [#allocation7], 272
      %v783 = vpack.c.bf16 0.0, %v780
      %785 = vst [vmem:[%s782] sm:$0xf] %v783
      %s786 = scalar_lea.vmem %s188, 468
      %v787 = vld [vmem:[%s786] sm:$0xf]
      %v788 = vunpack.c.l.bf16 %v787
      %v789 = vunpack.c.h.bf16 %v787
      %s790 = scalar_lea.vmem [#allocation7], 276
      %v791 = vpack.c.bf16 0.0, %v788
      %793 = vst [vmem:[%s790] sm:$0xf] %v791
      %s794 = scalar_lea.vmem %s188, 472
      %v795 = vld [vmem:[%s794] sm:$0xf]
      %v796 = vunpack.c.l.bf16 %v795
      %v797 = vunpack.c.h.bf16 %v795
      %s798 = scalar_lea.vmem [#allocation7], 280
      %v799 = vpack.c.bf16 0.0, %v796
      %801 = vst [vmem:[%s798] sm:$0xf] %v799
      %s802 = scalar_lea.vmem %s188, 476
      %v803 = vld [vmem:[%s802] sm:$0xf]
      %v804 = vunpack.c.l.bf16 %v803
      %v805 = vunpack.c.h.bf16 %v803
      %s806 = scalar_lea.vmem [#allocation7], 284
      %v807 = vpack.c.bf16 0.0, %v804
      %809 = vst [vmem:[%s806] sm:$0xf] %v807
      %s810 = scalar_lea.vmem %s188, 480
      %v811 = vld [vmem:[%s810] sm:$0xf]
      %v812 = vunpack.c.l.bf16 %v811
      %v813 = vunpack.c.h.bf16 %v811
      %s814 = scalar_lea.vmem [#allocation7], 288
      %v815 = vpack.c.bf16 0.0, %v812
      %817 = vst [vmem:[%s814] sm:$0xf] %v815
      %s818 = scalar_lea.vmem %s188, 484
      %v819 = vld [vmem:[%s818] sm:$0xf]
      %v820 = vunpack.c.l.bf16 %v819
      %v821 = vunpack.c.h.bf16 %v819
      %s822 = scalar_lea.vmem [#allocation7], 292
      %v823 = vpack.c.bf16 0.0, %v820
      %825 = vst [vmem:[%s822] sm:$0xf] %v823
      %s826 = scalar_lea.vmem %s188, 488
      %s827 = sadd.s32 %s189, 24
      %s828 = ssub.s32 48, %s827
      %p829 = scmp.lt.s32.totalorder %s828, 0
      %s830 = scalar_select %p829, 0, 255
      %s831 = sshrl.u32 %s830, 1
      %s832 = sor.u32 %s830, %s831
      %s833 = sand.u32 %s832, 85
      %s834 = sshrl.u32 %s833, 1
      %s835 = sor.u32 %s833, %s834
      %s836 = sand.u32 51, %s835
      %s837 = sshrl.u32 %s836, 2
      %s838 = sor.u32 %s836, %s837
      %s839 = sand.u32 15, %s838
      %v840 = vld [vmem:[%s826] sm:%s839]
      %v841 = vunpack.c.l.bf16 %v840
      %v842 = vunpack.c.h.bf16 %v840
      %s843 = sadd.s32 %s189, 24
      %s844 = ssub.s32 48, %s843
      %v845 = vstv %s844
      %vm846 = vcmp.lt.s32.totalorder %v845, 0
      %v847 = vsel %vm846, %v10, %v841
      %s848 = scalar_lea.vmem [#allocation7], 296
      %v849 = vpack.c.bf16 0.0, %v847
      %851 = vst [vmem:[%s848] sm:$0xf] %v849
      %s852 = scalar_lea.vmem %s188, 588
      %v853 = vld [vmem:[%s852] sm:$0xf]
      %v854 = vunpack.c.l.bf16 %v853
      %v855 = vunpack.c.h.bf16 %v853
      %s856 = scalar_lea.vmem [#allocation7], 300
      %v857 = vpack.c.bf16 0.0, %v854
      %859 = vst [vmem:[%s856] sm:$0xf] %v857
      %s860 = scalar_lea.vmem %s188, 592
      %v861 = vld [vmem:[%s860] sm:$0xf]
      %v862 = vunpack.c.l.bf16 %v861
      %v863 = vunpack.c.h.bf16 %v861
      %s864 = scalar_lea.vmem [#allocation7], 304
      %v865 = vpack.c.bf16 0.0, %v862
      %867 = vst [vmem:[%s864] sm:$0xf] %v865
      %s868 = scalar_lea.vmem %s188, 596
      %v869 = vld [vmem:[%s868] sm:$0xf]
      %v870 = vunpack.c.l.bf16 %v869
      %v871 = vunpack.c.h.bf16 %v869
      %s872 = scalar_lea.vmem [#allocation7], 308
      %v873 = vpack.c.bf16 0.0, %v870
      %875 = vst [vmem:[%s872] sm:$0xf] %v873
      %s876 = scalar_lea.vmem %s188, 600
      %v877 = vld [vmem:[%s876] sm:$0xf]
      %v878 = vunpack.c.l.bf16 %v877
      %v879 = vunpack.c.h.bf16 %v877
      %s880 = scalar_lea.vmem [#allocation7], 312
      %v881 = vpack.c.bf16 0.0, %v878
      %883 = vst [vmem:[%s880] sm:$0xf] %v881
      %s884 = scalar_lea.vmem %s188, 604
      %v885 = vld [vmem:[%s884] sm:$0xf]
      %v886 = vunpack.c.l.bf16 %v885
      %v887 = vunpack.c.h.bf16 %v885
      %s888 = scalar_lea.vmem [#allocation7], 316
      %v889 = vpack.c.bf16 0.0, %v886
      %891 = vst [vmem:[%s888] sm:$0xf] %v889
      %s892 = scalar_lea.vmem %s188, 608
      %v893 = vld [vmem:[%s892] sm:$0xf]
      %v894 = vunpack.c.l.bf16 %v893
      %v895 = vunpack.c.h.bf16 %v893
      %s896 = scalar_lea.vmem [#allocation7], 320
      %v897 = vpack.c.bf16 0.0, %v894
      %899 = vst [vmem:[%s896] sm:$0xf] %v897
      %s900 = scalar_lea.vmem %s188, 612
      %v901 = vld [vmem:[%s900] sm:$0xf]
      %v902 = vunpack.c.l.bf16 %v901
      %v903 = vunpack.c.h.bf16 %v901
      %s904 = scalar_lea.vmem [#allocation7], 324
      %v905 = vpack.c.bf16 0.0, %v902
      %907 = vst [vmem:[%s904] sm:$0xf] %v905
      %s908 = scalar_lea.vmem %s188, 616
      %v909 = vld [vmem:[%s908] sm:$0xf]
      %v910 = vunpack.c.l.bf16 %v909
      %v911 = vunpack.c.h.bf16 %v909
      %s912 = scalar_lea.vmem [#allocation7], 328
      %v913 = vpack.c.bf16 0.0, %v910
      %915 = vst [vmem:[%s912] sm:$0xf] %v913
      %s916 = scalar_lea.vmem %s188, 620
      %v917 = vld [vmem:[%s916] sm:$0xf]
      %v918 = vunpack.c.l.bf16 %v917
      %v919 = vunpack.c.h.bf16 %v917
      %s920 = scalar_lea.vmem [#allocation7], 332
      %v921 = vpack.c.bf16 0.0, %v918
      %923 = vst [vmem:[%s920] sm:$0xf] %v921
      %s924 = scalar_lea.vmem %s188, 624
      %v925 = vld [vmem:[%s924] sm:$0xf]
      %v926 = vunpack.c.l.bf16 %v925
      %v927 = vunpack.c.h.bf16 %v925
      %s928 = scalar_lea.vmem [#allocation7], 336
      %v929 = vpack.c.bf16 0.0, %v926
      %931 = vst [vmem:[%s928] sm:$0xf] %v929
      %s932 = scalar_lea.vmem %s188, 628
      %v933 = vld [vmem:[%s932] sm:$0xf]
      %v934 = vunpack.c.l.bf16 %v933
      %v935 = vunpack.c.h.bf16 %v933
      %s936 = scalar_lea.vmem [#allocation7], 340
      %v937 = vpack.c.bf16 0.0, %v934
      %939 = vst [vmem:[%s936] sm:$0xf] %v937
      %s940 = scalar_lea.vmem %s188, 632
      %v941 = vld [vmem:[%s940] sm:$0xf]
      %v942 = vunpack.c.l.bf16 %v941
      %v943 = vunpack.c.h.bf16 %v941
      %s944 = scalar_lea.vmem [#allocation7], 344
      %v945 = vpack.c.bf16 0.0, %v942
      %947 = vst [vmem:[%s944] sm:$0xf] %v945
      %s948 = scalar_lea.vmem %s188, 636
      %v949 = vld [vmem:[%s948] sm:$0xf]
      %v950 = vunpack.c.l.bf16 %v949
      %v951 = vunpack.c.h.bf16 %v949
      %s952 = scalar_lea.vmem [#allocation7], 348
      %v953 = vpack.c.bf16 0.0, %v950
      %955 = vst [vmem:[%s952] sm:$0xf] %v953
      %s956 = scalar_lea.vmem %s188, 640
      %v957 = vld [vmem:[%s956] sm:$0xf]
      %v958 = vunpack.c.l.bf16 %v957
      %v959 = vunpack.c.h.bf16 %v957
      %s960 = scalar_lea.vmem [#allocation7], 352
      %v961 = vpack.c.bf16 0.0, %v958
      %963 = vst [vmem:[%s960] sm:$0xf] %v961
      %s964 = scalar_lea.vmem %s188, 644
      %v965 = vld [vmem:[%s964] sm:$0xf]
      %v966 = vunpack.c.l.bf16 %v965
      %v967 = vunpack.c.h.bf16 %v965
      %s968 = scalar_lea.vmem [#allocation7], 356
      %v969 = vpack.c.bf16 0.0, %v966
      %971 = vst [vmem:[%s968] sm:$0xf] %v969
      %s972 = scalar_lea.vmem %s188, 648
      %v973 = vld [vmem:[%s972] sm:$0xf]
      %v974 = vunpack.c.l.bf16 %v973
      %v975 = vunpack.c.h.bf16 %v973
      %s976 = scalar_lea.vmem [#allocation7], 360
      %v977 = vpack.c.bf16 0.0, %v974
      %979 = vst [vmem:[%s976] sm:$0xf] %v977
      %s980 = scalar_lea.vmem %s188, 652
      %v981 = vld [vmem:[%s980] sm:$0xf]
      %v982 = vunpack.c.l.bf16 %v981
      %v983 = vunpack.c.h.bf16 %v981
      %s984 = scalar_lea.vmem [#allocation7], 364
      %v985 = vpack.c.bf16 0.0, %v982
      %987 = vst [vmem:[%s984] sm:$0xf] %v985
      %s988 = scalar_lea.vmem %s188, 656
      %v989 = vld [vmem:[%s988] sm:$0xf]
      %v990 = vunpack.c.l.bf16 %v989
      %v991 = vunpack.c.h.bf16 %v989
      %s992 = scalar_lea.vmem [#allocation7], 368
      %v993 = vpack.c.bf16 0.0, %v990
      %995 = vst [vmem:[%s992] sm:$0xf] %v993
      %s996 = scalar_lea.vmem %s188, 660
      %v997 = vld [vmem:[%s996] sm:$0xf]
      %v998 = vunpack.c.l.bf16 %v997
      %v999 = vunpack.c.h.bf16 %v997
      %s1000 = scalar_lea.vmem [#allocation7], 372
      %v1001 = vpack.c.bf16 0.0, %v998
      %1003 = vst [vmem:[%s1000] sm:$0xf] %v1001
      %s1004 = scalar_lea.vmem %s188, 664
      %v1005 = vld [vmem:[%s1004] sm:$0xf]
      %v1006 = vunpack.c.l.bf16 %v1005
      %v1007 = vunpack.c.h.bf16 %v1005
      %s1008 = scalar_lea.vmem [#allocation7], 376
      %v1009 = vpack.c.bf16 0.0, %v1006
      %1011 = vst [vmem:[%s1008] sm:$0xf] %v1009
      %s1012 = scalar_lea.vmem %s188, 668
      %v1013 = vld [vmem:[%s1012] sm:$0xf]
      %v1014 = vunpack.c.l.bf16 %v1013
      %v1015 = vunpack.c.h.bf16 %v1013
      %s1016 = scalar_lea.vmem [#allocation7], 380
      %v1017 = vpack.c.bf16 0.0, %v1014
      %1019 = vst [vmem:[%s1016] sm:$0xf] %v1017
      %s1020 = scalar_lea.vmem %s188, 672
      %v1021 = vld [vmem:[%s1020] sm:$0xf]
      %v1022 = vunpack.c.l.bf16 %v1021
      %v1023 = vunpack.c.h.bf16 %v1021
      %s1024 = scalar_lea.vmem [#allocation7], 384
      %v1025 = vpack.c.bf16 0.0, %v1022
      %1027 = vst [vmem:[%s1024] sm:$0xf] %v1025
      %s1028 = scalar_lea.vmem %s188, 676
      %v1029 = vld [vmem:[%s1028] sm:$0xf]
      %v1030 = vunpack.c.l.bf16 %v1029
      %v1031 = vunpack.c.h.bf16 %v1029
      %s1032 = scalar_lea.vmem [#allocation7], 388
      %v1033 = vpack.c.bf16 0.0, %v1030
      %1035 = vst [vmem:[%s1032] sm:$0xf] %v1033
      %s1036 = scalar_lea.vmem %s188, 680
      %v1037 = vld [vmem:[%s1036] sm:$0xf]
      %v1038 = vunpack.c.l.bf16 %v1037
      %v1039 = vunpack.c.h.bf16 %v1037
      %s1040 = scalar_lea.vmem [#allocation7], 392
      %v1041 = vpack.c.bf16 0.0, %v1038
      %1043 = vst [vmem:[%s1040] sm:$0xf] %v1041
      %s1044 = scalar_lea.vmem %s188, 684
      %s1045 = sadd.s32 %s189, 24
      %s1046 = ssub.s32 48, %s1045
      %p1047 = scmp.lt.s32.totalorder %s1046, 0
      %s1048 = scalar_select %p1047, 0, 255
      %s1049 = sshrl.u32 %s1048, 1
      %s1050 = sor.u32 %s1048, %s1049
      %s1051 = sand.u32 %s1050, 85
      %s1052 = sshrl.u32 %s1051, 1
      %s1053 = sor.u32 %s1051, %s1052
      %s1054 = sand.u32 51, %s1053
      %s1055 = sshrl.u32 %s1054, 2
      %s1056 = sor.u32 %s1054, %s1055
      %s1057 = sand.u32 15, %s1056
      %v1058 = vld [vmem:[%s1044] sm:%s1057]
      %v1059 = vunpack.c.l.bf16 %v1058
      %v1060 = vunpack.c.h.bf16 %v1058
      %s1061 = sadd.s32 %s189, 24
      %s1062 = ssub.s32 48, %s1061
      %v1063 = vstv %s1062
      %vm1064 = vcmp.lt.s32.totalorder %v1063, 0
      %v1065 = vsel %vm1064, %v10, %v1059
      %s1066 = scalar_lea.vmem [#allocation7], 396
      %v1067 = vpack.c.bf16 0.0, %v1065
      %1069 = vst [vmem:[%s1066] sm:$0xf] %v1067
      %v1071 = vld [vmem:[%s0] sm:$0xf]
      %v1072 = vld [vmem:[%s0 + $0x4] sm:$0xf]
      %v1073 = vld [vmem:[%s0 + $0x8] sm:$0xf]
      %v1074 = vld [vmem:[%s0 + $0xc] sm:$0xf]
      %v1075 = vld [vmem:[%s0 + $0x10] sm:$0xf]
      %v1076 = vld [vmem:[%s0 + $0x14] sm:$0xf]
      %v1077 = vld [vmem:[%s0 + $0x18] sm:$0xf]
      %v1078 = vld [vmem:[%s0 + $0x1c] sm:$0xf]
      %v1079 = vld [vmem:[%s0 + $0x20] sm:$0xf]
      %v1080 = vld [vmem:[%s0 + $0x24] sm:$0xf]
      %v1081 = vld [vmem:[%s0 + $0x28] sm:$0xf]
      %v1082 = vld [vmem:[%s0 + $0x2c] sm:$0xf]
      %v1083 = vld [vmem:[%s0 + $0x30] sm:$0xf]
      %v1084 = vld [vmem:[%s0 + $0x34] sm:$0xf]
      %v1085 = vld [vmem:[%s0 + $0x38] sm:$0xf]
      %v1086 = vld [vmem:[%s0 + $0x3c] sm:$0xf]
      %v1087 = vld [vmem:[#allocation7] sm:$0xf]
      %v1088 = vld [vmem:[#allocation7 + $0x4] sm:$0xf]
      %v1089 = vld [vmem:[#allocation7 + $0x8] sm:$0xf]
      %v1090 = vld [vmem:[#allocation7 + $0xc] sm:$0xf]
      %v1091 = vld [vmem:[#allocation7 + $0x10] sm:$0xf]
      %v1092 = vld [vmem:[#allocation7 + $0x14] sm:$0xf]
      %v1093 = vld [vmem:[#allocation7 + $0x18] sm:$0xf]
      %v1094 = vld [vmem:[#allocation7 + $0x1c] sm:$0xf]
      %v1095 = vld [vmem:[#allocation7 + $0x20] sm:$0xf]
      %v1096 = vld [vmem:[#allocation7 + $0x24] sm:$0xf]
      %v1097 = vld [vmem:[#allocation7 + $0x28] sm:$0xf]
      %v1098 = vld [vmem:[#allocation7 + $0x2c] sm:$0xf]
      %v1099 = vld [vmem:[#allocation7 + $0x30] sm:$0xf]
      %v1100 = vld [vmem:[#allocation7 + $0x34] sm:$0xf]
      %v1101 = vld [vmem:[#allocation7 + $0x38] sm:$0xf]
      %v1102 = vld [vmem:[#allocation7 + $0x3c] sm:$0xf]
      %v1103 = vld [vmem:[#allocation7 + $0x40] sm:$0xf]
      %v1104 = vld [vmem:[#allocation7 + $0x44] sm:$0xf]
      %v1105 = vld [vmem:[#allocation7 + $0x48] sm:$0xf]
      %v1106 = vld [vmem:[#allocation7 + $0x4c] sm:$0xf]
      %v1107 = vld [vmem:[#allocation7 + $0x50] sm:$0xf]
      %v1108 = vld [vmem:[#allocation7 + $0x54] sm:$0xf]
      %v1109 = vld [vmem:[#allocation7 + $0x58] sm:$0xf]
      %v1110 = vld [vmem:[#allocation7 + $0x5c] sm:$0xf]
      %v1111 = vld [vmem:[#allocation7 + $0x60] sm:$0xf]
      %v1137 = vunpack.c.l.b16 %v1087
      %v1138 = vunpack.c.l.b16 %v1088
      %v1139 = vunpack.c.l.b16 %v1089
      %v1140 = vunpack.c.l.b16 %v1090
      %v1141 = vunpack.c.l.b16 %v1091
      %v1142 = vunpack.c.l.b16 %v1092
      %v1143 = vunpack.c.l.b16 %v1093
      %v1144 = vunpack.c.l.b16 %v1094
      %v1145 = vunpack.c.l.b16 %v1095
      %v1146 = vunpack.c.l.b16 %v1096
      %v1147 = vunpack.c.l.b16 %v1097
      %v1148 = vunpack.c.l.b16 %v1098
      %v1149 = vunpack.c.l.b16 %v1099
      %v1150 = vunpack.c.l.b16 %v1100
      %v1151 = vunpack.c.l.b16 %v1101
      %v1152 = vunpack.c.l.b16 %v1102
      %v1153 = vunpack.c.l.b16 %v1103
      %v1154 = vunpack.c.l.b16 %v1104
      %v1155 = vunpack.c.l.b16 %v1105
      %v1156 = vunpack.c.l.b16 %v1106
      %v1157 = vunpack.c.l.b16 %v1107
      %v1158 = vunpack.c.l.b16 %v1108
      %v1159 = vunpack.c.l.b16 %v1109
      %v1160 = vunpack.c.l.b16 %v1110
      %v1161 = vunpack.c.l.b16 %v1111
      %v1162 = vpack.c.b16 %v1138, %v1137
      %v1163 = vpack.c.b16 %v1140, %v1139
      %v1164 = vpack.c.b16 %v1142, %v1141
      %v1165 = vpack.c.b16 %v1144, %v1143
      %v1166 = vpack.c.b16 %v1146, %v1145
      %v1167 = vpack.c.b16 %v1148, %v1147
      %v1168 = vpack.c.b16 %v1150, %v1149
      %v1169 = vpack.c.b16 %v1152, %v1151
      %v1170 = vpack.c.b16 %v1154, %v1153
      %v1171 = vpack.c.b16 %v1156, %v1155
      %v1172 = vpack.c.b16 %v1158, %v1157
      %v1173 = vpack.c.b16 %v1160, %v1159
      %v1174 = vpack.c.b16 %v1161, %v1161
      %v1204 = vunpack.c.l.b16 %v1071
      %v1205 = vunpack.c.l.b16 %v1072
      %v1206 = vunpack.c.l.b16 %v1073
      %v1207 = vunpack.c.l.b16 %v1074
      %v1208 = vunpack.c.l.b16 %v1075
      %v1209 = vunpack.c.l.b16 %v1076
      %v1210 = vunpack.c.l.b16 %v1077
      %v1211 = vunpack.c.l.b16 %v1078
      %v1212 = vunpack.c.l.b16 %v1079
      %v1213 = vunpack.c.l.b16 %v1080
      %v1214 = vunpack.c.l.b16 %v1081
      %v1215 = vunpack.c.l.b16 %v1082
      %v1216 = vunpack.c.l.b16 %v1083
      %v1217 = vunpack.c.l.b16 %v1084
      %v1218 = vunpack.c.l.b16 %v1085
      %v1219 = vunpack.c.l.b16 %v1086
      %v1220 = vpack.c.b16 %v1205, %v1204
      %v1221 = vpack.c.b16 %v1207, %v1206
      %v1222 = vpack.c.b16 %v1209, %v1208
      %v1223 = vpack.c.b16 %v1211, %v1210
      %v1224 = vpack.c.b16 %v1213, %v1212
      %v1225 = vpack.c.b16 %v1215, %v1214
      %v1226 = vpack.c.b16 %v1217, %v1216
      %v1227 = vpack.c.b16 %v1219, %v1218
      %1236 = vmatprep.subr.bf16.mxu0 0
      %1237 = vmatpush1.bf16.msra.mxu0 %v1220
      %1238 = vmatprep.subr.bf16.mxu0 0
      %1239 = vmatpush1.bf16.msra.mxu0 %v1221
      %1240 = vmatprep.subr.bf16.mxu0 0
      %1241 = vmatpush1.bf16.msra.mxu0 %v1222
      %1242 = vmatprep.subr.bf16.mxu0 0
      %1243 = vmatpush1.bf16.msra.mxu0 %v1223
      %1244 = vmatprep.subr.bf16.mxu0 0
      %1245 = vmatpush1.bf16.msra.mxu0 %v1224
      %1246 = vmatprep.subr.bf16.mxu0 0
      %1247 = vmatpush1.bf16.msra.mxu0 %v1225
      %1248 = vmatprep.subr.bf16.mxu0 0
      %1249 = vmatpush1.bf16.msra.mxu0 %v1226
      %1250 = vmatprep.subr.bf16.mxu0 0
      %1251 = vmatpush1.bf16.msra.mxu0 %v1227
      %1252 = vmatprep.subr.bf16.mxu0 0
      %1253 = vmatpush1.bf16.msra.mxu0 0
      %1254 = vmatprep.subr.bf16.mxu0 0
      %1255 = vmatpush1.bf16.msra.mxu0 0
      %1256 = vmatprep.subr.bf16.mxu0 0
      %1257 = vmatpush1.bf16.msra.mxu0 0
      %1258 = vmatprep.subr.bf16.mxu0 0
      %1259 = vmatpush1.bf16.msra.mxu0 0
      %1260 = vmatprep.subr.bf16.mxu0 0
      %1261 = vmatpush1.bf16.msra.mxu0 0
      %1262 = vmatprep.subr.bf16.mxu0 0
      %1263 = vmatpush1.bf16.msra.mxu0 0
      %1264 = vmatprep.subr.bf16.mxu0 0
      %1265 = vmatpush1.bf16.msra.mxu0 0
      %1266 = vmatprep.subr.bf16.mxu0 0
      %1267 = vmatpush1.bf16.msra.mxu0 0
      %1268 = vmatprep.mubr.bf16.mxu0 0
      %1269 = vmatmul.mubr.bf16.gmra.mrb[0].mxu0 %v1162
      %v1270 = vpop.f32.mrb[0].mxu0
      %v1271 = vadd.f32 0.0, %v1270
      %v1272 = vpop.f32.mrb[0].mxu0
      %v1273 = vpop.f32.mrb[0].mxu0
      %v1274 = vadd.f32 0.0, %v1273
      %v1275 = vpop.f32.mrb[0].mxu0
      %1276 = vmatprep.mubr.bf16.mxu0 0
      %1277 = vmatmul.mubr.bf16.gmra.mrb[0].mxu0 %v1163
      %v1278 = vpop.f32.mrb[0].mxu0
      %v1279 = vadd.f32 0.0, %v1278
      %v1280 = vpop.f32.mrb[0].mxu0
      %v1281 = vpop.f32.mrb[0].mxu0
      %v1282 = vadd.f32 0.0, %v1281
      %v1283 = vpop.f32.mrb[0].mxu0
      %1284 = vmatprep.mubr.bf16.mxu0 0
      %1285 = vmatmul.mubr.bf16.gmra.mrb[0].mxu0 %v1164
      %v1286 = vpop.f32.mrb[0].mxu0
      %v1287 = vadd.f32 0.0, %v1286
      %v1288 = vpop.f32.mrb[0].mxu0
      %v1289 = vpop.f32.mrb[0].mxu0
      %v1290 = vadd.f32 0.0, %v1289
      %v1291 = vpop.f32.mrb[0].mxu0
      %1292 = vmatprep.mubr.bf16.mxu0 0
      %1293 = vmatmul.mubr.bf16.gmra.mrb[0].mxu0 %v1165
      %v1294 = vpop.f32.mrb[0].mxu0
      %v1295 = vadd.f32 0.0, %v1294
      %v1296 = vpop.f32.mrb[0].mxu0
      %v1297 = vpop.f32.mrb[0].mxu0
      %v1298 = vadd.f32 0.0, %v1297
      %v1299 = vpop.f32.mrb[0].mxu0
      %1300 = vmatprep.mubr.bf16.mxu0 0
      %1301 = vmatmul.mubr.bf16.gmra.mrb[0].mxu0 %v1166
      %v1302 = vpop.f32.mrb[0].mxu0
      %v1303 = vadd.f32 0.0, %v1302
      %v1304 = vpop.f32.mrb[0].mxu0
      %v1305 = vpop.f32.mrb[0].mxu0
      %v1306 = vadd.f32 0.0, %v1305
      %v1307 = vpop.f32.mrb[0].mxu0
      %1308 = vmatprep.mubr.bf16.mxu0 0
      %1309 = vmatmul.mubr.bf16.gmra.mrb[0].mxu0 %v1167
      %v1310 = vpop.f32.mrb[0].mxu0
      %v1311 = vadd.f32 0.0, %v1310
      %v1312 = vpop.f32.mrb[0].mxu0
      %v1313 = vpop.f32.mrb[0].mxu0
      %v1314 = vadd.f32 0.0, %v1313
      %v1315 = vpop.f32.mrb[0].mxu0
      %1316 = vmatprep.mubr.bf16.mxu0 0
      %1317 = vmatmul.mubr.bf16.gmra.mrb[0].mxu0 %v1168
      %v1318 = vpop.f32.mrb[0].mxu0
      %v1319 = vadd.f32 0.0, %v1318
      %v1320 = vpop.f32.mrb[0].mxu0
      %v1321 = vpop.f32.mrb[0].mxu0
      %v1322 = vadd.f32 0.0, %v1321
      %v1323 = vpop.f32.mrb[0].mxu0
      %1324 = vmatprep.mubr.bf16.mxu0 0
      %1325 = vmatmul.mubr.bf16.gmra.mrb[0].mxu0 %v1169
      %v1326 = vpop.f32.mrb[0].mxu0
      %v1327 = vadd.f32 0.0, %v1326
      %v1328 = vpop.f32.mrb[0].mxu0
      %v1329 = vpop.f32.mrb[0].mxu0
      %v1330 = vadd.f32 0.0, %v1329
      %v1331 = vpop.f32.mrb[0].mxu0
      %1332 = vmatprep.mubr.bf16.mxu0 0
      %1333 = vmatmul.mubr.bf16.gmra.mrb[0].mxu0 %v1170
      %v1334 = vpop.f32.mrb[0].mxu0
      %v1335 = vadd.f32 0.0, %v1334
      %v1336 = vpop.f32.mrb[0].mxu0
      %v1337 = vpop.f32.mrb[0].mxu0
      %v1338 = vadd.f32 0.0, %v1337
      %v1339 = vpop.f32.mrb[0].mxu0
      %1340 = vmatprep.mubr.bf16.mxu0 0
      %1341 = vmatmul.mubr.bf16.gmra.mrb[0].mxu0 %v1171
      %v1342 = vpop.f32.mrb[0].mxu0
      %v1343 = vadd.f32 0.0, %v1342
      %v1344 = vpop.f32.mrb[0].mxu0
      %v1345 = vpop.f32.mrb[0].mxu0
      %v1346 = vadd.f32 0.0, %v1345
      %v1347 = vpop.f32.mrb[0].mxu0
      %1348 = vmatprep.mubr.bf16.mxu0 0
      %1349 = vmatmul.mubr.bf16.gmra.mrb[0].mxu0 %v1172
      %v1350 = vpop.f32.mrb[0].mxu0
      %v1351 = vadd.f32 0.0, %v1350
      %v1352 = vpop.f32.mrb[0].mxu0
      %v1353 = vpop.f32.mrb[0].mxu0
      %v1354 = vadd.f32 0.0, %v1353
      %v1355 = vpop.f32.mrb[0].mxu0
      %1356 = vmatprep.mubr.bf16.mxu0 0
      %1357 = vmatmul.mubr.bf16.gmra.mrb[0].mxu0 %v1173
      %v1358 = vpop.f32.mrb[0].mxu0
      %v1359 = vadd.f32 0.0, %v1358
      %v1360 = vpop.f32.mrb[0].mxu0
      %v1361 = vpop.f32.mrb[0].mxu0
      %v1362 = vadd.f32 0.0, %v1361
      %v1363 = vpop.f32.mrb[0].mxu0
      %1364 = vmatprep.mubr.bf16.mxu0 0
      %1365 = vmatmul.mubr.bf16.gmra.mrb[0].mxu0 %v1174
      %v1366 = vpop.f32.mrb[0].mxu0
      %v1367 = vadd.f32 0.0, %v1366
      %v1368 = vpop.f32.mrb[0].mxu0
      %v1369 = vpop.f32.mrb[0].mxu0
      %v1370 = vpop.f32.mrb[0].mxu0
      %1371 = vdwg.mxu0
      %s1372 = scalar_lea.vmem [#allocation7], 100
      %v1373 = vld [vmem:[%s1372] sm:$0xf]
      %v1374 = vld [vmem:[%s1372 + $0x4] sm:$0xf]
      %v1375 = vld [vmem:[%s1372 + $0x8] sm:$0xf]
      %v1376 = vld [vmem:[%s1372 + $0xc] sm:$0xf]
      %v1377 = vld [vmem:[%s1372 + $0x10] sm:$0xf]
      %v1378 = vld [vmem:[%s1372 + $0x14] sm:$0xf]
      %v1379 = vld [vmem:[%s1372 + $0x18] sm:$0xf]
      %v1380 = vld [vmem:[%s1372 + $0x1c] sm:$0xf]
      %v1381 = vld [vmem:[%s1372 + $0x20] sm:$0xf]
      %v1382 = vld [vmem:[%s1372 + $0x24] sm:$0xf]
      %v1383 = vld [vmem:[%s1372 + $0x28] sm:$0xf]
      %v1384 = vld [vmem:[%s1372 + $0x2c] sm:$0xf]
      %v1385 = vld [vmem:[%s1372 + $0x30] sm:$0xf]
      %v1386 = vld [vmem:[%s1372 + $0x34] sm:$0xf]
      %v1387 = vld [vmem:[%s1372 + $0x38] sm:$0xf]
      %v1388 = vld [vmem:[%s1372 + $0x3c] sm:$0xf]
      %v1389 = vld [vmem:[%s1372 + $0x40] sm:$0xf]
      %v1390 = vld [vmem:[%s1372 + $0x44] sm:$0xf]
      %v1391 = vld [vmem:[%s1372 + $0x48] sm:$0xf]
      %v1392 = vld [vmem:[%s1372 + $0x4c] sm:$0xf]
      %v1393 = vld [vmem:[%s1372 + $0x50] sm:$0xf]
      %v1394 = vld [vmem:[%s1372 + $0x54] sm:$0xf]
      %v1395 = vld [vmem:[%s1372 + $0x58] sm:$0xf]
      %v1396 = vld [vmem:[%s1372 + $0x5c] sm:$0xf]
      %v1397 = vld [vmem:[%s1372 + $0x60] sm:$0xf]
      %v1423 = vunpack.c.l.b16 %v1373
      %v1424 = vunpack.c.l.b16 %v1374
      %v1425 = vunpack.c.l.b16 %v1375
      %v1426 = vunpack.c.l.b16 %v1376
      %v1427 = vunpack.c.l.b16 %v1377
      %v1428 = vunpack.c.l.b16 %v1378
      %v1429 = vunpack.c.l.b16 %v1379
      %v1430 = vunpack.c.l.b16 %v1380
      %v1431 = vunpack.c.l.b16 %v1381
      %v1432 = vunpack.c.l.b16 %v1382
      %v1433 = vunpack.c.l.b16 %v1383
      %v1434 = vunpack.c.l.b16 %v1384
      %v1435 = vunpack.c.l.b16 %v1385
      %v1436 = vunpack.c.l.b16 %v1386
      %v1437 = vunpack.c.l.b16 %v1387
      %v1438 = vunpack.c.l.b16 %v1388
      %v1439 = vunpack.c.l.b16 %v1389
      %v1440 = vunpack.c.l.b16 %v1390
      %v1441 = vunpack.c.l.b16 %v1391
      %v1442 = vunpack.c.l.b16 %v1392
      %v1443 = vunpack.c.l.b16 %v1393
      %v1444 = vunpack.c.l.b16 %v1394
      %v1445 = vunpack.c.l.b16 %v1395
      %v1446 = vunpack.c.l.b16 %v1396
      %v1447 = vunpack.c.l.b16 %v1397
      %v1448 = vpack.c.b16 %v1424, %v1423
      %v1449 = vpack.c.b16 %v1426, %v1425
      %v1450 = vpack.c.b16 %v1428, %v1427
      %v1451 = vpack.c.b16 %v1430, %v1429
      %v1452 = vpack.c.b16 %v1432, %v1431
      %v1453 = vpack.c.b16 %v1434, %v1433
      %v1454 = vpack.c.b16 %v1436, %v1435
      %v1455 = vpack.c.b16 %v1438, %v1437
      %v1456 = vpack.c.b16 %v1440, %v1439
      %v1457 = vpack.c.b16 %v1442, %v1441
      %v1458 = vpack.c.b16 %v1444, %v1443
      %v1459 = vpack.c.b16 %v1446, %v1445
      %v1460 = vpack.c.b16 %v1447, %v1447
      %1474 = vmatprep.subr.bf16.mxu0 0
      %1475 = vmatpush1.bf16.msra.mxu0 %v1220
      %1476 = vmatprep.subr.bf16.mxu0 0
      %1477 = vmatpush1.bf16.msra.mxu0 %v1221
      %1478 = vmatprep.subr.bf16.mxu0 0
      %1479 = vmatpush1.bf16.msra.mxu0 %v1222
      %1480 = vmatprep.subr.bf16.mxu0 0
      %1481 = vmatpush1.bf16.msra.mxu0 %v1223
      %1482 = vmatprep.subr.bf16.mxu0 0
      %1483 = vmatpush1.bf16.msra.mxu0 %v1224
      %1484 = vmatprep.subr.bf16.mxu0 0
      %1485 = vmatpush1.bf16.msra.mxu0 %v1225
      %1486 = vmatprep.subr.bf16.mxu0 0
      %1487 = vmatpush1.bf16.msra.mxu0 %v1226
      %1488 = vmatprep.subr.bf16.mxu0 0
      %1489 = vmatpush1.bf16.msra.mxu0 %v1227
      %1490 = vmatprep.subr.bf16.mxu0 0
      %1491 = vmatpush1.bf16.msra.mxu0 0
      %1492 = vmatprep.subr.bf16.mxu0 0
      %1493 = vmatpush1.bf16.msra.mxu0 0
      %1494 = vmatprep.subr.bf16.mxu0 0
      %1495 = vmatpush1.bf16.msra.mxu0 0
      %1496 = vmatprep.subr.bf16.mxu0 0
      %1497 = vmatpush1.bf16.msra.mxu0 0
      %1498 = vmatprep.subr.bf16.mxu0 0
      %1499 = vmatpush1.bf16.msra.mxu0 0
      %1500 = vmatprep.subr.bf16.mxu0 0
      %1501 = vmatpush1.bf16.msra.mxu0 0
      %1502 = vmatprep.subr.bf16.mxu0 0
      %1503 = vmatpush1.bf16.msra.mxu0 0
      %1504 = vmatprep.subr.bf16.mxu0 0
      %1505 = vmatpush1.bf16.msra.mxu0 0
      %1506 = vmatprep.mubr.bf16.mxu0 0
      %1507 = vmatmul.mubr.bf16.gmra.mrb[0].mxu0 %v1448
      %v1508 = vpop.f32.mrb[0].mxu0
      %v1509 = vadd.f32 0.0, %v1508
      %v1510 = vpop.f32.mrb[0].mxu0
      %v1511 = vpop.f32.mrb[0].mxu0
      %v1512 = vadd.f32 0.0, %v1511
      %v1513 = vpop.f32.mrb[0].mxu0
      %1514 = vmatprep.mubr.bf16.mxu0 0
      %1515 = vmatmul.mubr.bf16.gmra.mrb[0].mxu0 %v1449
      %v1516 = vpop.f32.mrb[0].mxu0
      %v1517 = vadd.f32 0.0, %v1516
      %v1518 = vpop.f32.mrb[0].mxu0
      %v1519 = vpop.f32.mrb[0].mxu0
      %v1520 = vadd.f32 0.0, %v1519
      %v1521 = vpop.f32.mrb[0].mxu0
      %1522 = vmatprep.mubr.bf16.mxu0 0
      %1523 = vmatmul.mubr.bf16.gmra.mrb[0].mxu0 %v1450
      %v1524 = vpop.f32.mrb[0].mxu0
      %v1525 = vadd.f32 0.0, %v1524
      %v1526 = vpop.f32.mrb[0].mxu0
      %v1527 = vpop.f32.mrb[0].mxu0
      %v1528 = vadd.f32 0.0, %v1527
      %v1529 = vpop.f32.mrb[0].mxu0
      %1530 = vmatprep.mubr.bf16.mxu0 0
      %1531 = vmatmul.mubr.bf16.gmra.mrb[0].mxu0 %v1451
      %v1532 = vpop.f32.mrb[0].mxu0
      %v1533 = vadd.f32 0.0, %v1532
      %v1534 = vpop.f32.mrb[0].mxu0
      %v1535 = vpop.f32.mrb[0].mxu0
      %v1536 = vadd.f32 0.0, %v1535
      %v1537 = vpop.f32.mrb[0].mxu0
      %1538 = vmatprep.mubr.bf16.mxu0 0
      %1539 = vmatmul.mubr.bf16.gmra.mrb[0].mxu0 %v1452
      %v1540 = vpop.f32.mrb[0].mxu0
      %v1541 = vadd.f32 0.0, %v1540
      %v1542 = vpop.f32.mrb[0].mxu0
      %v1543 = vpop.f32.mrb[0].mxu0
      %v1544 = vadd.f32 0.0, %v1543
      %v1545 = vpop.f32.mrb[0].mxu0
      %1546 = vmatprep.mubr.bf16.mxu0 0
      %1547 = vmatmul.mubr.bf16.gmra.mrb[0].mxu0 %v1453
      %v1548 = vpop.f32.mrb[0].mxu0
      %v1549 = vadd.f32 0.0, %v1548
      %v1550 = vpop.f32.mrb[0].mxu0
      %v1551 = vpop.f32.mrb[0].mxu0
      %v1552 = vadd.f32 0.0, %v1551
      %v1553 = vpop.f32.mrb[0].mxu0
      %1554 = vmatprep.mubr.bf16.mxu0 0
      %1555 = vmatmul.mubr.bf16.gmra.mrb[0].mxu0 %v1454
      %v1556 = vpop.f32.mrb[0].mxu0
      %v1557 = vadd.f32 0.0, %v1556
      %v1558 = vpop.f32.mrb[0].mxu0
      %v1559 = vpop.f32.mrb[0].mxu0
      %v1560 = vadd.f32 0.0, %v1559
      %v1561 = vpop.f32.mrb[0].mxu0
      %1562 = vmatprep.mubr.bf16.mxu0 0
      %1563 = vmatmul.mubr.bf16.gmra.mrb[0].mxu0 %v1455
      %v1564 = vpop.f32.mrb[0].mxu0
      %v1565 = vadd.f32 0.0, %v1564
      %v1566 = vpop.f32.mrb[0].mxu0
      %v1567 = vpop.f32.mrb[0].mxu0
      %v1568 = vadd.f32 0.0, %v1567
      %v1569 = vpop.f32.mrb[0].mxu0
      %1570 = vmatprep.mubr.bf16.mxu0 0
      %1571 = vmatmul.mubr.bf16.gmra.mrb[0].mxu0 %v1456
      %v1572 = vpop.f32.mrb[0].mxu0
      %v1573 = vadd.f32 0.0, %v1572
      %v1574 = vpop.f32.mrb[0].mxu0
      %v1575 = vpop.f32.mrb[0].mxu0
      %v1576 = vadd.f32 0.0, %v1575
      %v1577 = vpop.f32.mrb[0].mxu0
      %1578 = vmatprep.mubr.bf16.mxu0 0
      %1579 = vmatmul.mubr.bf16.gmra.mrb[0].mxu0 %v1457
      %v1580 = vpop.f32.mrb[0].mxu0
      %v1581 = vadd.f32 0.0, %v1580
      %v1582 = vpop.f32.mrb[0].mxu0
      %v1583 = vpop.f32.mrb[0].mxu0
      %v1584 = vadd.f32 0.0, %v1583
      %v1585 = vpop.f32.mrb[0].mxu0
      %1586 = vmatprep.mubr.bf16.mxu0 0
      %1587 = vmatmul.mubr.bf16.gmra.mrb[0].mxu0 %v1458
      %v1588 = vpop.f32.mrb[0].mxu0
      %v1589 = vadd.f32 0.0, %v1588
      %v1590 = vpop.f32.mrb[0].mxu0
      %v1591 = vpop.f32.mrb[0].mxu0
      %v1592 = vadd.f32 0.0, %v1591
      %v1593 = vpop.f32.mrb[0].mxu0
      %1594 = vmatprep.mubr.bf16.mxu0 0
      %1595 = vmatmul.mubr.bf16.gmra.mrb[0].mxu0 %v1459
      %v1596 = vpop.f32.mrb[0].mxu0
      %v1597 = vadd.f32 0.0, %v1596
      %v1598 = vpop.f32.mrb[0].mxu0
      %v1599 = vpop.f32.mrb[0].mxu0
      %v1600 = vadd.f32 0.0, %v1599
      %v1601 = vpop.f32.mrb[0].mxu0
      %1602 = vmatprep.mubr.bf16.mxu0 0
      %1603 = vmatmul.mubr.bf16.gmra.mrb[0].mxu0 %v1460
      %v1604 = vpop.f32.mrb[0].mxu0
      %v1605 = vadd.f32 0.0, %v1604
      %v1606 = vpop.f32.mrb[0].mxu0
      %v1607 = vpop.f32.mrb[0].mxu0
      %v1608 = vpop.f32.mrb[0].mxu0
      %1609 = vdwg.mxu0
      %s1610 = scalar_lea.vmem [#allocation7], 200
      %v1611 = vld [vmem:[%s1610] sm:$0xf]
      %v1612 = vld [vmem:[%s1610 + $0x4] sm:$0xf]
      %v1613 = vld [vmem:[%s1610 + $0x8] sm:$0xf]
      %v1614 = vld [vmem:[%s1610 + $0xc] sm:$0xf]
      %v1615 = vld [vmem:[%s1610 + $0x10] sm:$0xf]
      %v1616 = vld [vmem:[%s1610 + $0x14] sm:$0xf]
      %v1617 = vld [vmem:[%s1610 + $0x18] sm:$0xf]
      %v1618 = vld [vmem:[%s1610 + $0x1c] sm:$0xf]
      %v1619 = vld [vmem:[%s1610 + $0x20] sm:$0xf]
      %v1620 = vld [vmem:[%s1610 + $0x24] sm:$0xf]
      %v1621 = vld [vmem:[%s1610 + $0x28] sm:$0xf]
      %v1622 = vld [vmem:[%s1610 + $0x2c] sm:$0xf]
      %v1623 = vld [vmem:[%s1610 + $0x30] sm:$0xf]
      %v1624 = vld [vmem:[%s1610 + $0x34] sm:$0xf]
      %v1625 = vld [vmem:[%s1610 + $0x38] sm:$0xf]
      %v1626 = vld [vmem:[%s1610 + $0x3c] sm:$0xf]
      %v1627 = vld [vmem:[%s1610 + $0x40] sm:$0xf]
      %v1628 = vld [vmem:[%s1610 + $0x44] sm:$0xf]
      %v1629 = vld [vmem:[%s1610 + $0x48] sm:$0xf]
      %v1630 = vld [vmem:[%s1610 + $0x4c] sm:$0xf]
      %v1631 = vld [vmem:[%s1610 + $0x50] sm:$0xf]
      %v1632 = vld [vmem:[%s1610 + $0x54] sm:$0xf]
      %v1633 = vld [vmem:[%s1610 + $0x58] sm:$0xf]
      %v1634 = vld [vmem:[%s1610 + $0x5c] sm:$0xf]
      %v1635 = vld [vmem:[%s1610 + $0x60] sm:$0xf]
      %v1661 = vunpack.c.l.b16 %v1611
      %v1662 = vunpack.c.l.b16 %v1612
      %v1663 = vunpack.c.l.b16 %v1613
      %v1664 = vunpack.c.l.b16 %v1614
      %v1665 = vunpack.c.l.b16 %v1615
      %v1666 = vunpack.c.l.b16 %v1616
      %v1667 = vunpack.c.l.b16 %v1617
      %v1668 = vunpack.c.l.b16 %v1618
      %v1669 = vunpack.c.l.b16 %v1619
      %v1670 = vunpack.c.l.b16 %v1620
      %v1671 = vunpack.c.l.b16 %v1621
      %v1672 = vunpack.c.l.b16 %v1622
      %v1673 = vunpack.c.l.b16 %v1623
      %v1674 = vunpack.c.l.b16 %v1624
      %v1675 = vunpack.c.l.b16 %v1625
      %v1676 = vunpack.c.l.b16 %v1626
      %v1677 = vunpack.c.l.b16 %v1627
      %v1678 = vunpack.c.l.b16 %v1628
      %v1679 = vunpack.c.l.b16 %v1629
      %v1680 = vunpack.c.l.b16 %v1630
      %v1681 = vunpack.c.l.b16 %v1631
      %v1682 = vunpack.c.l.b16 %v1632
      %v1683 = vunpack.c.l.b16 %v1633
      %v1684 = vunpack.c.l.b16 %v1634
      %v1685 = vunpack.c.l.b16 %v1635
      %v1686 = vpack.c.b16 %v1662, %v1661
      %v1687 = vpack.c.b16 %v1664, %v1663
      %v1688 = vpack.c.b16 %v1666, %v1665
      %v1689 = vpack.c.b16 %v1668, %v1667
      %v1690 = vpack.c.b16 %v1670, %v1669
      %v1691 = vpack.c.b16 %v1672, %v1671
      %v1692 = vpack.c.b16 %v1674, %v1673
      %v1693 = vpack.c.b16 %v1676, %v1675
      %v1694 = vpack.c.b16 %v1678, %v1677
      %v1695 = vpack.c.b16 %v1680, %v1679
      %v1696 = vpack.c.b16 %v1682, %v1681
      %v1697 = vpack.c.b16 %v1684, %v1683
      %v1698 = vpack.c.b16 %v1685, %v1685
      %1712 = vmatprep.subr.bf16.mxu0 0
      %1713 = vmatpush1.bf16.msra.mxu0 %v1220
      %1714 = vmatprep.subr.bf16.mxu0 0
      %1715 = vmatpush1.bf16.msra.mxu0 %v1221
      %1716 = vmatprep.subr.bf16.mxu0 0
      %1717 = vmatpush1.bf16.msra.mxu0 %v1222
      %1718 = vmatprep.subr.bf16.mxu0 0
      %1719 = vmatpush1.bf16.msra.mxu0 %v1223
      %1720 = vmatprep.subr.bf16.mxu0 0
      %1721 = vmatpush1.bf16.msra.mxu0 %v1224
      %1722 = vmatprep.subr.bf16.mxu0 0
      %1723 = vmatpush1.bf16.msra.mxu0 %v1225
      %1724 = vmatprep.subr.bf16.mxu0 0
      %1725 = vmatpush1.bf16.msra.mxu0 %v1226
      %1726 = vmatprep.subr.bf16.mxu0 0
      %1727 = vmatpush1.bf16.msra.mxu0 %v1227
      %1728 = vmatprep.subr.bf16.mxu0 0
      %1729 = vmatpush1.bf16.msra.mxu0 0
      %1730 = vmatprep.subr.bf16.mxu0 0
      %1731 = vmatpush1.bf16.msra.mxu0 0
      %1732 = vmatprep.subr.bf16.mxu0 0
      %1733 = vmatpush1.bf16.msra.mxu0 0
      %1734 = vmatprep.subr.bf16.mxu0 0
      %1735 = vmatpush1.bf16.msra.mxu0 0
      %1736 = vmatprep.subr.bf16.mxu0 0
      %1737 = vmatpush1.bf16.msra.mxu0 0
      %1738 = vmatprep.subr.bf16.mxu0 0
      %1739 = vmatpush1.bf16.msra.mxu0 0
      %1740 = vmatprep.subr.bf16.mxu0 0
      %1741 = vmatpush1.bf16.msra.mxu0 0
      %1742 = vmatprep.subr.bf16.mxu0 0
      %1743 = vmatpush1.bf16.msra.mxu0 0
      %1744 = vmatprep.mubr.bf16.mxu0 0
      %1745 = vmatmul.mubr.bf16.gmra.mrb[0].mxu0 %v1686
      %v1746 = vpop.f32.mrb[0].mxu0
      %v1747 = vadd.f32 0.0, %v1746
      %v1748 = vpop.f32.mrb[0].mxu0
      %v1749 = vpop.f32.mrb[0].mxu0
      %v1750 = vadd.f32 0.0, %v1749
      %v1751 = vpop.f32.mrb[0].mxu0
      %1752 = vmatprep.mubr.bf16.mxu0 0
      %1753 = vmatmul.mubr.bf16.gmra.mrb[0].mxu0 %v1687
      %v1754 = vpop.f32.mrb[0].mxu0
      %v1755 = vadd.f32 0.0, %v1754
      %v1756 = vpop.f32.mrb[0].mxu0
      %v1757 = vpop.f32.mrb[0].mxu0
      %v1758 = vadd.f32 0.0, %v1757
      %v1759 = vpop.f32.mrb[0].mxu0
      %1760 = vmatprep.mubr.bf16.mxu0 0
      %1761 = vmatmul.mubr.bf16.gmra.mrb[0].mxu0 %v1688
      %v1762 = vpop.f32.mrb[0].mxu0
      %v1763 = vadd.f32 0.0, %v1762
      %v1764 = vpop.f32.mrb[0].mxu0
      %v1765 = vpop.f32.mrb[0].mxu0
      %v1766 = vadd.f32 0.0, %v1765
      %v1767 = vpop.f32.mrb[0].mxu0
      %1768 = vmatprep.mubr.bf16.mxu0 0
      %1769 = vmatmul.mubr.bf16.gmra.mrb[0].mxu0 %v1689
      %v1770 = vpop.f32.mrb[0].mxu0
      %v1771 = vadd.f32 0.0, %v1770
      %v1772 = vpop.f32.mrb[0].mxu0
      %v1773 = vpop.f32.mrb[0].mxu0
      %v1774 = vadd.f32 0.0, %v1773
      %v1775 = vpop.f32.mrb[0].mxu0
      %1776 = vmatprep.mubr.bf16.mxu0 0
      %1777 = vmatmul.mubr.bf16.gmra.mrb[0].mxu0 %v1690
      %v1778 = vpop.f32.mrb[0].mxu0
      %v1779 = vadd.f32 0.0, %v1778
      %v1780 = vpop.f32.mrb[0].mxu0
      %v1781 = vpop.f32.mrb[0].mxu0
      %v1782 = vadd.f32 0.0, %v1781
      %v1783 = vpop.f32.mrb[0].mxu0
      %1784 = vmatprep.mubr.bf16.mxu0 0
      %1785 = vmatmul.mubr.bf16.gmra.mrb[0].mxu0 %v1691
      %v1786 = vpop.f32.mrb[0].mxu0
      %v1787 = vadd.f32 0.0, %v1786
      %v1788 = vpop.f32.mrb[0].mxu0
      %v1789 = vpop.f32.mrb[0].mxu0
      %v1790 = vadd.f32 0.0, %v1789
      %v1791 = vpop.f32.mrb[0].mxu0
      %1792 = vmatprep.mubr.bf16.mxu0 0
      %1793 = vmatmul.mubr.bf16.gmra.mrb[0].mxu0 %v1692
      %v1794 = vpop.f32.mrb[0].mxu0
      %v1795 = vadd.f32 0.0, %v1794
      %v1796 = vpop.f32.mrb[0].mxu0
      %v1797 = vpop.f32.mrb[0].mxu0
      %v1798 = vadd.f32 0.0, %v1797
      %v1799 = vpop.f32.mrb[0].mxu0
      %1800 = vmatprep.mubr.bf16.mxu0 0
      %1801 = vmatmul.mubr.bf16.gmra.mrb[0].mxu0 %v1693
      %v1802 = vpop.f32.mrb[0].mxu0
      %v1803 = vadd.f32 0.0, %v1802
      %v1804 = vpop.f32.mrb[0].mxu0
      %v1805 = vpop.f32.mrb[0].mxu0
      %v1806 = vadd.f32 0.0, %v1805
      %v1807 = vpop.f32.mrb[0].mxu0
      %1808 = vmatprep.mubr.bf16.mxu0 0
      %1809 = vmatmul.mubr.bf16.gmra.mrb[0].mxu0 %v1694
      %v1810 = vpop.f32.mrb[0].mxu0
      %v1811 = vadd.f32 0.0, %v1810
      %v1812 = vpop.f32.mrb[0].mxu0
      %v1813 = vpop.f32.mrb[0].mxu0
      %v1814 = vadd.f32 0.0, %v1813
      %v1815 = vpop.f32.mrb[0].mxu0
      %1816 = vmatprep.mubr.bf16.mxu0 0
      %1817 = vmatmul.mubr.bf16.gmra.mrb[0].mxu0 %v1695
      %v1818 = vpop.f32.mrb[0].mxu0
      %v1819 = vadd.f32 0.0, %v1818
      %v1820 = vpop.f32.mrb[0].mxu0
      %v1821 = vpop.f32.mrb[0].mxu0
      %v1822 = vadd.f32 0.0, %v1821
      %v1823 = vpop.f32.mrb[0].mxu0
      %1824 = vmatprep.mubr.bf16.mxu0 0
      %1825 = vmatmul.mubr.bf16.gmra.mrb[0].mxu0 %v1696
      %v1826 = vpop.f32.mrb[0].mxu0
      %v1827 = vadd.f32 0.0, %v1826
      %v1828 = vpop.f32.mrb[0].mxu0
      %v1829 = vpop.f32.mrb[0].mxu0
      %v1830 = vadd.f32 0.0, %v1829
      %v1831 = vpop.f32.mrb[0].mxu0
      %1832 = vmatprep.mubr.bf16.mxu0 0
      %1833 = vmatmul.mubr.bf16.gmra.mrb[0].mxu0 %v1697
      %v1834 = vpop.f32.mrb[0].mxu0
      %v1835 = vadd.f32 0.0, %v1834
      %v1836 = vpop.f32.mrb[0].mxu0
      %v1837 = vpop.f32.mrb[0].mxu0
      %v1838 = vadd.f32 0.0, %v1837
      %v1839 = vpop.f32.mrb[0].mxu0
      %1840 = vmatprep.mubr.bf16.mxu0 0
      %1841 = vmatmul.mubr.bf16.gmra.mrb[0].mxu0 %v1698
      %v1842 = vpop.f32.mrb[0].mxu0
      %v1843 = vadd.f32 0.0, %v1842
      %v1844 = vpop.f32.mrb[0].mxu0
      %v1845 = vpop.f32.mrb[0].mxu0
      %v1846 = vpop.f32.mrb[0].mxu0
      %1847 = vdwg.mxu0
      %s1848 = scalar_lea.vmem [#allocation7], 300
      %v1849 = vld [vmem:[%s1848] sm:$0xf]
      %v1850 = vld [vmem:[%s1848 + $0x4] sm:$0xf]
      %v1851 = vld [vmem:[%s1848 + $0x8] sm:$0xf]
      %v1852 = vld [vmem:[%s1848 + $0xc] sm:$0xf]
      %v1853 = vld [vmem:[%s1848 + $0x10] sm:$0xf]
      %v1854 = vld [vmem:[%s1848 + $0x14] sm:$0xf]
      %v1855 = vld [vmem:[%s1848 + $0x18] sm:$0xf]
      %v1856 = vld [vmem:[%s1848 + $0x1c] sm:$0xf]
      %v1857 = vld [vmem:[%s1848 + $0x20] sm:$0xf]
      %v1858 = vld [vmem:[%s1848 + $0x24] sm:$0xf]
      %v1859 = vld [vmem:[%s1848 + $0x28] sm:$0xf]
      %v1860 = vld [vmem:[%s1848 + $0x2c] sm:$0xf]
      %v1861 = vld [vmem:[%s1848 + $0x30] sm:$0xf]
      %v1862 = vld [vmem:[%s1848 + $0x34] sm:$0xf]
      %v1863 = vld [vmem:[%s1848 + $0x38] sm:$0xf]
      %v1864 = vld [vmem:[%s1848 + $0x3c] sm:$0xf]
      %v1865 = vld [vmem:[%s1848 + $0x40] sm:$0xf]
      %v1866 = vld [vmem:[%s1848 + $0x44] sm:$0xf]
      %v1867 = vld [vmem:[%s1848 + $0x48] sm:$0xf]
      %v1868 = vld [vmem:[%s1848 + $0x4c] sm:$0xf]
      %v1869 = vld [vmem:[%s1848 + $0x50] sm:$0xf]
      %v1870 = vld [vmem:[%s1848 + $0x54] sm:$0xf]
      %v1871 = vld [vmem:[%s1848 + $0x58] sm:$0xf]
      %v1872 = vld [vmem:[%s1848 + $0x5c] sm:$0xf]
      %v1873 = vld [vmem:[%s1848 + $0x60] sm:$0xf]
      %v1899 = vunpack.c.l.b16 %v1849
      %v1900 = vunpack.c.l.b16 %v1850
      %v1901 = vunpack.c.l.b16 %v1851
      %v1902 = vunpack.c.l.b16 %v1852
      %v1903 = vunpack.c.l.b16 %v1853
      %v1904 = vunpack.c.l.b16 %v1854
      %v1905 = vunpack.c.l.b16 %v1855
      %v1906 = vunpack.c.l.b16 %v1856
      %v1907 = vunpack.c.l.b16 %v1857
      %v1908 = vunpack.c.l.b16 %v1858
      %v1909 = vunpack.c.l.b16 %v1859
      %v1910 = vunpack.c.l.b16 %v1860
      %v1911 = vunpack.c.l.b16 %v1861
      %v1912 = vunpack.c.l.b16 %v1862
      %v1913 = vunpack.c.l.b16 %v1863
      %v1914 = vunpack.c.l.b16 %v1864
      %v1915 = vunpack.c.l.b16 %v1865
      %v1916 = vunpack.c.l.b16 %v1866
      %v1917 = vunpack.c.l.b16 %v1867
      %v1918 = vunpack.c.l.b16 %v1868
      %v1919 = vunpack.c.l.b16 %v1869
      %v1920 = vunpack.c.l.b16 %v1870
      %v1921 = vunpack.c.l.b16 %v1871
      %v1922 = vunpack.c.l.b16 %v1872
      %v1923 = vunpack.c.l.b16 %v1873
      %v1924 = vpack.c.b16 %v1900, %v1899
      %v1925 = vpack.c.b16 %v1902, %v1901
      %v1926 = vpack.c.b16 %v1904, %v1903
      %v1927 = vpack.c.b16 %v1906, %v1905
      %v1928 = vpack.c.b16 %v1908, %v1907
      %v1929 = vpack.c.b16 %v1910, %v1909
      %v1930 = vpack.c.b16 %v1912, %v1911
      %v1931 = vpack.c.b16 %v1914, %v1913
      %v1932 = vpack.c.b16 %v1916, %v1915
      %v1933 = vpack.c.b16 %v1918, %v1917
      %v1934 = vpack.c.b16 %v1920, %v1919
      %v1935 = vpack.c.b16 %v1922, %v1921
      %v1936 = vpack.c.b16 %v1923, %v1923
      %1950 = vmatprep.subr.bf16.mxu0 0
      %1951 = vmatpush1.bf16.msra.mxu0 %v1220
      %1952 = vmatprep.subr.bf16.mxu0 0
      %1953 = vmatpush1.bf16.msra.mxu0 %v1221
      %1954 = vmatprep.subr.bf16.mxu0 0
      %1955 = vmatpush1.bf16.msra.mxu0 %v1222
      %1956 = vmatprep.subr.bf16.mxu0 0
      %1957 = vmatpush1.bf16.msra.mxu0 %v1223
      %1958 = vmatprep.subr.bf16.mxu0 0
      %1959 = vmatpush1.bf16.msra.mxu0 %v1224
      %1960 = vmatprep.subr.bf16.mxu0 0
      %1961 = vmatpush1.bf16.msra.mxu0 %v1225
      %1962 = vmatprep.subr.bf16.mxu0 0
      %1963 = vmatpush1.bf16.msra.mxu0 %v1226
      %1964 = vmatprep.subr.bf16.mxu0 0
      %1965 = vmatpush1.bf16.msra.mxu0 %v1227
      %1966 = vmatprep.subr.bf16.mxu0 0
      %1967 = vmatpush1.bf16.msra.mxu0 0
      %1968 = vmatprep.subr.bf16.mxu0 0
      %1969 = vmatpush1.bf16.msra.mxu0 0
      %1970 = vmatprep.subr.bf16.mxu0 0
      %1971 = vmatpush1.bf16.msra.mxu0 0
      %1972 = vmatprep.subr.bf16.mxu0 0
      %1973 = vmatpush1.bf16.msra.mxu0 0
      %1974 = vmatprep.subr.bf16.mxu0 0
      %1975 = vmatpush1.bf16.msra.mxu0 0
      %1976 = vmatprep.subr.bf16.mxu0 0
      %1977 = vmatpush1.bf16.msra.mxu0 0
      %1978 = vmatprep.subr.bf16.mxu0 0
      %1979 = vmatpush1.bf16.msra.mxu0 0
      %1980 = vmatprep.subr.bf16.mxu0 0
      %1981 = vmatpush1.bf16.msra.mxu0 0
      %1982 = vmatprep.mubr.bf16.mxu0 0
      %1983 = vmatmul.mubr.bf16.gmra.mrb[0].mxu0 %v1924
      %v1984 = vpop.f32.mrb[0].mxu0
      %v1985 = vadd.f32 0.0, %v1984
      %v1986 = vpop.f32.mrb[0].mxu0
      %v1987 = vpop.f32.mrb[0].mxu0
      %v1988 = vadd.f32 0.0, %v1987
      %v1989 = vpop.f32.mrb[0].mxu0
      %1990 = vmatprep.mubr.bf16.mxu0 0
      %1991 = vmatmul.mubr.bf16.gmra.mrb[0].mxu0 %v1925
      %v1992 = vpop.f32.mrb[0].mxu0
      %v1993 = vadd.f32 0.0, %v1992
      %v1994 = vpop.f32.mrb[0].mxu0
      %v1995 = vpop.f32.mrb[0].mxu0
      %v1996 = vadd.f32 0.0, %v1995
      %v1997 = vpop.f32.mrb[0].mxu0
      %1998 = vmatprep.mubr.bf16.mxu0 0
      %1999 = vmatmul.mubr.bf16.gmra.mrb[0].mxu0 %v1926
      %v2000 = vpop.f32.mrb[0].mxu0
      %v2001 = vadd.f32 0.0, %v2000
      %v2002 = vpop.f32.mrb[0].mxu0
      %v2003 = vpop.f32.mrb[0].mxu0
      %v2004 = vadd.f32 0.0, %v2003
      %v2005 = vpop.f32.mrb[0].mxu0
      %2006 = vmatprep.mubr.bf16.mxu0 0
      %2007 = vmatmul.mubr.bf16.gmra.mrb[0].mxu0 %v1927
      %v2008 = vpop.f32.mrb[0].mxu0
      %v2009 = vadd.f32 0.0, %v2008
      %v2010 = vpop.f32.mrb[0].mxu0
      %v2011 = vpop.f32.mrb[0].mxu0
      %v2012 = vadd.f32 0.0, %v2011
      %v2013 = vpop.f32.mrb[0].mxu0
      %2014 = vmatprep.mubr.bf16.mxu0 0
      %2015 = vmatmul.mubr.bf16.gmra.mrb[0].mxu0 %v1928
      %v2016 = vpop.f32.mrb[0].mxu0
      %v2017 = vadd.f32 0.0, %v2016
      %v2018 = vpop.f32.mrb[0].mxu0
      %v2019 = vpop.f32.mrb[0].mxu0
      %v2020 = vadd.f32 0.0, %v2019
      %v2021 = vpop.f32.mrb[0].mxu0
      %2022 = vmatprep.mubr.bf16.mxu0 0
      %2023 = vmatmul.mubr.bf16.gmra.mrb[0].mxu0 %v1929
      %v2024 = vpop.f32.mrb[0].mxu0
      %v2025 = vadd.f32 0.0, %v2024
      %v2026 = vpop.f32.mrb[0].mxu0
      %v2027 = vpop.f32.mrb[0].mxu0
      %v2028 = vadd.f32 0.0, %v2027
      %v2029 = vpop.f32.mrb[0].mxu0
      %2030 = vmatprep.mubr.bf16.mxu0 0
      %2031 = vmatmul.mubr.bf16.gmra.mrb[0].mxu0 %v1930
      %v2032 = vpop.f32.mrb[0].mxu0
      %v2033 = vadd.f32 0.0, %v2032
      %v2034 = vpop.f32.mrb[0].mxu0
      %v2035 = vpop.f32.mrb[0].mxu0
      %v2036 = vadd.f32 0.0, %v2035
      %v2037 = vpop.f32.mrb[0].mxu0
      %2038 = vmatprep.mubr.bf16.mxu0 0
      %2039 = vmatmul.mubr.bf16.gmra.mrb[0].mxu0 %v1931
      %v2040 = vpop.f32.mrb[0].mxu0
      %v2041 = vadd.f32 0.0, %v2040
      %v2042 = vpop.f32.mrb[0].mxu0
      %v2043 = vpop.f32.mrb[0].mxu0
      %v2044 = vadd.f32 0.0, %v2043
      %v2045 = vpop.f32.mrb[0].mxu0
      %2046 = vmatprep.mubr.bf16.mxu0 0
      %2047 = vmatmul.mubr.bf16.gmra.mrb[0].mxu0 %v1932
      %v2048 = vpop.f32.mrb[0].mxu0
      %v2049 = vadd.f32 0.0, %v2048
      %v2050 = vpop.f32.mrb[0].mxu0
      %v2051 = vpop.f32.mrb[0].mxu0
      %v2052 = vadd.f32 0.0, %v2051
      %v2053 = vpop.f32.mrb[0].mxu0
      %2054 = vmatprep.mubr.bf16.mxu0 0
      %2055 = vmatmul.mubr.bf16.gmra.mrb[0].mxu0 %v1933
      %v2056 = vpop.f32.mrb[0].mxu0
      %v2057 = vadd.f32 0.0, %v2056
      %v2058 = vpop.f32.mrb[0].mxu0
      %v2059 = vpop.f32.mrb[0].mxu0
      %v2060 = vadd.f32 0.0, %v2059
      %v2061 = vpop.f32.mrb[0].mxu0
      %2062 = vmatprep.mubr.bf16.mxu0 0
      %2063 = vmatmul.mubr.bf16.gmra.mrb[0].mxu0 %v1934
      %v2064 = vpop.f32.mrb[0].mxu0
      %v2065 = vadd.f32 0.0, %v2064
      %v2066 = vpop.f32.mrb[0].mxu0
      %v2067 = vpop.f32.mrb[0].mxu0
      %v2068 = vadd.f32 0.0, %v2067
      %v2069 = vpop.f32.mrb[0].mxu0
      %2070 = vmatprep.mubr.bf16.mxu0 0
      %2071 = vmatmul.mubr.bf16.gmra.mrb[0].mxu0 %v1935
      %v2072 = vpop.f32.mrb[0].mxu0
      %v2073 = vadd.f32 0.0, %v2072
      %v2074 = vpop.f32.mrb[0].mxu0
      %v2075 = vpop.f32.mrb[0].mxu0
      %v2076 = vadd.f32 0.0, %v2075
      %v2077 = vpop.f32.mrb[0].mxu0
      %2078 = vmatprep.mubr.bf16.mxu0 0
      %2079 = vmatmul.mubr.bf16.gmra.mrb[0].mxu0 %v1936
      %v2080 = vpop.f32.mrb[0].mxu0
      %v2081 = vadd.f32 0.0, %v2080
      %v2082 = vpop.f32.mrb[0].mxu0
      %v2083 = vpop.f32.mrb[0].mxu0
      %v2084 = vpop.f32.mrb[0].mxu0
      %2085 = vdwg.mxu0
      %v2086 = vmax.f32 %v1271, %v1509
      %v2087 = vmax.f32 %v1274, %v1512
      %v2088 = vmax.f32 %v1279, %v1517
      %v2089 = vmax.f32 %v1282, %v1520
      %v2090 = vmax.f32 %v1287, %v1525
      %v2091 = vmax.f32 %v1290, %v1528
      %v2092 = vmax.f32 %v1295, %v1533
      %v2093 = vmax.f32 %v1298, %v1536
      %v2094 = vmax.f32 %v1303, %v1541
      %v2095 = vmax.f32 %v1306, %v1544
      %v2096 = vmax.f32 %v1311, %v1549
      %v2097 = vmax.f32 %v1314, %v1552
      %v2098 = vmax.f32 %v1319, %v1557
      %v2099 = vmax.f32 %v1322, %v1560
      %v2100 = vmax.f32 %v1327, %v1565
      %v2101 = vmax.f32 %v1330, %v1568
      %v2102 = vmax.f32 %v1335, %v1573
      %v2103 = vmax.f32 %v1338, %v1576
      %v2104 = vmax.f32 %v1343, %v1581
      %v2105 = vmax.f32 %v1346, %v1584
      %v2106 = vmax.f32 %v1351, %v1589
      %v2107 = vmax.f32 %v1354, %v1592
      %v2108 = vmax.f32 %v1359, %v1597
      %v2109 = vmax.f32 %v1362, %v1600
      %v2110 = vmax.f32 %v1367, %v1605
      %v2111 = vmax.f32 %v1747, %v1985
      %v2112 = vmax.f32 %v1750, %v1988
      %v2113 = vmax.f32 %v1755, %v1993
      %v2114 = vmax.f32 %v1758, %v1996
      %v2115 = vmax.f32 %v1763, %v2001
      %v2116 = vmax.f32 %v1766, %v2004
      %v2117 = vmax.f32 %v1771, %v2009
      %v2118 = vmax.f32 %v1774, %v2012
      %v2119 = vmax.f32 %v1779, %v2017
      %v2120 = vmax.f32 %v1782, %v2020
      %v2121 = vmax.f32 %v1787, %v2025
      %v2122 = vmax.f32 %v1790, %v2028
      %v2123 = vmax.f32 %v1795, %v2033
      %v2124 = vmax.f32 %v1798, %v2036
      %v2125 = vmax.f32 %v1803, %v2041
      %v2126 = vmax.f32 %v1806, %v2044
      %v2127 = vmax.f32 %v1811, %v2049
      %v2128 = vmax.f32 %v1814, %v2052
      %v2129 = vmax.f32 %v1819, %v2057
      %v2130 = vmax.f32 %v1822, %v2060
      %v2131 = vmax.f32 %v1827, %v2065
      %v2132 = vmax.f32 %v1830, %v2068
      %v2133 = vmax.f32 %v1835, %v2073
      %v2134 = vmax.f32 %v1838, %v2076
      %v2135 = vmax.f32 %v1843, %v2081
      %v2136 = vmax.f32 %v2086, %v2111
      %v2137 = vmax.f32 %v2087, %v2112
      %v2138 = vmax.f32 %v2088, %v2113
      %v2139 = vmax.f32 %v2089, %v2114
      %v2140 = vmax.f32 %v2090, %v2115
      %v2141 = vmax.f32 %v2091, %v2116
      %v2142 = vmax.f32 %v2092, %v2117
      %v2143 = vmax.f32 %v2093, %v2118
      %v2144 = vmax.f32 %v2094, %v2119
      %v2145 = vmax.f32 %v2095, %v2120
      %v2146 = vmax.f32 %v2096, %v2121
      %v2147 = vmax.f32 %v2097, %v2122
      %v2148 = vmax.f32 %v2098, %v2123
      %v2149 = vmax.f32 %v2099, %v2124
      %v2150 = vmax.f32 %v2100, %v2125
      %v2151 = vmax.f32 %v2101, %v2126
      %v2152 = vmax.f32 %v2102, %v2127
      %v2153 = vmax.f32 %v2103, %v2128
      %v2154 = vmax.f32 %v2104, %v2129
      %v2155 = vmax.f32 %v2105, %v2130
      %v2156 = vmax.f32 %v2106, %v2131
      %v2157 = vmax.f32 %v2107, %v2132
      %v2158 = vmax.f32 %v2108, %v2133
      %v2159 = vmax.f32 %v2109, %v2134
      %v2160 = vmax.f32 %v2110, %v2135
      %v2161 = vld [vmem:[%s1] sm:$0x1]
      %v2163 = vlaneseq
      %v2164 = vshrl.u32 %v2163, 7
      %v2165 = vsub.s32 0, %v2164
      %v2166 = vrot.slane %v2161, %v2165
      %v2168 = vadd.f32 %v2136, %v2166
      %v2169 = vadd.f32 %v2137, %v2166
      %v2170 = vadd.f32 %v2138, %v2166
      %v2171 = vadd.f32 %v2139, %v2166
      %v2172 = vadd.f32 %v2140, %v2166
      %v2173 = vadd.f32 %v2141, %v2166
      %v2174 = vadd.f32 %v2142, %v2166
      %v2175 = vadd.f32 %v2143, %v2166
      %v2176 = vadd.f32 %v2144, %v2166
      %v2177 = vadd.f32 %v2145, %v2166
      %v2178 = vadd.f32 %v2146, %v2166
      %v2179 = vadd.f32 %v2147, %v2166
      %v2180 = vadd.f32 %v2148, %v2166
      %v2181 = vadd.f32 %v2149, %v2166
      %v2182 = vadd.f32 %v2150, %v2166
      %v2183 = vadd.f32 %v2151, %v2166
      %v2184 = vadd.f32 %v2152, %v2166
      %v2185 = vadd.f32 %v2153, %v2166
      %v2186 = vadd.f32 %v2154, %v2166
      %v2187 = vadd.f32 %v2155, %v2166
      %v2188 = vadd.f32 %v2156, %v2166
      %v2189 = vadd.f32 %v2157, %v2166
      %v2190 = vadd.f32 %v2158, %v2166
      %v2191 = vadd.f32 %v2159, %v2166
      %v2192 = vadd.f32 %v2160, %v2166
      %v2193 = vmax.f32 %v2168, 0.0
      %v2194 = vmax.f32 %v2169, 0.0
      %v2195 = vmax.f32 %v2170, 0.0
      %v2196 = vmax.f32 %v2171, 0.0
      %v2197 = vmax.f32 %v2172, 0.0
      %v2198 = vmax.f32 %v2173, 0.0
      %v2199 = vmax.f32 %v2174, 0.0
      %v2200 = vmax.f32 %v2175, 0.0
      %v2201 = vmax.f32 %v2176, 0.0
      %v2202 = vmax.f32 %v2177, 0.0
      %v2203 = vmax.f32 %v2178, 0.0
      %v2204 = vmax.f32 %v2179, 0.0
      %v2205 = vmax.f32 %v2180, 0.0
      %v2206 = vmax.f32 %v2181, 0.0
      %v2207 = vmax.f32 %v2182, 0.0
      %v2208 = vmax.f32 %v2183, 0.0
      %v2209 = vmax.f32 %v2184, 0.0
      %v2210 = vmax.f32 %v2185, 0.0
      %v2211 = vmax.f32 %v2186, 0.0
      %v2212 = vmax.f32 %v2187, 0.0
      %v2213 = vmax.f32 %v2188, 0.0
      %v2214 = vmax.f32 %v2189, 0.0
      %v2215 = vmax.f32 %v2190, 0.0
      %v2216 = vmax.f32 %v2191, 0.0
      %v2217 = vmax.f32 %v2192, 0.0
      %v2218 = vpack.c.bf16 %v2194, %v2193
      %v2219 = vpack.c.bf16 %v2196, %v2195
      %v2220 = vpack.c.bf16 %v2198, %v2197
      %v2221 = vpack.c.bf16 %v2200, %v2199
      %v2222 = vpack.c.bf16 %v2202, %v2201
      %v2223 = vpack.c.bf16 %v2204, %v2203
      %v2224 = vpack.c.bf16 %v2206, %v2205
      %v2225 = vpack.c.bf16 %v2208, %v2207
      %v2226 = vpack.c.bf16 %v2210, %v2209
      %v2227 = vpack.c.bf16 %v2212, %v2211
      %v2228 = vpack.c.bf16 %v2214, %v2213
      %v2229 = vpack.c.bf16 %v2216, %v2215
      %v2230 = vpack.c.bf16 %v2217, %v2217
      %v2244 = vunpack.c.l.b16 %v2218
      %v2245 = vunpack.c.h.b16 %v2218
      %v2246 = vunpack.c.l.b16 %v2219
      %v2247 = vunpack.c.h.b16 %v2219
      %v2248 = vunpack.c.l.b16 %v2220
      %v2249 = vunpack.c.h.b16 %v2220
      %v2250 = vunpack.c.l.b16 %v2221
      %v2251 = vunpack.c.h.b16 %v2221
      %v2252 = vunpack.c.l.b16 %v2222
      %v2253 = vunpack.c.h.b16 %v2222
      %v2254 = vunpack.c.l.b16 %v2223
      %v2255 = vunpack.c.h.b16 %v2223
      %v2256 = vunpack.c.l.b16 %v2224
      %v2257 = vunpack.c.h.b16 %v2224
      %v2258 = vunpack.c.l.b16 %v2225
      %v2259 = vunpack.c.h.b16 %v2225
      %v2260 = vunpack.c.l.b16 %v2226
      %v2261 = vunpack.c.h.b16 %v2226
      %v2262 = vunpack.c.l.b16 %v2227
      %v2263 = vunpack.c.h.b16 %v2227
      %v2264 = vunpack.c.l.b16 %v2228
      %v2265 = vunpack.c.h.b16 %v2228
      %v2266 = vunpack.c.l.b16 %v2229
      %v2267 = vunpack.c.h.b16 %v2229
      %v2268 = vunpack.c.l.b16 %v2230
      %v2269 = vpack.c.b16 %v2244, %v2244
      %v2270 = vpack.c.b16 %v2245, %v2245
      %v2271 = vpack.c.b16 %v2246, %v2246
      %v2272 = vpack.c.b16 %v2247, %v2247
      %v2273 = vpack.c.b16 %v2248, %v2248
      %v2274 = vpack.c.b16 %v2249, %v2249
      %v2275 = vpack.c.b16 %v2250, %v2250
      %v2276 = vpack.c.b16 %v2251, %v2251
      %v2277 = vpack.c.b16 %v2252, %v2252
      %v2278 = vpack.c.b16 %v2253, %v2253
      %v2279 = vpack.c.b16 %v2254, %v2254
      %v2280 = vpack.c.b16 %v2255, %v2255
      %v2281 = vpack.c.b16 %v2256, %v2256
      %v2282 = vpack.c.b16 %v2257, %v2257
      %v2283 = vpack.c.b16 %v2258, %v2258
      %v2284 = vpack.c.b16 %v2259, %v2259
      %v2285 = vpack.c.b16 %v2260, %v2260
      %v2286 = vpack.c.b16 %v2261, %v2261
      %v2287 = vpack.c.b16 %v2262, %v2262
      %v2288 = vpack.c.b16 %v2263, %v2263
      %v2289 = vpack.c.b16 %v2264, %v2264
      %v2290 = vpack.c.b16 %v2265, %v2265
      %v2291 = vpack.c.b16 %v2266, %v2266
      %v2292 = vpack.c.b16 %v2267, %v2267
      %v2293 = vpack.c.b16 %v2268, %v2268
      %2319 = vst [vmem:[%s198] sm:$0xf] %v2269
      %2320 = vst [vmem:[%s198 + $0x4] sm:$0xf] %v2270
      %2321 = vst [vmem:[%s198 + $0x8] sm:$0xf] %v2271
      %2322 = vst [vmem:[%s198 + $0xc] sm:$0xf] %v2272
      %2323 = vst [vmem:[%s198 + $0x10] sm:$0xf] %v2273
      %2324 = vst [vmem:[%s198 + $0x14] sm:$0xf] %v2274
      %2325 = vst [vmem:[%s198 + $0x18] sm:$0xf] %v2275
      %2326 = vst [vmem:[%s198 + $0x1c] sm:$0xf] %v2276
      %2327 = vst [vmem:[%s198 + $0x20] sm:$0xf] %v2277
      %2328 = vst [vmem:[%s198 + $0x24] sm:$0xf] %v2278
      %2329 = vst [vmem:[%s198 + $0x28] sm:$0xf] %v2279
      %2330 = vst [vmem:[%s198 + $0x2c] sm:$0xf] %v2280
      %2331 = vst [vmem:[%s198 + $0x30] sm:$0xf] %v2281
      %2332 = vst [vmem:[%s198 + $0x34] sm:$0xf] %v2282
      %2333 = vst [vmem:[%s198 + $0x38] sm:$0xf] %v2283
      %2334 = vst [vmem:[%s198 + $0x3c] sm:$0xf] %v2284
      %2335 = vst [vmem:[%s198 + $0x40] sm:$0xf] %v2285
      %2336 = vst [vmem:[%s198 + $0x44] sm:$0xf] %v2286
      %2337 = vst [vmem:[%s198 + $0x48] sm:$0xf] %v2287
      %2338 = vst [vmem:[%s198 + $0x4c] sm:$0xf] %v2288
      %2339 = vst [vmem:[%s198 + $0x50] sm:$0xf] %v2289
      %2340 = vst [vmem:[%s198 + $0x54] sm:$0xf] %v2290
      %2341 = vst [vmem:[%s198 + $0x58] sm:$0xf] %v2291
      %2342 = vst [vmem:[%s198 + $0x5c] sm:$0xf] %v2292
      %2343 = vst [vmem:[%s198 + $0x60] sm:$0xf] %v2293
      %s2344 = smul.u32 25, %s20
      %p2345 = scmp.lt.s32.totalorder %s2344, 49
      %s2346 = scalar_select %p2345, %s2344, 49
      %s2347 = smul.addr %s2346, 4
      %s2348 = scalar_lea.vmem %s4, %s2347
      // Predicated region
      $region33: #{simple_cnn_header_forward.6} parent=31 // pred_check
        %p2349 = pneg %p106
      $region34: #{simple_cnn_header_forward.6} parent=31 // pred_check_branch
        %2351 = sbr.rel (%p2349) target = $region36
      $region35: #{simple_cnn_header_forward.6} parent=31 // pred_region
        %s2352 = smul.u32 25, %s20
      $region36: #{simple_cnn_header_forward.6} parent=31 // pred_fallthru
        _
    $region32: #{simple_cnn_header_forward.6} parent=5 // pred_fallthru
      _
    %p2353 = scmp.le.s32.totalorder 2, %s15
    // Predicated region
    $region37: #{simple_cnn_header_forward.6} parent=5 // pred_check
      %p2354 = pneg %p2353
    $region38: #{simple_cnn_header_forward.6} parent=5 // pred_check_branch
      %2356 = sbr.rel (%p2354) target = $region40
    $region39: #{simple_cnn_header_forward.6} parent=5 // pred_region
      %s2357 = ssub.s32 %s15, 2
      // Predicated region
      $region41: #{simple_cnn_header_forward.6} parent=39 // pred_check
        %p2358 = pneg %p112
      $region42: #{simple_cnn_header_forward.6} parent=39 // pred_check_branch
        %2360 = sbr.rel (%p2358) target = $region44
      $region43: #{simple_cnn_header_forward.6} parent=39 // pred_region
        %s2361 = smul.u32 25, %s21
        %p2362 = scmp.lt.s32.totalorder %s2361, 49
        %s2363 = scalar_select %p2362, %s2361, 49
        %s2364 = smul.addr %s2363, 4
        %s2365 = scalar_lea.vmem %s4, %s2364
      $region44: #{simple_cnn_header_forward.6} parent=39 // pred_fallthru
        _
    $region40: #{simple_cnn_header_forward.6} parent=5 // pred_fallthru
      _
  $region6: #{simple_cnn_header_forward.6} parent=0 // loop_footer
    %s19 = sadd.s32 1, %s15
  $region7: #{simple_cnn_header_forward.6} parent=0 // loop_footer_branch
    %14 = sbr.rel target = $region3
  $region8: #{simple_cnn_header_forward.6} parent=0 // loop_exit
    _

// kernel: simple_cnn_header_forward.7
$region0: #{simple_cnn_header_forward.7}
  #allocation0 [shape = 'u32[]', space=smem, size = 0x4, offset = 0x4, fixed_abs, tag = 'smem constant byte address 0x4 - core index']
  #allocation1 [shape = 'u32[144,128]{1,0:T(1,128)}', space=vmem, size = 0x12000, scoped, tag = 'internal scratch']
  #allocation2 [shape = 'u32[2048]{0}', space=vmem, size = 0x2000, scoped, tag = 'scoped memory for simple_cnn_header_forward.7']
  #allocation3 [shape = 'u32[2048]{0}', space=vmem, size = 0x2000, scoped, tag = 'scoped memory for simple_cnn_header_forward.7']
  #allocation4 [shape = 'u32[2048]{0}', space=vmem, size = 0x2000, scoped, tag = 'scoped memory for simple_cnn_header_forward.7']
  #allocation5 [shape = 'u32[2048]{0}', space=vmem, size = 0x2000, scoped, tag = 'scoped memory for simple_cnn_header_forward.7']
  #allocation6 [shape = 'u32[2048]{0}', space=vmem, size = 0x2000, scoped, tag = 'scoped memory for simple_cnn_header_forward.7']
  %s0 = inlined_call_operand.vmem [shape: bf16[256,128], index: 0, kind: input, shape index: {}]
  %s1 = inlined_call_operand.vmem [shape: f32[1,128], index: 1, kind: input, shape index: {}]
  %s2 = inlined_call_operand.vmem [shape: bf16[4,50,256], index: 2, kind: input, shape index: {}]
  %s3 = inlined_call_operand.<no memory space> [shape: bf16[], index: 3, kind: input, shape index: {}]
  %s4 = inlined_call_operand.vmem [shape: bf16[64,128], index: 4, kind: output, shape index: {}]
  %s5 = sld [smem:[#allocation0]]
  $region45: #{simple_cnn_header_forward.7} parent=0
    _
  %s7 = ssub.s32 1, %s5
  %s8 = scalar_select 0, %s7, %s5
  %v9 = vstv %s3
  %v10 = vunpack.i.l.bf16 %v9
  %v12 = vunpack.i.h.bf16 %v9
  loop: start=0, step=1, limit=4
  $region2: #{simple_cnn_header_forward.7} parent=0 // loop_pre_header
    _
  $region3: #{simple_cnn_header_forward.7} parent=0 // loop_header
    %s15 = sphi 0, %s19
    %p16 = scmp.ge.s32.totalorder %s15, 4
    %s25 = sphi 0, %s27
    %s28 = sphi 0, %s25
    %s29 = sphi 0, %s28
    %s45 = sphi 0, %s29
    %s49 = sphi 0, %s49
    %s51 = sphi 0, %s49
    %s52 = sphi 0, %s51
    %s66 = sphi 0, %s52
    %s70 = sphi 0, %s70
    %s72 = sphi 0, %s70
    %s73 = sphi 0, %s72
    %s87 = sphi 0, %s73
    %s93 = sphi 0, %s95
    %s96 = sphi 0, %s93
    %s97 = sphi 0, %s96
    %s113 = sphi 0, %s97
  $region4: #{simple_cnn_header_forward.7} parent=0 // loop_header_branch
    %18 = sbr.rel (%p16) target = $region8
  $region5: #{simple_cnn_header_forward.7} parent=0 // loop_body
    %s20 = ssub.s32 %s15, 1
    %s21 = ssub.s32 %s15, 2
    %s22 = sadd.s32 %s15, 1
    %s23 = ssub.s32 %s15, %s22
    %p24 = scmp.eq.s32.totalorder %s23, 0
    %s26 = sadd.s32 %s25, 1
    %s27 = scalar_select %p24, %s25, %s26
    %p30 = pneg %p24
    %p31 = scmp.eq.s32.totalorder %s15, 1
    %p32 = por %p30, %p31
    %p33 = scmp.ne.s32.totalorder %s25, %s28
    %p34 = scmp.eq.s32.totalorder %s15, 0
    %p35 = por %p33, %p34
    %p36 = scmp.ne.s32.totalorder %s25, %s28
    %p37 = scmp.eq.s32.totalorder %s20, 1
    %p38 = por %p36, %p37
    %p39 = scmp.ne.s32.totalorder %s28, %s29
    %p40 = scmp.eq.s32.totalorder %s20, 0
    %p41 = por %p39, %p40
    %p42 = scmp.ne.s32.totalorder %s28, %s29
    %p43 = scmp.eq.s32.totalorder %s21, 1
    %p44 = por %p42, %p43
    %p46 = scmp.ne.s32.totalorder %s29, %s45
    %p47 = scmp.eq.s32.totalorder %s21, 0
    %p48 = por %p46, %p47
    %s50 = sadd.s32 %s49, 1
    %p53 = scmp.eq.s32.totalorder %s15, 1
    %p54 = scmp.ne.s32.totalorder %s49, %s51
    %p55 = scmp.eq.s32.totalorder %s15, 0
    %p56 = por %p54, %p55
    %p57 = scmp.ne.s32.totalorder %s49, %s51
    %p58 = scmp.eq.s32.totalorder %s20, 1
    %p59 = por %p57, %p58
    %p60 = scmp.ne.s32.totalorder %s51, %s52
    %p61 = scmp.eq.s32.totalorder %s20, 0
    %p62 = por %p60, %p61
    %p63 = scmp.ne.s32.totalorder %s51, %s52
    %p64 = scmp.eq.s32.totalorder %s21, 1
    %p65 = por %p63, %p64
    %p67 = scmp.ne.s32.totalorder %s52, %s66
    %p68 = scmp.eq.s32.totalorder %s21, 0
    %p69 = por %p67, %p68
    %s71 = sadd.s32 %s70, 1
    %p74 = scmp.eq.s32.totalorder %s15, 1
    %p75 = scmp.ne.s32.totalorder %s70, %s72
    %p76 = scmp.eq.s32.totalorder %s15, 0
    %p77 = por %p75, %p76
    %p78 = scmp.ne.s32.totalorder %s70, %s72
    %p79 = scmp.eq.s32.totalorder %s20, 1
    %p80 = por %p78, %p79
    %p81 = scmp.ne.s32.totalorder %s72, %s73
    %p82 = scmp.eq.s32.totalorder %s20, 0
    %p83 = por %p81, %p82
    %p84 = scmp.ne.s32.totalorder %s72, %s73
    %p85 = scmp.eq.s32.totalorder %s21, 1
    %p86 = por %p84, %p85
    %p88 = scmp.ne.s32.totalorder %s73, %s87
    %p89 = scmp.eq.s32.totalorder %s21, 0
    %p90 = por %p88, %p89
    %s91 = ssub.s32 %s15, %s22
    %p92 = scmp.eq.s32.totalorder %s91, 0
    %s94 = sadd.s32 %s93, 1
    %s95 = scalar_select %p92, %s93, %s94
    %p98 = pneg %p92
    %p99 = scmp.eq.s32.totalorder %s15, 1
    %p100 = por %p98, %p99
    %p101 = scmp.ne.s32.totalorder %s93, %s96
    %p102 = scmp.eq.s32.totalorder %s15, 0
    %p103 = por %p101, %p102
    %p104 = scmp.ne.s32.totalorder %s93, %s96
    %p105 = scmp.eq.s32.totalorder %s20, 1
    %p106 = por %p104, %p105
    %p107 = scmp.ne.s32.totalorder %s96, %s97
    %p108 = scmp.eq.s32.totalorder %s20, 0
    %p109 = por %p107, %p108
    %p110 = scmp.ne.s32.totalorder %s96, %s97
    %p111 = scmp.eq.s32.totalorder %s21, 1
    %p112 = por %p110, %p111
    %p114 = scmp.ne.s32.totalorder %s97, %s113
    %p115 = scmp.eq.s32.totalorder %s21, 0
    %p116 = por %p114, %p115
    %p117 = scmp.le.s32.totalorder 1, %s15
    %p118 = scmp.lt.s32.totalorder %s15, 3
    %p119 = pnand %p117, %p118
    %p120 = pneg %p119
    // Predicated region
    $region9: #{simple_cnn_header_forward.7} parent=5 // pred_check
      _
    $region10: #{simple_cnn_header_forward.7} parent=5 // pred_check_branch
      %122 = sbr.rel (%p119) target = $region12
    $region11: #{simple_cnn_header_forward.7} parent=5 // pred_region
      %s123 = ssub.s32 %s15, 1
      // Predicated region
      $region13: #{simple_cnn_header_forward.7} parent=11 // pred_check
        %p124 = pneg %p62
      $region14: #{simple_cnn_header_forward.7} parent=11 // pred_check_branch
        %126 = sbr.rel (%p124) target = $region16
      $region15: #{simple_cnn_header_forward.7} parent=11 // pred_region
        _
      $region16: #{simple_cnn_header_forward.7} parent=11 // pred_fallthru
        _
      // Predicated region
      $region17: #{simple_cnn_header_forward.7} parent=11 // pred_check
        %p127 = pneg %p83
      $region18: #{simple_cnn_header_forward.7} parent=11 // pred_check_branch
        %129 = sbr.rel (%p127) target = $region20
      $region19: #{simple_cnn_header_forward.7} parent=11 // pred_region
        _
      $region20: #{simple_cnn_header_forward.7} parent=11 // pred_fallthru
        _
    $region12: #{simple_cnn_header_forward.7} parent=5 // pred_fallthru
      _
    %p130 = scmp.lt.s32.totalorder %s15, 2
    // Predicated region
    $region21: #{simple_cnn_header_forward.7} parent=5 // pred_check
      %p131 = pneg %p130
    $region22: #{simple_cnn_header_forward.7} parent=5 // pred_check_branch
      %133 = sbr.rel (%p131) target = $region24
    $region23: #{simple_cnn_header_forward.7} parent=5 // pred_region
      // Predicated region
      $region25: #{simple_cnn_header_forward.7} parent=23 // pred_check
        %p134 = pneg %p35
      $region26: #{simple_cnn_header_forward.7} parent=23 // pred_check_branch
        %136 = sbr.rel (%p134) target = $region28
      $region27: #{simple_cnn_header_forward.7} parent=23 // pred_region
        %s137 = smul.u32 4, %s15
        %s138 = ssub.s32 7, %s137
        %p139 = scmp.lt.s32.totalorder %s138, 4
        %s140 = scalar_select %p139, %s138, 4
        %s141 = smul.u32 256, %s140
        %s142 = smul.u32 %s141, 2
        %p143 = scmp.lt.s32.totalorder %s137, 6
        %s144 = scalar_select %p143, %s137, 6
        %s145 = smul.addr %s144, 2
        %s146 = smul.addr %s145, 4
        %s147 = scalar_lea.vmem %s2, %s146
        %s148 = smul.u32 4, %s15
        %s149 = ssub.s32 7, %s148
        %p150 = scmp.lt.s32.totalorder %s149, 4
        %s151 = scalar_select %p150, %s149, 4
        %s152 = smul.u32 256, %s151
        %s153 = smul.u32 %s152, 2
      $region28: #{simple_cnn_header_forward.7} parent=23 // pred_fallthru
        _
    $region24: #{simple_cnn_header_forward.7} parent=5 // pred_fallthru
      _
    %p154 = scmp.le.s32.totalorder 1, %s15
    %p155 = scmp.lt.s32.totalorder %s15, 3
    %p156 = pnand %p154, %p155
    %p157 = pneg %p156
    // Predicated region
    $region29: #{simple_cnn_header_forward.7} parent=5 // pred_check
      _
    $region30: #{simple_cnn_header_forward.7} parent=5 // pred_check_branch
      %159 = sbr.rel (%p156) target = $region32
    $region31: #{simple_cnn_header_forward.7} parent=5 // pred_region
      #allocation7 [shape = 'u8[65536]{0}', space=vmem, size = 0x10000, dematerialized = true, scoped, tag = 'FusionAdapter Buffer %fusion.14 = bf16[4,64,256]{2,1,0:T(8,128)(2,1)} fusion(%param_2.47, %param_3.26), kind=kLoop, calls=%fused_computation.16.clone, metadata={op_name="jit(simple_cnn_header_forward)/jit(_pad)/pad" stack_frame_id=45}']
      %s160 = ssub.s32 %s15, 1
      %s161 = smul.u32 4, %s20
      %s162 = ssub.s32 7, %s161
      %p163 = scmp.lt.s32.totalorder %s162, 4
      %s164 = scalar_select %p163, %s162, 4
      %s165 = smul.u32 256, %s164
      %s166 = smul.u32 %s165, 2
      %p167 = scmp.lt.s32.totalorder %s161, 6
      %s168 = scalar_select %p167, %s161, 6
      %s169 = smul.addr %s168, 2
      %s170 = smul.addr %s169, 4
      %s171 = scalar_lea.vmem %s2, %s170
      %p172 = pneg %p41
      %p173 = pneg %p38
      %p174 = pneg %p62
      %p175 = pneg %p59
      %p176 = pneg %p83
      %p177 = pneg %p80
      %p178 = pneg %p109
      %p179 = pneg %p106
      %s180 = smul.u32 4, %s20
      %p181 = scmp.lt.s32.totalorder %s180, 7
      %s182 = scalar_select %p181, %s180, 7
      %s183 = smul.addr %s182, 4
      %s184 = scalar_lea.vmem %s4, %s183
      %s185 = smul.u32 4, %s20
      %s186 = ssub.s32 7, %s185
      %p187 = scmp.lt.s32.totalorder %s186, 4
      %s188 = scalar_select %p187, %s186, 4
      %s189 = smul.u32 256, %s188
      %s190 = smul.u32 %s189, 2
      %p191 = scmp.lt.s32.totalorder %s185, 6
      %s192 = scalar_select %p191, %s185, 6
      %s193 = smul.addr %s192, 2
      %s194 = smul.addr %s193, 4
      %s195 = scalar_lea.vmem %s2, %s194
      %s196 = smul.u32 4, %s20
      %s197 = ssub.s32 7, %s196
      %p198 = scmp.lt.s32.totalorder %s197, 4
      %s199 = scalar_select %p198, %s197, 4
      %s200 = smul.u32 256, %s199
      %s201 = smul.u32 %s200, 2
      %s202 = smul.u32 4, %s20
      %p203 = scmp.lt.s32.totalorder %s202, 7
      %s204 = scalar_select %p203, %s202, 7
      %s205 = smul.addr %s204, 4
      %s206 = scalar_lea.vmem %s4, %s205
      %s207 = smul.u32 4, %s20
      %v208 = vld [vmem:[%s195] sm:$0xf]
      %v209 = vunpack.c.l.bf16 %v208
      %v210 = vunpack.c.h.bf16 %v208
      %s211 = smul.addr %s196, 8
      %v212 = vlaneseq
      %v213 = vshrl.u32 %v212, 7
      %v214 = vstv %s211
      %v215 = vadd.s32 %v213, %v214
      %vm216 = vcmp.lt.s32.totalorder %v215, 50
      %v217 = vsel %vm216, %v209, %v10
      %v218 = vpack.c.bf16 0.0, %v217
      %220 = vst [vmem:[#allocation7] sm:$0xf] %v218
      %s221 = scalar_lea.vmem %s195, 4
      %v222 = vld [vmem:[%s221] sm:$0xf]
      %v223 = vunpack.c.l.bf16 %v222
      %v224 = vunpack.c.h.bf16 %v222
      %s225 = smul.addr %s196, 8
      %v226 = vlaneseq
      %v227 = vshrl.u32 %v226, 7
      %v228 = vstv %s225
      %v229 = vadd.s32 %v227, %v228
      %vm230 = vcmp.lt.s32.totalorder %v229, 50
      %v231 = vsel %vm230, %v223, %v10
      %s232 = scalar_lea.vmem [#allocation7], 4
      %v233 = vpack.c.bf16 0.0, %v231
      %235 = vst [vmem:[%s232] sm:$0xf] %v233
      %s236 = scalar_lea.vmem %s195, 8
      %v237 = vld [vmem:[%s236] sm:$0xf]
      %v238 = vunpack.c.l.bf16 %v237
      %v239 = vunpack.c.h.bf16 %v237
      %s240 = sadd.s32 %s196, 1
      %s241 = smul.addr %s240, 8
      %v242 = vlaneseq
      %v243 = vshrl.u32 %v242, 7
      %v244 = vstv %s241
      %v245 = vadd.s32 %v243, %v244
      %vm246 = vcmp.lt.s32.totalorder %v245, 50
      %v247 = vsel %vm246, %v238, %v10
      %s248 = scalar_lea.vmem [#allocation7], 8
      %v249 = vpack.c.bf16 0.0, %v247
      %251 = vst [vmem:[%s248] sm:$0xf] %v249
      %s252 = scalar_lea.vmem %s195, 12
      %v253 = vld [vmem:[%s252] sm:$0xf]
      %v254 = vunpack.c.l.bf16 %v253
      %v255 = vunpack.c.h.bf16 %v253
      %s256 = sadd.s32 %s196, 1
      %s257 = smul.addr %s256, 8
      %v258 = vlaneseq
      %v259 = vshrl.u32 %v258, 7
      %v260 = vstv %s257
      %v261 = vadd.s32 %v259, %v260
      %vm262 = vcmp.lt.s32.totalorder %v261, 50
      %v263 = vsel %vm262, %v254, %v10
      %s264 = scalar_lea.vmem [#allocation7], 12
      %v265 = vpack.c.bf16 0.0, %v263
      %267 = vst [vmem:[%s264] sm:$0xf] %v265
      %s268 = scalar_lea.vmem %s195, 16
      %s269 = sadd.s32 %s196, 2
      %s270 = ssub.s32 6, %s269
      %p271 = scmp.lt.s32.totalorder %s270, 0
      %s272 = scalar_select %p271, 0, 255
      %s273 = sshrl.u32 %s272, 1
      %s274 = sor.u32 %s272, %s273
      %s275 = sand.u32 %s274, 85
      %s276 = sshrl.u32 %s275, 1
      %s277 = sor.u32 %s275, %s276
      %s278 = sand.u32 51, %s277
      %s279 = sshrl.u32 %s278, 2
      %s280 = sor.u32 %s278, %s279
      %s281 = sand.u32 15, %s280
      %v282 = vld [vmem:[%s268] sm:%s281]
      %v283 = vunpack.c.l.bf16 %v282
      %v284 = vunpack.c.h.bf16 %v282
      %s285 = sadd.s32 %s196, 2
      %s286 = ssub.s32 6, %s285
      %v287 = vstv %s286
      %vm288 = vcmp.lt.s32.totalorder %v287, 0
      %v289 = vsel %vm288, %v10, %v283
      %s290 = sadd.s32 %s196, 2
      %s291 = smul.addr %s290, 8
      %v292 = vlaneseq
      %v293 = vshrl.u32 %v292, 7
      %v294 = vstv %s291
      %v295 = vadd.s32 %v293, %v294
      %vm296 = vcmp.lt.s32.totalorder %v295, 50
      %v297 = vsel %vm296, %v289, %v10
      %s298 = scalar_lea.vmem [#allocation7], 16
      %v299 = vpack.c.bf16 0.0, %v297
      %301 = vst [vmem:[%s298] sm:$0xf] %v299
      %s302 = scalar_lea.vmem %s195, 20
      %s303 = sadd.s32 %s196, 2
      %s304 = ssub.s32 6, %s303
      %p305 = scmp.lt.s32.totalorder %s304, 0
      %s306 = scalar_select %p305, 0, 255
      %s307 = sshrl.u32 %s306, 1
      %s308 = sor.u32 %s306, %s307
      %s309 = sand.u32 %s308, 85
      %s310 = sshrl.u32 %s309, 1
      %s311 = sor.u32 %s309, %s310
      %s312 = sand.u32 51, %s311
      %s313 = sshrl.u32 %s312, 2
      %s314 = sor.u32 %s312, %s313
      %s315 = sand.u32 15, %s314
      %v316 = vld [vmem:[%s302] sm:%s315]
      %v317 = vunpack.c.l.bf16 %v316
      %v318 = vunpack.c.h.bf16 %v316
      %s319 = sadd.s32 %s196, 2
      %s320 = ssub.s32 6, %s319
      %v321 = vstv %s320
      %vm322 = vcmp.lt.s32.totalorder %v321, 0
      %v323 = vsel %vm322, %v10, %v317
      %s324 = sadd.s32 %s196, 2
      %s325 = smul.addr %s324, 8
      %v326 = vlaneseq
      %v327 = vshrl.u32 %v326, 7
      %v328 = vstv %s325
      %v329 = vadd.s32 %v327, %v328
      %vm330 = vcmp.lt.s32.totalorder %v329, 50
      %v331 = vsel %vm330, %v323, %v10
      %s332 = scalar_lea.vmem [#allocation7], 20
      %v333 = vpack.c.bf16 0.0, %v331
      %335 = vst [vmem:[%s332] sm:$0xf] %v333
      %s336 = scalar_lea.vmem %s195, 24
      %s337 = sadd.s32 %s196, 3
      %s338 = ssub.s32 6, %s337
      %p339 = scmp.lt.s32.totalorder %s338, 0
      %s340 = scalar_select %p339, 0, 255
      %s341 = sshrl.u32 %s340, 1
      %s342 = sor.u32 %s340, %s341
      %s343 = sand.u32 %s342, 85
      %s344 = sshrl.u32 %s343, 1
      %s345 = sor.u32 %s343, %s344
      %s346 = sand.u32 51, %s345
      %s347 = sshrl.u32 %s346, 2
      %s348 = sor.u32 %s346, %s347
      %s349 = sand.u32 15, %s348
      %v350 = vld [vmem:[%s336] sm:%s349]
      %v351 = vunpack.c.l.bf16 %v350
      %v352 = vunpack.c.h.bf16 %v350
      %s353 = sadd.s32 %s196, 3
      %s354 = ssub.s32 6, %s353
      %v355 = vstv %s354
      %vm356 = vcmp.lt.s32.totalorder %v355, 0
      %v357 = vsel %vm356, %v10, %v351
      %s358 = sadd.s32 %s196, 3
      %s359 = smul.addr %s358, 8
      %v360 = vlaneseq
      %v361 = vshrl.u32 %v360, 7
      %v362 = vstv %s359
      %v363 = vadd.s32 %v361, %v362
      %vm364 = vcmp.lt.s32.totalorder %v363, 50
      %v365 = vsel %vm364, %v357, %v10
      %s366 = scalar_lea.vmem [#allocation7], 24
      %v367 = vpack.c.bf16 0.0, %v365
      %369 = vst [vmem:[%s366] sm:$0xf] %v367
      %s370 = scalar_lea.vmem %s195, 28
      %s371 = sadd.s32 %s196, 3
      %s372 = ssub.s32 6, %s371
      %p373 = scmp.lt.s32.totalorder %s372, 0
      %s374 = scalar_select %p373, 0, 255
      %s375 = sshrl.u32 %s374, 1
      %s376 = sor.u32 %s374, %s375
      %s377 = sand.u32 %s376, 85
      %s378 = sshrl.u32 %s377, 1
      %s379 = sor.u32 %s377, %s378
      %s380 = sand.u32 51, %s379
      %s381 = sshrl.u32 %s380, 2
      %s382 = sor.u32 %s380, %s381
      %s383 = sand.u32 15, %s382
      %v384 = vld [vmem:[%s370] sm:%s383]
      %v385 = vunpack.c.l.bf16 %v384
      %v386 = vunpack.c.h.bf16 %v384
      %s387 = sadd.s32 %s196, 3
      %s388 = ssub.s32 6, %s387
      %v389 = vstv %s388
      %vm390 = vcmp.lt.s32.totalorder %v389, 0
      %v391 = vsel %vm390, %v10, %v385
      %s392 = sadd.s32 %s196, 3
      %s393 = smul.addr %s392, 8
      %v394 = vlaneseq
      %v395 = vshrl.u32 %v394, 7
      %v396 = vstv %s393
      %v397 = vadd.s32 %v395, %v396
      %vm398 = vcmp.lt.s32.totalorder %v397, 50
      %v399 = vsel %vm398, %v391, %v10
      %s400 = scalar_lea.vmem [#allocation7], 28
      %v401 = vpack.c.bf16 0.0, %v399
      %403 = vst [vmem:[%s400] sm:$0xf] %v401
      %s404 = scalar_lea.vmem %s195, 56
      %v405 = vld [vmem:[%s404] sm:$0xf]
      %v406 = vunpack.c.l.bf16 %v405
      %v407 = vunpack.c.h.bf16 %v405
      %s408 = smul.addr %s196, 8
      %v409 = vlaneseq
      %v410 = vshrl.u32 %v409, 7
      %v411 = vstv %s408
      %v412 = vadd.s32 %v410, %v411
      %vm413 = vcmp.lt.s32.totalorder %v412, 50
      %v414 = vsel %vm413, %v406, %v10
      %s415 = scalar_lea.vmem [#allocation7], 32
      %v416 = vpack.c.bf16 0.0, %v414
      %418 = vst [vmem:[%s415] sm:$0xf] %v416
      %s419 = scalar_lea.vmem %s195, 60
      %v420 = vld [vmem:[%s419] sm:$0xf]
      %v421 = vunpack.c.l.bf16 %v420
      %v422 = vunpack.c.h.bf16 %v420
      %s423 = smul.addr %s196, 8
      %v424 = vlaneseq
      %v425 = vshrl.u32 %v424, 7
      %v426 = vstv %s423
      %v427 = vadd.s32 %v425, %v426
      %vm428 = vcmp.lt.s32.totalorder %v427, 50
      %v429 = vsel %vm428, %v421, %v10
      %s430 = scalar_lea.vmem [#allocation7], 36
      %v431 = vpack.c.bf16 0.0, %v429
      %433 = vst [vmem:[%s430] sm:$0xf] %v431
      %s434 = scalar_lea.vmem %s195, 64
      %v435 = vld [vmem:[%s434] sm:$0xf]
      %v436 = vunpack.c.l.bf16 %v435
      %v437 = vunpack.c.h.bf16 %v435
      %s438 = sadd.s32 %s196, 1
      %s439 = smul.addr %s438, 8
      %v440 = vlaneseq
      %v441 = vshrl.u32 %v440, 7
      %v442 = vstv %s439
      %v443 = vadd.s32 %v441, %v442
      %vm444 = vcmp.lt.s32.totalorder %v443, 50
      %v445 = vsel %vm444, %v436, %v10
      %s446 = scalar_lea.vmem [#allocation7], 40
      %v447 = vpack.c.bf16 0.0, %v445
      %449 = vst [vmem:[%s446] sm:$0xf] %v447
      %s450 = scalar_lea.vmem %s195, 68
      %v451 = vld [vmem:[%s450] sm:$0xf]
      %v452 = vunpack.c.l.bf16 %v451
      %v453 = vunpack.c.h.bf16 %v451
      %s454 = sadd.s32 %s196, 1
      %s455 = smul.addr %s454, 8
      %v456 = vlaneseq
      %v457 = vshrl.u32 %v456, 7
      %v458 = vstv %s455
      %v459 = vadd.s32 %v457, %v458
      %vm460 = vcmp.lt.s32.totalorder %v459, 50
      %v461 = vsel %vm460, %v452, %v10
      %s462 = scalar_lea.vmem [#allocation7], 44
      %v463 = vpack.c.bf16 0.0, %v461
      %465 = vst [vmem:[%s462] sm:$0xf] %v463
      %s466 = scalar_lea.vmem %s195, 72
      %s467 = sadd.s32 %s196, 2
      %s468 = ssub.s32 6, %s467
      %p469 = scmp.lt.s32.totalorder %s468, 0
      %s470 = scalar_select %p469, 0, 255
      %s471 = sshrl.u32 %s470, 1
      %s472 = sor.u32 %s470, %s471
      %s473 = sand.u32 %s472, 85
      %s474 = sshrl.u32 %s473, 1
      %s475 = sor.u32 %s473, %s474
      %s476 = sand.u32 51, %s475
      %s477 = sshrl.u32 %s476, 2
      %s478 = sor.u32 %s476, %s477
      %s479 = sand.u32 15, %s478
      %v480 = vld [vmem:[%s466] sm:%s479]
      %v481 = vunpack.c.l.bf16 %v480
      %v482 = vunpack.c.h.bf16 %v480
      %s483 = sadd.s32 %s196, 2
      %s484 = ssub.s32 6, %s483
      %v485 = vstv %s484
      %vm486 = vcmp.lt.s32.totalorder %v485, 0
      %v487 = vsel %vm486, %v10, %v481
      %s488 = sadd.s32 %s196, 2
      %s489 = smul.addr %s488, 8
      %v490 = vlaneseq
      %v491 = vshrl.u32 %v490, 7
      %v492 = vstv %s489
      %v493 = vadd.s32 %v491, %v492
      %vm494 = vcmp.lt.s32.totalorder %v493, 50
      %v495 = vsel %vm494, %v487, %v10
      %s496 = scalar_lea.vmem [#allocation7], 48
      %v497 = vpack.c.bf16 0.0, %v495
      %499 = vst [vmem:[%s496] sm:$0xf] %v497
      %s500 = scalar_lea.vmem %s195, 76
      %s501 = sadd.s32 %s196, 2
      %s502 = ssub.s32 6, %s501
      %p503 = scmp.lt.s32.totalorder %s502, 0
      %s504 = scalar_select %p503, 0, 255
      %s505 = sshrl.u32 %s504, 1
      %s506 = sor.u32 %s504, %s505
      %s507 = sand.u32 %s506, 85
      %s508 = sshrl.u32 %s507, 1
      %s509 = sor.u32 %s507, %s508
      %s510 = sand.u32 51, %s509
      %s511 = sshrl.u32 %s510, 2
      %s512 = sor.u32 %s510, %s511
      %s513 = sand.u32 15, %s512
      %v514 = vld [vmem:[%s500] sm:%s513]
      %v515 = vunpack.c.l.bf16 %v514
      %v516 = vunpack.c.h.bf16 %v514
      %s517 = sadd.s32 %s196, 2
      %s518 = ssub.s32 6, %s517
      %v519 = vstv %s518
      %vm520 = vcmp.lt.s32.totalorder %v519, 0
      %v521 = vsel %vm520, %v10, %v515
      %s522 = sadd.s32 %s196, 2
      %s523 = smul.addr %s522, 8
      %v524 = vlaneseq
      %v525 = vshrl.u32 %v524, 7
      %v526 = vstv %s523
      %v527 = vadd.s32 %v525, %v526
      %vm528 = vcmp.lt.s32.totalorder %v527, 50
      %v529 = vsel %vm528, %v521, %v10
      %s530 = scalar_lea.vmem [#allocation7], 52
      %v531 = vpack.c.bf16 0.0, %v529
      %533 = vst [vmem:[%s530] sm:$0xf] %v531
      %s534 = scalar_lea.vmem %s195, 80
      %s535 = sadd.s32 %s196, 3
      %s536 = ssub.s32 6, %s535
      %p537 = scmp.lt.s32.totalorder %s536, 0
      %s538 = scalar_select %p537, 0, 255
      %s539 = sshrl.u32 %s538, 1
      %s540 = sor.u32 %s538, %s539
      %s541 = sand.u32 %s540, 85
      %s542 = sshrl.u32 %s541, 1
      %s543 = sor.u32 %s541, %s542
      %s544 = sand.u32 51, %s543
      %s545 = sshrl.u32 %s544, 2
      %s546 = sor.u32 %s544, %s545
      %s547 = sand.u32 15, %s546
      %v548 = vld [vmem:[%s534] sm:%s547]
      %v549 = vunpack.c.l.bf16 %v548
      %v550 = vunpack.c.h.bf16 %v548
      %s551 = sadd.s32 %s196, 3
      %s552 = ssub.s32 6, %s551
      %v553 = vstv %s552
      %vm554 = vcmp.lt.s32.totalorder %v553, 0
      %v555 = vsel %vm554, %v10, %v549
      %s556 = sadd.s32 %s196, 3
      %s557 = smul.addr %s556, 8
      %v558 = vlaneseq
      %v559 = vshrl.u32 %v558, 7
      %v560 = vstv %s557
      %v561 = vadd.s32 %v559, %v560
      %vm562 = vcmp.lt.s32.totalorder %v561, 50
      %v563 = vsel %vm562, %v555, %v10
      %s564 = scalar_lea.vmem [#allocation7], 56
      %v565 = vpack.c.bf16 0.0, %v563
      %567 = vst [vmem:[%s564] sm:$0xf] %v565
      %s568 = scalar_lea.vmem %s195, 84
      %s569 = sadd.s32 %s196, 3
      %s570 = ssub.s32 6, %s569
      %p571 = scmp.lt.s32.totalorder %s570, 0
      %s572 = scalar_select %p571, 0, 255
      %s573 = sshrl.u32 %s572, 1
      %s574 = sor.u32 %s572, %s573
      %s575 = sand.u32 %s574, 85
      %s576 = sshrl.u32 %s575, 1
      %s577 = sor.u32 %s575, %s576
      %s578 = sand.u32 51, %s577
      %s579 = sshrl.u32 %s578, 2
      %s580 = sor.u32 %s578, %s579
      %s581 = sand.u32 15, %s580
      %v582 = vld [vmem:[%s568] sm:%s581]
      %v583 = vunpack.c.l.bf16 %v582
      %v584 = vunpack.c.h.bf16 %v582
      %s585 = sadd.s32 %s196, 3
      %s586 = ssub.s32 6, %s585
      %v587 = vstv %s586
      %vm588 = vcmp.lt.s32.totalorder %v587, 0
      %v589 = vsel %vm588, %v10, %v583
      %s590 = sadd.s32 %s196, 3
      %s591 = smul.addr %s590, 8
      %v592 = vlaneseq
      %v593 = vshrl.u32 %v592, 7
      %v594 = vstv %s591
      %v595 = vadd.s32 %v593, %v594
      %vm596 = vcmp.lt.s32.totalorder %v595, 50
      %v597 = vsel %vm596, %v589, %v10
      %s598 = scalar_lea.vmem [#allocation7], 60
      %v599 = vpack.c.bf16 0.0, %v597
      %601 = vst [vmem:[%s598] sm:$0xf] %v599
      %s602 = scalar_lea.vmem %s195, 112
      %v603 = vld [vmem:[%s602] sm:$0xf]
      %v604 = vunpack.c.l.bf16 %v603
      %v605 = vunpack.c.h.bf16 %v603
      %s606 = smul.addr %s196, 8
      %v607 = vlaneseq
      %v608 = vshrl.u32 %v607, 7
      %v609 = vstv %s606
      %v610 = vadd.s32 %v608, %v609
      %vm611 = vcmp.lt.s32.totalorder %v610, 50
      %v612 = vsel %vm611, %v604, %v10
      %s613 = scalar_lea.vmem [#allocation7], 64
      %v614 = vpack.c.bf16 0.0, %v612
      %616 = vst [vmem:[%s613] sm:$0xf] %v614
      %s617 = scalar_lea.vmem %s195, 116
      %v618 = vld [vmem:[%s617] sm:$0xf]
      %v619 = vunpack.c.l.bf16 %v618
      %v620 = vunpack.c.h.bf16 %v618
      %s621 = smul.addr %s196, 8
      %v622 = vlaneseq
      %v623 = vshrl.u32 %v622, 7
      %v624 = vstv %s621
      %v625 = vadd.s32 %v623, %v624
      %vm626 = vcmp.lt.s32.totalorder %v625, 50
      %v627 = vsel %vm626, %v619, %v10
      %s628 = scalar_lea.vmem [#allocation7], 68
      %v629 = vpack.c.bf16 0.0, %v627
      %631 = vst [vmem:[%s628] sm:$0xf] %v629
      %s632 = scalar_lea.vmem %s195, 120
      %v633 = vld [vmem:[%s632] sm:$0xf]
      %v634 = vunpack.c.l.bf16 %v633
      %v635 = vunpack.c.h.bf16 %v633
      %s636 = sadd.s32 %s196, 1
      %s637 = smul.addr %s636, 8
      %v638 = vlaneseq
      %v639 = vshrl.u32 %v638, 7
      %v640 = vstv %s637
      %v641 = vadd.s32 %v639, %v640
      %vm642 = vcmp.lt.s32.totalorder %v641, 50
      %v643 = vsel %vm642, %v634, %v10
      %s644 = scalar_lea.vmem [#allocation7], 72
      %v645 = vpack.c.bf16 0.0, %v643
      %647 = vst [vmem:[%s644] sm:$0xf] %v645
      %s648 = scalar_lea.vmem %s195, 124
      %v649 = vld [vmem:[%s648] sm:$0xf]
      %v650 = vunpack.c.l.bf16 %v649
      %v651 = vunpack.c.h.bf16 %v649
      %s652 = sadd.s32 %s196, 1
      %s653 = smul.addr %s652, 8
      %v654 = vlaneseq
      %v655 = vshrl.u32 %v654, 7
      %v656 = vstv %s653
      %v657 = vadd.s32 %v655, %v656
      %vm658 = vcmp.lt.s32.totalorder %v657, 50
      %v659 = vsel %vm658, %v650, %v10
      %s660 = scalar_lea.vmem [#allocation7], 76
      %v661 = vpack.c.bf16 0.0, %v659
      %663 = vst [vmem:[%s660] sm:$0xf] %v661
      %s664 = scalar_lea.vmem %s195, 128
      %s665 = sadd.s32 %s196, 2
      %s666 = ssub.s32 6, %s665
      %p667 = scmp.lt.s32.totalorder %s666, 0
      %s668 = scalar_select %p667, 0, 255
      %s669 = sshrl.u32 %s668, 1
      %s670 = sor.u32 %s668, %s669
      %s671 = sand.u32 %s670, 85
      %s672 = sshrl.u32 %s671, 1
      %s673 = sor.u32 %s671, %s672
      %s674 = sand.u32 51, %s673
      %s675 = sshrl.u32 %s674, 2
      %s676 = sor.u32 %s674, %s675
      %s677 = sand.u32 15, %s676
      %v678 = vld [vmem:[%s664] sm:%s677]
      %v679 = vunpack.c.l.bf16 %v678
      %v680 = vunpack.c.h.bf16 %v678
      %s681 = sadd.s32 %s196, 2
      %s682 = ssub.s32 6, %s681
      %v683 = vstv %s682
      %vm684 = vcmp.lt.s32.totalorder %v683, 0
      %v685 = vsel %vm684, %v10, %v679
      %s686 = sadd.s32 %s196, 2
      %s687 = smul.addr %s686, 8
      %v688 = vlaneseq
      %v689 = vshrl.u32 %v688, 7
      %v690 = vstv %s687
      %v691 = vadd.s32 %v689, %v690
      %vm692 = vcmp.lt.s32.totalorder %v691, 50
      %v693 = vsel %vm692, %v685, %v10
      %s694 = scalar_lea.vmem [#allocation7], 80
      %v695 = vpack.c.bf16 0.0, %v693
      %697 = vst [vmem:[%s694] sm:$0xf] %v695
      %s698 = scalar_lea.vmem %s195, 132
      %s699 = sadd.s32 %s196, 2
      %s700 = ssub.s32 6, %s699
      %p701 = scmp.lt.s32.totalorder %s700, 0
      %s702 = scalar_select %p701, 0, 255
      %s703 = sshrl.u32 %s702, 1
      %s704 = sor.u32 %s702, %s703
      %s705 = sand.u32 %s704, 85
      %s706 = sshrl.u32 %s705, 1
      %s707 = sor.u32 %s705, %s706
      %s708 = sand.u32 51, %s707
      %s709 = sshrl.u32 %s708, 2
      %s710 = sor.u32 %s708, %s709
      %s711 = sand.u32 15, %s710
      %v712 = vld [vmem:[%s698] sm:%s711]
      %v713 = vunpack.c.l.bf16 %v712
      %v714 = vunpack.c.h.bf16 %v712
      %s715 = sadd.s32 %s196, 2
      %s716 = ssub.s32 6, %s715
      %v717 = vstv %s716
      %vm718 = vcmp.lt.s32.totalorder %v717, 0
      %v719 = vsel %vm718, %v10, %v713
      %s720 = sadd.s32 %s196, 2
      %s721 = smul.addr %s720, 8
      %v722 = vlaneseq
      %v723 = vshrl.u32 %v722, 7
      %v724 = vstv %s721
      %v725 = vadd.s32 %v723, %v724
      %vm726 = vcmp.lt.s32.totalorder %v725, 50
      %v727 = vsel %vm726, %v719, %v10
      %s728 = scalar_lea.vmem [#allocation7], 84
      %v729 = vpack.c.bf16 0.0, %v727
      %731 = vst [vmem:[%s728] sm:$0xf] %v729
      %s732 = scalar_lea.vmem %s195, 136
      %s733 = sadd.s32 %s196, 3
      %s734 = ssub.s32 6, %s733
      %p735 = scmp.lt.s32.totalorder %s734, 0
      %s736 = scalar_select %p735, 0, 255
      %s737 = sshrl.u32 %s736, 1
      %s738 = sor.u32 %s736, %s737
      %s739 = sand.u32 %s738, 85
      %s740 = sshrl.u32 %s739, 1
      %s741 = sor.u32 %s739, %s740
      %s742 = sand.u32 51, %s741
      %s743 = sshrl.u32 %s742, 2
      %s744 = sor.u32 %s742, %s743
      %s745 = sand.u32 15, %s744
      %v746 = vld [vmem:[%s732] sm:%s745]
      %v747 = vunpack.c.l.bf16 %v746
      %v748 = vunpack.c.h.bf16 %v746
      %s749 = sadd.s32 %s196, 3
      %s750 = ssub.s32 6, %s749
      %v751 = vstv %s750
      %vm752 = vcmp.lt.s32.totalorder %v751, 0
      %v753 = vsel %vm752, %v10, %v747
      %s754 = sadd.s32 %s196, 3
      %s755 = smul.addr %s754, 8
      %v756 = vlaneseq
      %v757 = vshrl.u32 %v756, 7
      %v758 = vstv %s755
      %v759 = vadd.s32 %v757, %v758
      %vm760 = vcmp.lt.s32.totalorder %v759, 50
      %v761 = vsel %vm760, %v753, %v10
      %s762 = scalar_lea.vmem [#allocation7], 88
      %v763 = vpack.c.bf16 0.0, %v761
      %765 = vst [vmem:[%s762] sm:$0xf] %v763
      %s766 = scalar_lea.vmem %s195, 140
      %s767 = sadd.s32 %s196, 3
      %s768 = ssub.s32 6, %s767
      %p769 = scmp.lt.s32.totalorder %s768, 0
      %s770 = scalar_select %p769, 0, 255
      %s771 = sshrl.u32 %s770, 1
      %s772 = sor.u32 %s770, %s771
      %s773 = sand.u32 %s772, 85
      %s774 = sshrl.u32 %s773, 1
      %s775 = sor.u32 %s773, %s774
      %s776 = sand.u32 51, %s775
      %s777 = sshrl.u32 %s776, 2
      %s778 = sor.u32 %s776, %s777
      %s779 = sand.u32 15, %s778
      %v780 = vld [vmem:[%s766] sm:%s779]
      %v781 = vunpack.c.l.bf16 %v780
      %v782 = vunpack.c.h.bf16 %v780
      %s783 = sadd.s32 %s196, 3
      %s784 = ssub.s32 6, %s783
      %v785 = vstv %s784
      %vm786 = vcmp.lt.s32.totalorder %v785, 0
      %v787 = vsel %vm786, %v10, %v781
      %s788 = sadd.s32 %s196, 3
      %s789 = smul.addr %s788, 8
      %v790 = vlaneseq
      %v791 = vshrl.u32 %v790, 7
      %v792 = vstv %s789
      %v793 = vadd.s32 %v791, %v792
      %vm794 = vcmp.lt.s32.totalorder %v793, 50
      %v795 = vsel %vm794, %v787, %v10
      %s796 = scalar_lea.vmem [#allocation7], 92
      %v797 = vpack.c.bf16 0.0, %v795
      %799 = vst [vmem:[%s796] sm:$0xf] %v797
      %s800 = scalar_lea.vmem %s195, 168
      %v801 = vld [vmem:[%s800] sm:$0xf]
      %v802 = vunpack.c.l.bf16 %v801
      %v803 = vunpack.c.h.bf16 %v801
      %s804 = smul.addr %s196, 8
      %v805 = vlaneseq
      %v806 = vshrl.u32 %v805, 7
      %v807 = vstv %s804
      %v808 = vadd.s32 %v806, %v807
      %vm809 = vcmp.lt.s32.totalorder %v808, 50
      %v810 = vsel %vm809, %v802, %v10
      %s811 = scalar_lea.vmem [#allocation7], 96
      %v812 = vpack.c.bf16 0.0, %v810
      %814 = vst [vmem:[%s811] sm:$0xf] %v812
      %s815 = scalar_lea.vmem %s195, 172
      %v816 = vld [vmem:[%s815] sm:$0xf]
      %v817 = vunpack.c.l.bf16 %v816
      %v818 = vunpack.c.h.bf16 %v816
      %s819 = smul.addr %s196, 8
      %v820 = vlaneseq
      %v821 = vshrl.u32 %v820, 7
      %v822 = vstv %s819
      %v823 = vadd.s32 %v821, %v822
      %vm824 = vcmp.lt.s32.totalorder %v823, 50
      %v825 = vsel %vm824, %v817, %v10
      %s826 = scalar_lea.vmem [#allocation7], 100
      %v827 = vpack.c.bf16 0.0, %v825
      %829 = vst [vmem:[%s826] sm:$0xf] %v827
      %s830 = scalar_lea.vmem %s195, 176
      %v831 = vld [vmem:[%s830] sm:$0xf]
      %v832 = vunpack.c.l.bf16 %v831
      %v833 = vunpack.c.h.bf16 %v831
      %s834 = sadd.s32 %s196, 1
      %s835 = smul.addr %s834, 8
      %v836 = vlaneseq
      %v837 = vshrl.u32 %v836, 7
      %v838 = vstv %s835
      %v839 = vadd.s32 %v837, %v838
      %vm840 = vcmp.lt.s32.totalorder %v839, 50
      %v841 = vsel %vm840, %v832, %v10
      %s842 = scalar_lea.vmem [#allocation7], 104
      %v843 = vpack.c.bf16 0.0, %v841
      %845 = vst [vmem:[%s842] sm:$0xf] %v843
      %s846 = scalar_lea.vmem %s195, 180
      %v847 = vld [vmem:[%s846] sm:$0xf]
      %v848 = vunpack.c.l.bf16 %v847
      %v849 = vunpack.c.h.bf16 %v847
      %s850 = sadd.s32 %s196, 1
      %s851 = smul.addr %s850, 8
      %v852 = vlaneseq
      %v853 = vshrl.u32 %v852, 7
      %v854 = vstv %s851
      %v855 = vadd.s32 %v853, %v854
      %vm856 = vcmp.lt.s32.totalorder %v855, 50
      %v857 = vsel %vm856, %v848, %v10
      %s858 = scalar_lea.vmem [#allocation7], 108
      %v859 = vpack.c.bf16 0.0, %v857
      %861 = vst [vmem:[%s858] sm:$0xf] %v859
      %s862 = scalar_lea.vmem %s195, 184
      %s863 = sadd.s32 %s196, 2
      %s864 = ssub.s32 6, %s863
      %p865 = scmp.lt.s32.totalorder %s864, 0
      %s866 = scalar_select %p865, 0, 255
      %s867 = sshrl.u32 %s866, 1
      %s868 = sor.u32 %s866, %s867
      %s869 = sand.u32 %s868, 85
      %s870 = sshrl.u32 %s869, 1
      %s871 = sor.u32 %s869, %s870
      %s872 = sand.u32 51, %s871
      %s873 = sshrl.u32 %s872, 2
      %s874 = sor.u32 %s872, %s873
      %s875 = sand.u32 15, %s874
      %v876 = vld [vmem:[%s862] sm:%s875]
      %v877 = vunpack.c.l.bf16 %v876
      %v878 = vunpack.c.h.bf16 %v876
      %s879 = sadd.s32 %s196, 2
      %s880 = ssub.s32 6, %s879
      %v881 = vstv %s880
      %vm882 = vcmp.lt.s32.totalorder %v881, 0
      %v883 = vsel %vm882, %v10, %v877
      %s884 = sadd.s32 %s196, 2
      %s885 = smul.addr %s884, 8
      %v886 = vlaneseq
      %v887 = vshrl.u32 %v886, 7
      %v888 = vstv %s885
      %v889 = vadd.s32 %v887, %v888
      %vm890 = vcmp.lt.s32.totalorder %v889, 50
      %v891 = vsel %vm890, %v883, %v10
      %s892 = scalar_lea.vmem [#allocation7], 112
      %v893 = vpack.c.bf16 0.0, %v891
      %895 = vst [vmem:[%s892] sm:$0xf] %v893
      %s896 = scalar_lea.vmem %s195, 188
      %s897 = sadd.s32 %s196, 2
      %s898 = ssub.s32 6, %s897
      %p899 = scmp.lt.s32.totalorder %s898, 0
      %s900 = scalar_select %p899, 0, 255
      %s901 = sshrl.u32 %s900, 1
      %s902 = sor.u32 %s900, %s901
      %s903 = sand.u32 %s902, 85
      %s904 = sshrl.u32 %s903, 1
      %s905 = sor.u32 %s903, %s904
      %s906 = sand.u32 51, %s905
      %s907 = sshrl.u32 %s906, 2
      %s908 = sor.u32 %s906, %s907
      %s909 = sand.u32 15, %s908
      %v910 = vld [vmem:[%s896] sm:%s909]
      %v911 = vunpack.c.l.bf16 %v910
      %v912 = vunpack.c.h.bf16 %v910
      %s913 = sadd.s32 %s196, 2
      %s914 = ssub.s32 6, %s913
      %v915 = vstv %s914
      %vm916 = vcmp.lt.s32.totalorder %v915, 0
      %v917 = vsel %vm916, %v10, %v911
      %s918 = sadd.s32 %s196, 2
      %s919 = smul.addr %s918, 8
      %v920 = vlaneseq
      %v921 = vshrl.u32 %v920, 7
      %v922 = vstv %s919
      %v923 = vadd.s32 %v921, %v922
      %vm924 = vcmp.lt.s32.totalorder %v923, 50
      %v925 = vsel %vm924, %v917, %v10
      %s926 = scalar_lea.vmem [#allocation7], 116
      %v927 = vpack.c.bf16 0.0, %v925
      %929 = vst [vmem:[%s926] sm:$0xf] %v927
      %s930 = scalar_lea.vmem %s195, 192
      %s931 = sadd.s32 %s196, 3
      %s932 = ssub.s32 6, %s931
      %p933 = scmp.lt.s32.totalorder %s932, 0
      %s934 = scalar_select %p933, 0, 255
      %s935 = sshrl.u32 %s934, 1
      %s936 = sor.u32 %s934, %s935
      %s937 = sand.u32 %s936, 85
      %s938 = sshrl.u32 %s937, 1
      %s939 = sor.u32 %s937, %s938
      %s940 = sand.u32 51, %s939
      %s941 = sshrl.u32 %s940, 2
      %s942 = sor.u32 %s940, %s941
      %s943 = sand.u32 15, %s942
      %v944 = vld [vmem:[%s930] sm:%s943]
      %v945 = vunpack.c.l.bf16 %v944
      %v946 = vunpack.c.h.bf16 %v944
      %s947 = sadd.s32 %s196, 3
      %s948 = ssub.s32 6, %s947
      %v949 = vstv %s948
      %vm950 = vcmp.lt.s32.totalorder %v949, 0
      %v951 = vsel %vm950, %v10, %v945
      %s952 = sadd.s32 %s196, 3
      %s953 = smul.addr %s952, 8
      %v954 = vlaneseq
      %v955 = vshrl.u32 %v954, 7
      %v956 = vstv %s953
      %v957 = vadd.s32 %v955, %v956
      %vm958 = vcmp.lt.s32.totalorder %v957, 50
      %v959 = vsel %vm958, %v951, %v10
      %s960 = scalar_lea.vmem [#allocation7], 120
      %v961 = vpack.c.bf16 0.0, %v959
      %963 = vst [vmem:[%s960] sm:$0xf] %v961
      %s964 = scalar_lea.vmem %s195, 196
      %s965 = sadd.s32 %s196, 3
      %s966 = ssub.s32 6, %s965
      %p967 = scmp.lt.s32.totalorder %s966, 0
      %s968 = scalar_select %p967, 0, 255
      %s969 = sshrl.u32 %s968, 1
      %s970 = sor.u32 %s968, %s969
      %s971 = sand.u32 %s970, 85
      %s972 = sshrl.u32 %s971, 1
      %s973 = sor.u32 %s971, %s972
      %s974 = sand.u32 51, %s973
      %s975 = sshrl.u32 %s974, 2
      %s976 = sor.u32 %s974, %s975
      %s977 = sand.u32 15, %s976
      %v978 = vld [vmem:[%s964] sm:%s977]
      %v979 = vunpack.c.l.bf16 %v978
      %v980 = vunpack.c.h.bf16 %v978
      %s981 = sadd.s32 %s196, 3
      %s982 = ssub.s32 6, %s981
      %v983 = vstv %s982
      %vm984 = vcmp.lt.s32.totalorder %v983, 0
      %v985 = vsel %vm984, %v10, %v979
      %s986 = sadd.s32 %s196, 3
      %s987 = smul.addr %s986, 8
      %v988 = vlaneseq
      %v989 = vshrl.u32 %v988, 7
      %v990 = vstv %s987
      %v991 = vadd.s32 %v989, %v990
      %vm992 = vcmp.lt.s32.totalorder %v991, 50
      %v993 = vsel %vm992, %v985, %v10
      %s994 = scalar_lea.vmem [#allocation7], 124
      %v995 = vpack.c.bf16 0.0, %v993
      %997 = vst [vmem:[%s994] sm:$0xf] %v995
      %v999 = vld [vmem:[%s0] sm:$0xf]
      %v1000 = vld [vmem:[%s0 + $0x4] sm:$0xf]
      %v1001 = vld [vmem:[%s0 + $0x8] sm:$0xf]
      %v1002 = vld [vmem:[%s0 + $0xc] sm:$0xf]
      %v1003 = vld [vmem:[%s0 + $0x10] sm:$0xf]
      %v1004 = vld [vmem:[%s0 + $0x14] sm:$0xf]
      %v1005 = vld [vmem:[%s0 + $0x18] sm:$0xf]
      %v1006 = vld [vmem:[%s0 + $0x1c] sm:$0xf]
      %v1007 = vld [vmem:[%s0 + $0x20] sm:$0xf]
      %v1008 = vld [vmem:[%s0 + $0x24] sm:$0xf]
      %v1009 = vld [vmem:[%s0 + $0x28] sm:$0xf]
      %v1010 = vld [vmem:[%s0 + $0x2c] sm:$0xf]
      %v1011 = vld [vmem:[%s0 + $0x30] sm:$0xf]
      %v1012 = vld [vmem:[%s0 + $0x34] sm:$0xf]
      %v1013 = vld [vmem:[%s0 + $0x38] sm:$0xf]
      %v1014 = vld [vmem:[%s0 + $0x3c] sm:$0xf]
      %v1015 = vld [vmem:[%s0 + $0x40] sm:$0xf]
      %v1016 = vld [vmem:[%s0 + $0x44] sm:$0xf]
      %v1017 = vld [vmem:[%s0 + $0x48] sm:$0xf]
      %v1018 = vld [vmem:[%s0 + $0x4c] sm:$0xf]
      %v1019 = vld [vmem:[%s0 + $0x50] sm:$0xf]
      %v1020 = vld [vmem:[%s0 + $0x54] sm:$0xf]
      %v1021 = vld [vmem:[%s0 + $0x58] sm:$0xf]
      %v1022 = vld [vmem:[%s0 + $0x5c] sm:$0xf]
      %v1023 = vld [vmem:[%s0 + $0x60] sm:$0xf]
      %v1024 = vld [vmem:[%s0 + $0x64] sm:$0xf]
      %v1025 = vld [vmem:[%s0 + $0x68] sm:$0xf]
      %v1026 = vld [vmem:[%s0 + $0x6c] sm:$0xf]
      %v1027 = vld [vmem:[%s0 + $0x70] sm:$0xf]
      %v1028 = vld [vmem:[%s0 + $0x74] sm:$0xf]
      %v1029 = vld [vmem:[%s0 + $0x78] sm:$0xf]
      %v1030 = vld [vmem:[%s0 + $0x7c] sm:$0xf]
      %v1031 = vld [vmem:[#allocation7] sm:$0xff]
      %v1032 = vld [vmem:[#allocation7 + $0x8] sm:$0xff]
      %v1033 = vld [vmem:[#allocation7 + $0x10] sm:$0xff]
      %v1034 = vld [vmem:[#allocation7 + $0x18] sm:$0xff]
      %v1039 = vunpack.c.l.b16 %v1031
      %v1040 = vunpack.c.h.b16 %v1031
      %v1041 = vunpack.c.l.b16 %v1032
      %v1042 = vunpack.c.h.b16 %v1032
      %v1043 = vunpack.c.l.b16 %v1033
      %v1044 = vunpack.c.h.b16 %v1033
      %v1045 = vunpack.c.l.b16 %v1034
      %v1046 = vunpack.c.h.b16 %v1034
      %v1047 = vpack.c.b16 %v1041, %v1039
      %v1048 = vpack.c.b16 %v1042, %v1040
      %v1049 = vpack.c.b16 %v1045, %v1043
      %v1050 = vpack.c.b16 %v1046, %v1044
      %v1087 = vunpack.c.l.b16 %v999
      %v1088 = vunpack.c.l.b16 %v1000
      %v1089 = vunpack.c.l.b16 %v1001
      %v1090 = vunpack.c.l.b16 %v1002
      %v1091 = vunpack.c.l.b16 %v1003
      %v1092 = vunpack.c.l.b16 %v1004
      %v1093 = vunpack.c.l.b16 %v1005
      %v1094 = vunpack.c.l.b16 %v1006
      %v1095 = vunpack.c.l.b16 %v1007
      %v1096 = vunpack.c.l.b16 %v1008
      %v1097 = vunpack.c.l.b16 %v1009
      %v1098 = vunpack.c.l.b16 %v1010
      %v1099 = vunpack.c.l.b16 %v1011
      %v1100 = vunpack.c.l.b16 %v1012
      %v1101 = vunpack.c.l.b16 %v1013
      %v1102 = vunpack.c.l.b16 %v1014
      %v1103 = vunpack.c.l.b16 %v1015
      %v1104 = vunpack.c.l.b16 %v1016
      %v1105 = vunpack.c.l.b16 %v1017
      %v1106 = vunpack.c.l.b16 %v1018
      %v1107 = vunpack.c.l.b16 %v1019
      %v1108 = vunpack.c.l.b16 %v1020
      %v1109 = vunpack.c.l.b16 %v1021
      %v1110 = vunpack.c.l.b16 %v1022
      %v1111 = vunpack.c.l.b16 %v1023
      %v1112 = vunpack.c.l.b16 %v1024
      %v1113 = vunpack.c.l.b16 %v1025
      %v1114 = vunpack.c.l.b16 %v1026
      %v1115 = vunpack.c.l.b16 %v1027
      %v1116 = vunpack.c.l.b16 %v1028
      %v1117 = vunpack.c.l.b16 %v1029
      %v1118 = vunpack.c.l.b16 %v1030
      %v1119 = vpack.c.b16 %v1088, %v1087
      %v1120 = vpack.c.b16 %v1090, %v1089
      %v1121 = vpack.c.b16 %v1092, %v1091
      %v1122 = vpack.c.b16 %v1094, %v1093
      %v1123 = vpack.c.b16 %v1096, %v1095
      %v1124 = vpack.c.b16 %v1098, %v1097
      %v1125 = vpack.c.b16 %v1100, %v1099
      %v1126 = vpack.c.b16 %v1102, %v1101
      %v1127 = vpack.c.b16 %v1104, %v1103
      %v1128 = vpack.c.b16 %v1106, %v1105
      %v1129 = vpack.c.b16 %v1108, %v1107
      %v1130 = vpack.c.b16 %v1110, %v1109
      %v1131 = vpack.c.b16 %v1112, %v1111
      %v1132 = vpack.c.b16 %v1114, %v1113
      %v1133 = vpack.c.b16 %v1116, %v1115
      %v1134 = vpack.c.b16 %v1118, %v1117
      %1151 = vmatprep.subr.bf16.mxu0 0
      %1152 = vmatpush1.bf16.msra.mxu0 %v1119
      %1153 = vmatprep.subr.bf16.mxu0 0
      %1154 = vmatpush1.bf16.msra.mxu0 %v1120
      %1155 = vmatprep.subr.bf16.mxu0 0
      %1156 = vmatpush1.bf16.msra.mxu0 %v1121
      %1157 = vmatprep.subr.bf16.mxu0 0
      %1158 = vmatpush1.bf16.msra.mxu0 %v1122
      %1159 = vmatprep.subr.bf16.mxu0 0
      %1160 = vmatpush1.bf16.msra.mxu0 %v1123
      %1161 = vmatprep.subr.bf16.mxu0 0
      %1162 = vmatpush1.bf16.msra.mxu0 %v1124
      %1163 = vmatprep.subr.bf16.mxu0 0
      %1164 = vmatpush1.bf16.msra.mxu0 %v1125
      %1165 = vmatprep.subr.bf16.mxu0 0
      %1166 = vmatpush1.bf16.msra.mxu0 %v1126
      %1167 = vmatprep.subr.bf16.mxu0 0
      %1168 = vmatpush1.bf16.msra.mxu0 %v1127
      %1169 = vmatprep.subr.bf16.mxu0 0
      %1170 = vmatpush1.bf16.msra.mxu0 %v1128
      %1171 = vmatprep.subr.bf16.mxu0 0
      %1172 = vmatpush1.bf16.msra.mxu0 %v1129
      %1173 = vmatprep.subr.bf16.mxu0 0
      %1174 = vmatpush1.bf16.msra.mxu0 %v1130
      %1175 = vmatprep.subr.bf16.mxu0 0
      %1176 = vmatpush1.bf16.msra.mxu0 %v1131
      %1177 = vmatprep.subr.bf16.mxu0 0
      %1178 = vmatpush1.bf16.msra.mxu0 %v1132
      %1179 = vmatprep.subr.bf16.mxu0 0
      %1180 = vmatpush1.bf16.msra.mxu0 %v1133
      %1181 = vmatprep.subr.bf16.mxu0 0
      %1182 = vmatpush1.bf16.msra.mxu0 %v1134
      %1183 = vmatprep.mubr.bf16.mxu0 %v1048
      %1184 = vmatmul.mubr.bf16.gmra.mrb[0].mxu0 %v1047
      %v1185 = vpop.f32.mrb[0].mxu0
      %v1186 = vadd.f32 0.0, %v1185
      %v1187 = vpop.f32.mrb[0].mxu0
      %v1188 = vpop.f32.mrb[0].mxu0
      %v1189 = vadd.f32 0.0, %v1188
      %v1190 = vpop.f32.mrb[0].mxu0
      %1191 = vmatprep.mubr.bf16.mxu0 %v1050
      %1192 = vmatmul.mubr.bf16.gmra.mrb[0].mxu0 %v1049
      %v1193 = vpop.f32.mrb[0].mxu0
      %v1194 = vadd.f32 0.0, %v1193
      %v1195 = vpop.f32.mrb[0].mxu0
      %v1196 = vpop.f32.mrb[0].mxu0
      %v1197 = vadd.f32 0.0, %v1196
      %v1198 = vpop.f32.mrb[0].mxu0
      %1199 = vdwg.mxu0
      %s1200 = scalar_lea.vmem [#allocation7], 32
      %v1201 = vld [vmem:[%s1200] sm:$0xff]
      %v1202 = vld [vmem:[%s1200 + $0x8] sm:$0xff]
      %v1203 = vld [vmem:[%s1200 + $0x10] sm:$0xff]
      %v1204 = vld [vmem:[%s1200 + $0x18] sm:$0xff]
      %v1209 = vunpack.c.l.b16 %v1201
      %v1210 = vunpack.c.h.b16 %v1201
      %v1211 = vunpack.c.l.b16 %v1202
      %v1212 = vunpack.c.h.b16 %v1202
      %v1213 = vunpack.c.l.b16 %v1203
      %v1214 = vunpack.c.h.b16 %v1203
      %v1215 = vunpack.c.l.b16 %v1204
      %v1216 = vunpack.c.h.b16 %v1204
      %v1217 = vpack.c.b16 %v1211, %v1209
      %v1218 = vpack.c.b16 %v1212, %v1210
      %v1219 = vpack.c.b16 %v1215, %v1213
      %v1220 = vpack.c.b16 %v1216, %v1214
      %1225 = vmatprep.subr.bf16.mxu0 0
      %1226 = vmatpush1.bf16.msra.mxu0 %v1119
      %1227 = vmatprep.subr.bf16.mxu0 0
      %1228 = vmatpush1.bf16.msra.mxu0 %v1120
      %1229 = vmatprep.subr.bf16.mxu0 0
      %1230 = vmatpush1.bf16.msra.mxu0 %v1121
      %1231 = vmatprep.subr.bf16.mxu0 0
      %1232 = vmatpush1.bf16.msra.mxu0 %v1122
      %1233 = vmatprep.subr.bf16.mxu0 0
      %1234 = vmatpush1.bf16.msra.mxu0 %v1123
      %1235 = vmatprep.subr.bf16.mxu0 0
      %1236 = vmatpush1.bf16.msra.mxu0 %v1124
      %1237 = vmatprep.subr.bf16.mxu0 0
      %1238 = vmatpush1.bf16.msra.mxu0 %v1125
      %1239 = vmatprep.subr.bf16.mxu0 0
      %1240 = vmatpush1.bf16.msra.mxu0 %v1126
      %1241 = vmatprep.subr.bf16.mxu0 0
      %1242 = vmatpush1.bf16.msra.mxu0 %v1127
      %1243 = vmatprep.subr.bf16.mxu0 0
      %1244 = vmatpush1.bf16.msra.mxu0 %v1128
      %1245 = vmatprep.subr.bf16.mxu0 0
      %1246 = vmatpush1.bf16.msra.mxu0 %v1129
      %1247 = vmatprep.subr.bf16.mxu0 0
      %1248 = vmatpush1.bf16.msra.mxu0 %v1130
      %1249 = vmatprep.subr.bf16.mxu0 0
      %1250 = vmatpush1.bf16.msra.mxu0 %v1131
      %1251 = vmatprep.subr.bf16.mxu0 0
      %1252 = vmatpush1.bf16.msra.mxu0 %v1132
      %1253 = vmatprep.subr.bf16.mxu0 0
      %1254 = vmatpush1.bf16.msra.mxu0 %v1133
      %1255 = vmatprep.subr.bf16.mxu0 0
      %1256 = vmatpush1.bf16.msra.mxu0 %v1134
      %1257 = vmatprep.mubr.bf16.mxu0 %v1218
      %1258 = vmatmul.mubr.bf16.gmra.mrb[0].mxu0 %v1217
      %v1259 = vpop.f32.mrb[0].mxu0
      %v1260 = vadd.f32 0.0, %v1259
      %v1261 = vpop.f32.mrb[0].mxu0
      %v1262 = vpop.f32.mrb[0].mxu0
      %v1263 = vadd.f32 0.0, %v1262
      %v1264 = vpop.f32.mrb[0].mxu0
      %1265 = vmatprep.mubr.bf16.mxu0 %v1220
      %1266 = vmatmul.mubr.bf16.gmra.mrb[0].mxu0 %v1219
      %v1267 = vpop.f32.mrb[0].mxu0
      %v1268 = vadd.f32 0.0, %v1267
      %v1269 = vpop.f32.mrb[0].mxu0
      %v1270 = vpop.f32.mrb[0].mxu0
      %v1271 = vadd.f32 0.0, %v1270
      %v1272 = vpop.f32.mrb[0].mxu0
      %1273 = vdwg.mxu0
      %s1274 = scalar_lea.vmem [#allocation7], 64
      %v1275 = vld [vmem:[%s1274] sm:$0xff]
      %v1276 = vld [vmem:[%s1274 + $0x8] sm:$0xff]
      %v1277 = vld [vmem:[%s1274 + $0x10] sm:$0xff]
      %v1278 = vld [vmem:[%s1274 + $0x18] sm:$0xff]
      %v1283 = vunpack.c.l.b16 %v1275
      %v1284 = vunpack.c.h.b16 %v1275
      %v1285 = vunpack.c.l.b16 %v1276
      %v1286 = vunpack.c.h.b16 %v1276
      %v1287 = vunpack.c.l.b16 %v1277
      %v1288 = vunpack.c.h.b16 %v1277
      %v1289 = vunpack.c.l.b16 %v1278
      %v1290 = vunpack.c.h.b16 %v1278
      %v1291 = vpack.c.b16 %v1285, %v1283
      %v1292 = vpack.c.b16 %v1286, %v1284
      %v1293 = vpack.c.b16 %v1289, %v1287
      %v1294 = vpack.c.b16 %v1290, %v1288
      %1299 = vmatprep.subr.bf16.mxu0 0
      %1300 = vmatpush1.bf16.msra.mxu0 %v1119
      %1301 = vmatprep.subr.bf16.mxu0 0
      %1302 = vmatpush1.bf16.msra.mxu0 %v1120
      %1303 = vmatprep.subr.bf16.mxu0 0
      %1304 = vmatpush1.bf16.msra.mxu0 %v1121
      %1305 = vmatprep.subr.bf16.mxu0 0
      %1306 = vmatpush1.bf16.msra.mxu0 %v1122
      %1307 = vmatprep.subr.bf16.mxu0 0
      %1308 = vmatpush1.bf16.msra.mxu0 %v1123
      %1309 = vmatprep.subr.bf16.mxu0 0
      %1310 = vmatpush1.bf16.msra.mxu0 %v1124
      %1311 = vmatprep.subr.bf16.mxu0 0
      %1312 = vmatpush1.bf16.msra.mxu0 %v1125
      %1313 = vmatprep.subr.bf16.mxu0 0
      %1314 = vmatpush1.bf16.msra.mxu0 %v1126
      %1315 = vmatprep.subr.bf16.mxu0 0
      %1316 = vmatpush1.bf16.msra.mxu0 %v1127
      %1317 = vmatprep.subr.bf16.mxu0 0
      %1318 = vmatpush1.bf16.msra.mxu0 %v1128
      %1319 = vmatprep.subr.bf16.mxu0 0
      %1320 = vmatpush1.bf16.msra.mxu0 %v1129
      %1321 = vmatprep.subr.bf16.mxu0 0
      %1322 = vmatpush1.bf16.msra.mxu0 %v1130
      %1323 = vmatprep.subr.bf16.mxu0 0
      %1324 = vmatpush1.bf16.msra.mxu0 %v1131
      %1325 = vmatprep.subr.bf16.mxu0 0
      %1326 = vmatpush1.bf16.msra.mxu0 %v1132
      %1327 = vmatprep.subr.bf16.mxu0 0
      %1328 = vmatpush1.bf16.msra.mxu0 %v1133
      %1329 = vmatprep.subr.bf16.mxu0 0
      %1330 = vmatpush1.bf16.msra.mxu0 %v1134
      %1331 = vmatprep.mubr.bf16.mxu0 %v1292
      %1332 = vmatmul.mubr.bf16.gmra.mrb[0].mxu0 %v1291
      %v1333 = vpop.f32.mrb[0].mxu0
      %v1334 = vadd.f32 0.0, %v1333
      %v1335 = vpop.f32.mrb[0].mxu0
      %v1336 = vpop.f32.mrb[0].mxu0
      %v1337 = vadd.f32 0.0, %v1336
      %v1338 = vpop.f32.mrb[0].mxu0
      %1339 = vmatprep.mubr.bf16.mxu0 %v1294
      %1340 = vmatmul.mubr.bf16.gmra.mrb[0].mxu0 %v1293
      %v1341 = vpop.f32.mrb[0].mxu0
      %v1342 = vadd.f32 0.0, %v1341
      %v1343 = vpop.f32.mrb[0].mxu0
      %v1344 = vpop.f32.mrb[0].mxu0
      %v1345 = vadd.f32 0.0, %v1344
      %v1346 = vpop.f32.mrb[0].mxu0
      %1347 = vdwg.mxu0
      %s1348 = scalar_lea.vmem [#allocation7], 96
      %v1349 = vld [vmem:[%s1348] sm:$0xff]
      %v1350 = vld [vmem:[%s1348 + $0x8] sm:$0xff]
      %v1351 = vld [vmem:[%s1348 + $0x10] sm:$0xff]
      %v1352 = vld [vmem:[%s1348 + $0x18] sm:$0xff]
      %v1357 = vunpack.c.l.b16 %v1349
      %v1358 = vunpack.c.h.b16 %v1349
      %v1359 = vunpack.c.l.b16 %v1350
      %v1360 = vunpack.c.h.b16 %v1350
      %v1361 = vunpack.c.l.b16 %v1351
      %v1362 = vunpack.c.h.b16 %v1351
      %v1363 = vunpack.c.l.b16 %v1352
      %v1364 = vunpack.c.h.b16 %v1352
      %v1365 = vpack.c.b16 %v1359, %v1357
      %v1366 = vpack.c.b16 %v1360, %v1358
      %v1367 = vpack.c.b16 %v1363, %v1361
      %v1368 = vpack.c.b16 %v1364, %v1362
      %1373 = vmatprep.subr.bf16.mxu0 0
      %1374 = vmatpush1.bf16.msra.mxu0 %v1119
      %1375 = vmatprep.subr.bf16.mxu0 0
      %1376 = vmatpush1.bf16.msra.mxu0 %v1120
      %1377 = vmatprep.subr.bf16.mxu0 0
      %1378 = vmatpush1.bf16.msra.mxu0 %v1121
      %1379 = vmatprep.subr.bf16.mxu0 0
      %1380 = vmatpush1.bf16.msra.mxu0 %v1122
      %1381 = vmatprep.subr.bf16.mxu0 0
      %1382 = vmatpush1.bf16.msra.mxu0 %v1123
      %1383 = vmatprep.subr.bf16.mxu0 0
      %1384 = vmatpush1.bf16.msra.mxu0 %v1124
      %1385 = vmatprep.subr.bf16.mxu0 0
      %1386 = vmatpush1.bf16.msra.mxu0 %v1125
      %1387 = vmatprep.subr.bf16.mxu0 0
      %1388 = vmatpush1.bf16.msra.mxu0 %v1126
      %1389 = vmatprep.subr.bf16.mxu0 0
      %1390 = vmatpush1.bf16.msra.mxu0 %v1127
      %1391 = vmatprep.subr.bf16.mxu0 0
      %1392 = vmatpush1.bf16.msra.mxu0 %v1128
      %1393 = vmatprep.subr.bf16.mxu0 0
      %1394 = vmatpush1.bf16.msra.mxu0 %v1129
      %1395 = vmatprep.subr.bf16.mxu0 0
      %1396 = vmatpush1.bf16.msra.mxu0 %v1130
      %1397 = vmatprep.subr.bf16.mxu0 0
      %1398 = vmatpush1.bf16.msra.mxu0 %v1131
      %1399 = vmatprep.subr.bf16.mxu0 0
      %1400 = vmatpush1.bf16.msra.mxu0 %v1132
      %1401 = vmatprep.subr.bf16.mxu0 0
      %1402 = vmatpush1.bf16.msra.mxu0 %v1133
      %1403 = vmatprep.subr.bf16.mxu0 0
      %1404 = vmatpush1.bf16.msra.mxu0 %v1134
      %1405 = vmatprep.mubr.bf16.mxu0 %v1366
      %1406 = vmatmul.mubr.bf16.gmra.mrb[0].mxu0 %v1365
      %v1407 = vpop.f32.mrb[0].mxu0
      %v1408 = vadd.f32 0.0, %v1407
      %v1409 = vpop.f32.mrb[0].mxu0
      %v1410 = vpop.f32.mrb[0].mxu0
      %v1411 = vadd.f32 0.0, %v1410
      %v1412 = vpop.f32.mrb[0].mxu0
      %1413 = vmatprep.mubr.bf16.mxu0 %v1368
      %1414 = vmatmul.mubr.bf16.gmra.mrb[0].mxu0 %v1367
      %v1415 = vpop.f32.mrb[0].mxu0
      %v1416 = vadd.f32 0.0, %v1415
      %v1417 = vpop.f32.mrb[0].mxu0
      %v1418 = vpop.f32.mrb[0].mxu0
      %v1419 = vadd.f32 0.0, %v1418
      %v1420 = vpop.f32.mrb[0].mxu0
      %1421 = vdwg.mxu0
      %v1422 = vmax.f32 %v1186, %v1260
      %v1423 = vmax.f32 %v1189, %v1263
      %v1424 = vmax.f32 %v1194, %v1268
      %v1425 = vmax.f32 %v1197, %v1271
      %v1426 = vmax.f32 %v1334, %v1408
      %v1427 = vmax.f32 %v1337, %v1411
      %v1428 = vmax.f32 %v1342, %v1416
      %v1429 = vmax.f32 %v1345, %v1419
      %v1430 = vmax.f32 %v1422, %v1426
      %v1431 = vmax.f32 %v1423, %v1427
      %v1432 = vmax.f32 %v1424, %v1428
      %v1433 = vmax.f32 %v1425, %v1429
      %v1434 = vld [vmem:[%s1] sm:$0x1]
      %v1436 = vlaneseq
      %v1437 = vshrl.u32 %v1436, 7
      %v1438 = vsub.s32 0, %v1437
      %v1439 = vrot.slane %v1434, %v1438
      %v1441 = vadd.f32 %v1430, %v1439
      %v1442 = vadd.f32 %v1431, %v1439
      %v1443 = vadd.f32 %v1432, %v1439
      %v1444 = vadd.f32 %v1433, %v1439
      %v1445 = vmax.f32 %v1441, 0.0
      %v1446 = vmax.f32 %v1442, 0.0
      %v1447 = vmax.f32 %v1443, 0.0
      %v1448 = vmax.f32 %v1444, 0.0
      %v1449 = vpack.c.bf16 %v1446, %v1445
      %v1450 = vpack.c.bf16 %v1448, %v1447
      %v1453 = vunpack.c.l.b16 %v1449
      %v1454 = vunpack.c.h.b16 %v1449
      %v1455 = vunpack.c.l.b16 %v1450
      %v1456 = vunpack.c.h.b16 %v1450
      %v1457 = vpack.c.b16 %v1453, %v1453
      %v1458 = vpack.c.b16 %v1454, %v1454
      %v1459 = vpack.c.b16 %v1455, %v1455
      %v1460 = vpack.c.b16 %v1456, %v1456
      %1465 = vst [vmem:[%s206] sm:$0xf] %v1457
      %1466 = vst [vmem:[%s206 + $0x4] sm:$0xf] %v1458
      %1467 = vst [vmem:[%s206 + $0x8] sm:$0xf] %v1459
      %1468 = vst [vmem:[%s206 + $0xc] sm:$0xf] %v1460
      %s1469 = smul.u32 4, %s20
      %p1470 = scmp.lt.s32.totalorder %s1469, 7
      %s1471 = scalar_select %p1470, %s1469, 7
      %s1472 = smul.addr %s1471, 4
      %s1473 = scalar_lea.vmem %s4, %s1472
      // Predicated region
      $region33: #{simple_cnn_header_forward.7} parent=31 // pred_check
        %p1474 = pneg %p106
      $region34: #{simple_cnn_header_forward.7} parent=31 // pred_check_branch
        %1476 = sbr.rel (%p1474) target = $region36
      $region35: #{simple_cnn_header_forward.7} parent=31 // pred_region
        %s1477 = smul.u32 4, %s20
      $region36: #{simple_cnn_header_forward.7} parent=31 // pred_fallthru
        _
    $region32: #{simple_cnn_header_forward.7} parent=5 // pred_fallthru
      _
    %p1478 = scmp.le.s32.totalorder 2, %s15
    // Predicated region
    $region37: #{simple_cnn_header_forward.7} parent=5 // pred_check
      %p1479 = pneg %p1478
    $region38: #{simple_cnn_header_forward.7} parent=5 // pred_check_branch
      %1481 = sbr.rel (%p1479) target = $region40
    $region39: #{simple_cnn_header_forward.7} parent=5 // pred_region
      %s1482 = ssub.s32 %s15, 2
      // Predicated region
      $region41: #{simple_cnn_header_forward.7} parent=39 // pred_check
        %p1483 = pneg %p112
      $region42: #{simple_cnn_header_forward.7} parent=39 // pred_check_branch
        %1485 = sbr.rel (%p1483) target = $region44
      $region43: #{simple_cnn_header_forward.7} parent=39 // pred_region
        %s1486 = smul.u32 4, %s21
        %p1487 = scmp.lt.s32.totalorder %s1486, 7
        %s1488 = scalar_select %p1487, %s1486, 7
        %s1489 = smul.addr %s1488, 4
        %s1490 = scalar_lea.vmem %s4, %s1489
      $region44: #{simple_cnn_header_forward.7} parent=39 // pred_fallthru
        _
    $region40: #{simple_cnn_header_forward.7} parent=5 // pred_fallthru
      _
  $region6: #{simple_cnn_header_forward.7} parent=0 // loop_footer
    %s19 = sadd.s32 1, %s15
  $region7: #{simple_cnn_header_forward.7} parent=0 // loop_footer_branch
    %14 = sbr.rel target = $region3
  $region8: #{simple_cnn_header_forward.7} parent=0 // loop_exit
    _

// kernel: simple_cnn_header_forward.5
$region0: #{simple_cnn_header_forward.5}
  #allocation0 [shape = 'u32[]', space=smem, size = 0x4, offset = 0x4, fixed_abs, tag = 'smem constant byte address 0x4 - core index']
  #allocation1 [shape = 'u32[144,128]{1,0:T(1,128)}', space=vmem, size = 0x12000, scoped, tag = 'internal scratch']
  %s0 = inlined_call_operand.vmem [shape: bf16[8,512], index: 0, kind: input, shape index: {}]
  %s1 = inlined_call_operand.vmem [shape: bf16[512,128], index: 1, kind: input, shape index: {}]
  %s2 = inlined_call_operand.vmem [shape: f32[1,128], index: 2, kind: input, shape index: {}]
  %s3 = inlined_call_operand.vmem [shape: bf16[128,128], index: 3, kind: input, shape index: {}]
  %s4 = inlined_call_operand.vmem [shape: f32[1,128], index: 4, kind: input, shape index: {}]
  %s5 = inlined_call_operand.vmem [shape: bf16[8,128], index: 5, kind: output, shape index: {}]
  %s6 = sld [smem:[#allocation0]]
  $region30: #{simple_cnn_header_forward.5} parent=0
    _
  %s8 = ssub.s32 1, %s6
  %s9 = scalar_select 0, %s8, %s6
  // Predicated region
  $region2: #{simple_cnn_header_forward.5} parent=0 // pred_check
    _
  $region3: #{simple_cnn_header_forward.5} parent=0 // pred_check_branch
    %11 = sbr.rel (0) target = $region5
  $region4: #{simple_cnn_header_forward.5} parent=0 // pred_region
    _
  $region5: #{simple_cnn_header_forward.5} parent=0 // pred_fallthru
    _
  // Predicated region
  $region6: #{simple_cnn_header_forward.5} parent=0 // pred_check
    _
  $region7: #{simple_cnn_header_forward.5} parent=0 // pred_check_branch
    %13 = sbr.rel (0) target = $region9
  $region8: #{simple_cnn_header_forward.5} parent=0 // pred_region
    _
  $region9: #{simple_cnn_header_forward.5} parent=0 // pred_fallthru
    _
  // Predicated region
  $region10: #{simple_cnn_header_forward.5} parent=0 // pred_check
    _
  $region11: #{simple_cnn_header_forward.5} parent=0 // pred_check_branch
    %15 = sbr.rel (0) target = $region13
  $region12: #{simple_cnn_header_forward.5} parent=0 // pred_region
    _
  $region13: #{simple_cnn_header_forward.5} parent=0 // pred_fallthru
    _
  // Predicated region
  $region14: #{simple_cnn_header_forward.5} parent=0 // pred_check
    _
  $region15: #{simple_cnn_header_forward.5} parent=0 // pred_check_branch
    %17 = sbr.rel (0) target = $region17
  $region16: #{simple_cnn_header_forward.5} parent=0 // pred_region
    _
  $region17: #{simple_cnn_header_forward.5} parent=0 // pred_fallthru
    _
  // Predicated region
  $region18: #{simple_cnn_header_forward.5} parent=0 // pred_check
    _
  $region19: #{simple_cnn_header_forward.5} parent=0 // pred_check_branch
    %19 = sbr.rel (0) target = $region21
  $region20: #{simple_cnn_header_forward.5} parent=0 // pred_region
    _
  $region21: #{simple_cnn_header_forward.5} parent=0 // pred_fallthru
    _
  %v21 = vld [vmem:[%s0] sm:$0xff]
  %v22 = vld [vmem:[%s0 + $0x8] sm:$0xff]
  %v23 = vld [vmem:[%s1] sm:$0xf]
  %v24 = vld [vmem:[%s1 + $0x4] sm:$0xf]
  %v25 = vld [vmem:[%s1 + $0x8] sm:$0xf]
  %v26 = vld [vmem:[%s1 + $0xc] sm:$0xf]
  %v27 = vld [vmem:[%s1 + $0x10] sm:$0xf]
  %v28 = vld [vmem:[%s1 + $0x14] sm:$0xf]
  %v29 = vld [vmem:[%s1 + $0x18] sm:$0xf]
  %v30 = vld [vmem:[%s1 + $0x1c] sm:$0xf]
  %v31 = vld [vmem:[%s1 + $0x20] sm:$0xf]
  %v32 = vld [vmem:[%s1 + $0x24] sm:$0xf]
  %v33 = vld [vmem:[%s1 + $0x28] sm:$0xf]
  %v34 = vld [vmem:[%s1 + $0x2c] sm:$0xf]
  %v35 = vld [vmem:[%s1 + $0x30] sm:$0xf]
  %v36 = vld [vmem:[%s1 + $0x34] sm:$0xf]
  %v37 = vld [vmem:[%s1 + $0x38] sm:$0xf]
  %v38 = vld [vmem:[%s1 + $0x3c] sm:$0xf]
  %v39 = vld [vmem:[%s1 + $0x40] sm:$0xf]
  %v40 = vld [vmem:[%s1 + $0x44] sm:$0xf]
  %v41 = vld [vmem:[%s1 + $0x48] sm:$0xf]
  %v42 = vld [vmem:[%s1 + $0x4c] sm:$0xf]
  %v43 = vld [vmem:[%s1 + $0x50] sm:$0xf]
  %v44 = vld [vmem:[%s1 + $0x54] sm:$0xf]
  %v45 = vld [vmem:[%s1 + $0x58] sm:$0xf]
  %v46 = vld [vmem:[%s1 + $0x5c] sm:$0xf]
  %v47 = vld [vmem:[%s1 + $0x60] sm:$0xf]
  %v48 = vld [vmem:[%s1 + $0x64] sm:$0xf]
  %v49 = vld [vmem:[%s1 + $0x68] sm:$0xf]
  %v50 = vld [vmem:[%s1 + $0x6c] sm:$0xf]
  %v51 = vld [vmem:[%s1 + $0x70] sm:$0xf]
  %v52 = vld [vmem:[%s1 + $0x74] sm:$0xf]
  %v53 = vld [vmem:[%s1 + $0x78] sm:$0xf]
  %v54 = vld [vmem:[%s1 + $0x7c] sm:$0xf]
  %v55 = vld [vmem:[%s1 + $0x80] sm:$0xf]
  %v56 = vld [vmem:[%s1 + $0x84] sm:$0xf]
  %v57 = vld [vmem:[%s1 + $0x88] sm:$0xf]
  %v58 = vld [vmem:[%s1 + $0x8c] sm:$0xf]
  %v59 = vld [vmem:[%s1 + $0x90] sm:$0xf]
  %v60 = vld [vmem:[%s1 + $0x94] sm:$0xf]
  %v61 = vld [vmem:[%s1 + $0x98] sm:$0xf]
  %v62 = vld [vmem:[%s1 + $0x9c] sm:$0xf]
  %v63 = vld [vmem:[%s1 + $0xa0] sm:$0xf]
  %v64 = vld [vmem:[%s1 + $0xa4] sm:$0xf]
  %v65 = vld [vmem:[%s1 + $0xa8] sm:$0xf]
  %v66 = vld [vmem:[%s1 + $0xac] sm:$0xf]
  %v67 = vld [vmem:[%s1 + $0xb0] sm:$0xf]
  %v68 = vld [vmem:[%s1 + $0xb4] sm:$0xf]
  %v69 = vld [vmem:[%s1 + $0xb8] sm:$0xf]
  %v70 = vld [vmem:[%s1 + $0xbc] sm:$0xf]
  %v71 = vld [vmem:[%s1 + $0xc0] sm:$0xf]
  %v72 = vld [vmem:[%s1 + $0xc4] sm:$0xf]
  %v73 = vld [vmem:[%s1 + $0xc8] sm:$0xf]
  %v74 = vld [vmem:[%s1 + $0xcc] sm:$0xf]
  %v75 = vld [vmem:[%s1 + $0xd0] sm:$0xf]
  %v76 = vld [vmem:[%s1 + $0xd4] sm:$0xf]
  %v77 = vld [vmem:[%s1 + $0xd8] sm:$0xf]
  %v78 = vld [vmem:[%s1 + $0xdc] sm:$0xf]
  %v79 = vld [vmem:[%s1 + $0xe0] sm:$0xf]
  %v80 = vld [vmem:[%s1 + $0xe4] sm:$0xf]
  %v81 = vld [vmem:[%s1 + $0xe8] sm:$0xf]
  %v82 = vld [vmem:[%s1 + $0xec] sm:$0xf]
  %v83 = vld [vmem:[%s1 + $0xf0] sm:$0xf]
  %v84 = vld [vmem:[%s1 + $0xf4] sm:$0xf]
  %v85 = vld [vmem:[%s1 + $0xf8] sm:$0xf]
  %v86 = vld [vmem:[%s1 + $0xfc] sm:$0xf]
  %v87 = vld [vmem:[%s2] sm:$0x1]
  %v89 = vlaneseq
  %v90 = vshrl.u32 %v89, 7
  %v91 = vsub.s32 0, %v90
  %v92 = vrot.slane %v87, %v91
  %v96 = vunpack.c.l.b16 %v21
  %v97 = vunpack.c.h.b16 %v21
  %v98 = vunpack.c.l.b16 %v22
  %v99 = vunpack.c.h.b16 %v22
  %v100 = vpack.c.b16 %v96, %v96
  %v101 = vpack.c.b16 %v97, %v97
  %v102 = vpack.c.b16 %v98, %v98
  %v103 = vpack.c.b16 %v99, %v99
  %v172 = vunpack.c.l.b16 %v23
  %v173 = vunpack.c.l.b16 %v24
  %v174 = vunpack.c.l.b16 %v25
  %v175 = vunpack.c.l.b16 %v26
  %v176 = vunpack.c.l.b16 %v27
  %v177 = vunpack.c.l.b16 %v28
  %v178 = vunpack.c.l.b16 %v29
  %v179 = vunpack.c.l.b16 %v30
  %v180 = vunpack.c.l.b16 %v31
  %v181 = vunpack.c.l.b16 %v32
  %v182 = vunpack.c.l.b16 %v33
  %v183 = vunpack.c.l.b16 %v34
  %v184 = vunpack.c.l.b16 %v35
  %v185 = vunpack.c.l.b16 %v36
  %v186 = vunpack.c.l.b16 %v37
  %v187 = vunpack.c.l.b16 %v38
  %v188 = vunpack.c.l.b16 %v39
  %v189 = vunpack.c.l.b16 %v40
  %v190 = vunpack.c.l.b16 %v41
  %v191 = vunpack.c.l.b16 %v42
  %v192 = vunpack.c.l.b16 %v43
  %v193 = vunpack.c.l.b16 %v44
  %v194 = vunpack.c.l.b16 %v45
  %v195 = vunpack.c.l.b16 %v46
  %v196 = vunpack.c.l.b16 %v47
  %v197 = vunpack.c.l.b16 %v48
  %v198 = vunpack.c.l.b16 %v49
  %v199 = vunpack.c.l.b16 %v50
  %v200 = vunpack.c.l.b16 %v51
  %v201 = vunpack.c.l.b16 %v52
  %v202 = vunpack.c.l.b16 %v53
  %v203 = vunpack.c.l.b16 %v54
  %v204 = vunpack.c.l.b16 %v55
  %v205 = vunpack.c.l.b16 %v56
  %v206 = vunpack.c.l.b16 %v57
  %v207 = vunpack.c.l.b16 %v58
  %v208 = vunpack.c.l.b16 %v59
  %v209 = vunpack.c.l.b16 %v60
  %v210 = vunpack.c.l.b16 %v61
  %v211 = vunpack.c.l.b16 %v62
  %v212 = vunpack.c.l.b16 %v63
  %v213 = vunpack.c.l.b16 %v64
  %v214 = vunpack.c.l.b16 %v65
  %v215 = vunpack.c.l.b16 %v66
  %v216 = vunpack.c.l.b16 %v67
  %v217 = vunpack.c.l.b16 %v68
  %v218 = vunpack.c.l.b16 %v69
  %v219 = vunpack.c.l.b16 %v70
  %v220 = vunpack.c.l.b16 %v71
  %v221 = vunpack.c.l.b16 %v72
  %v222 = vunpack.c.l.b16 %v73
  %v223 = vunpack.c.l.b16 %v74
  %v224 = vunpack.c.l.b16 %v75
  %v225 = vunpack.c.l.b16 %v76
  %v226 = vunpack.c.l.b16 %v77
  %v227 = vunpack.c.l.b16 %v78
  %v228 = vunpack.c.l.b16 %v79
  %v229 = vunpack.c.l.b16 %v80
  %v230 = vunpack.c.l.b16 %v81
  %v231 = vunpack.c.l.b16 %v82
  %v232 = vunpack.c.l.b16 %v83
  %v233 = vunpack.c.l.b16 %v84
  %v234 = vunpack.c.l.b16 %v85
  %v235 = vunpack.c.l.b16 %v86
  %v236 = vpack.c.b16 %v173, %v172
  %v237 = vpack.c.b16 %v175, %v174
  %v238 = vpack.c.b16 %v177, %v176
  %v239 = vpack.c.b16 %v179, %v178
  %v240 = vpack.c.b16 %v181, %v180
  %v241 = vpack.c.b16 %v183, %v182
  %v242 = vpack.c.b16 %v185, %v184
  %v243 = vpack.c.b16 %v187, %v186
  %v244 = vpack.c.b16 %v189, %v188
  %v245 = vpack.c.b16 %v191, %v190
  %v246 = vpack.c.b16 %v193, %v192
  %v247 = vpack.c.b16 %v195, %v194
  %v248 = vpack.c.b16 %v197, %v196
  %v249 = vpack.c.b16 %v199, %v198
  %v250 = vpack.c.b16 %v201, %v200
  %v251 = vpack.c.b16 %v203, %v202
  %v252 = vpack.c.b16 %v205, %v204
  %v253 = vpack.c.b16 %v207, %v206
  %v254 = vpack.c.b16 %v209, %v208
  %v255 = vpack.c.b16 %v211, %v210
  %v256 = vpack.c.b16 %v213, %v212
  %v257 = vpack.c.b16 %v215, %v214
  %v258 = vpack.c.b16 %v217, %v216
  %v259 = vpack.c.b16 %v219, %v218
  %v260 = vpack.c.b16 %v221, %v220
  %v261 = vpack.c.b16 %v223, %v222
  %v262 = vpack.c.b16 %v225, %v224
  %v263 = vpack.c.b16 %v227, %v226
  %v264 = vpack.c.b16 %v229, %v228
  %v265 = vpack.c.b16 %v231, %v230
  %v266 = vpack.c.b16 %v233, %v232
  %v267 = vpack.c.b16 %v235, %v234
  %300 = vmatprep.subr.bf16.mxu0 0
  %301 = vmatpush1.bf16.msra.mxu0 %v236
  %302 = vmatprep.subr.bf16.mxu0 0
  %303 = vmatpush1.bf16.msra.mxu0 %v237
  %304 = vmatprep.subr.bf16.mxu0 0
  %305 = vmatpush1.bf16.msra.mxu0 %v238
  %306 = vmatprep.subr.bf16.mxu0 0
  %307 = vmatpush1.bf16.msra.mxu0 %v239
  %308 = vmatprep.subr.bf16.mxu0 0
  %309 = vmatpush1.bf16.msra.mxu0 %v240
  %310 = vmatprep.subr.bf16.mxu0 0
  %311 = vmatpush1.bf16.msra.mxu0 %v241
  %312 = vmatprep.subr.bf16.mxu0 0
  %313 = vmatpush1.bf16.msra.mxu0 %v242
  %314 = vmatprep.subr.bf16.mxu0 0
  %315 = vmatpush1.bf16.msra.mxu0 %v243
  %316 = vmatprep.subr.bf16.mxu0 0
  %317 = vmatpush1.bf16.msra.mxu0 %v244
  %318 = vmatprep.subr.bf16.mxu0 0
  %319 = vmatpush1.bf16.msra.mxu0 %v245
  %320 = vmatprep.subr.bf16.mxu0 0
  %321 = vmatpush1.bf16.msra.mxu0 %v246
  %322 = vmatprep.subr.bf16.mxu0 0
  %323 = vmatpush1.bf16.msra.mxu0 %v247
  %324 = vmatprep.subr.bf16.mxu0 0
  %325 = vmatpush1.bf16.msra.mxu0 %v248
  %326 = vmatprep.subr.bf16.mxu0 0
  %327 = vmatpush1.bf16.msra.mxu0 %v249
  %328 = vmatprep.subr.bf16.mxu0 0
  %329 = vmatpush1.bf16.msra.mxu0 %v250
  %330 = vmatprep.subr.bf16.mxu0 0
  %331 = vmatpush1.bf16.msra.mxu0 %v251
  %332 = vmatprep.mubr.bf16.mxu0 %v101
  %333 = vmatmul.mubr.bf16.gmra.mrb[0].mxu0 %v100
  %v334 = vpop.f32.mrb[0].mxu0
  %v335 = vadd.f32 %v92, %v334
  %v336 = vpop.f32.mrb[0].mxu0
  %v337 = vpop.f32.mrb[0].mxu0
  %v338 = vpop.f32.mrb[0].mxu0
  %339 = vdwg.mxu0
  %340 = vmatprep.subr.bf16.mxu0 0
  %341 = vmatpush1.bf16.msra.mxu0 %v252
  %342 = vmatprep.subr.bf16.mxu0 0
  %343 = vmatpush1.bf16.msra.mxu0 %v253
  %344 = vmatprep.subr.bf16.mxu0 0
  %345 = vmatpush1.bf16.msra.mxu0 %v254
  %346 = vmatprep.subr.bf16.mxu0 0
  %347 = vmatpush1.bf16.msra.mxu0 %v255
  %348 = vmatprep.subr.bf16.mxu0 0
  %349 = vmatpush1.bf16.msra.mxu0 %v256
  %350 = vmatprep.subr.bf16.mxu0 0
  %351 = vmatpush1.bf16.msra.mxu0 %v257
  %352 = vmatprep.subr.bf16.mxu0 0
  %353 = vmatpush1.bf16.msra.mxu0 %v258
  %354 = vmatprep.subr.bf16.mxu0 0
  %355 = vmatpush1.bf16.msra.mxu0 %v259
  %356 = vmatprep.subr.bf16.mxu0 0
  %357 = vmatpush1.bf16.msra.mxu0 %v260
  %358 = vmatprep.subr.bf16.mxu0 0
  %359 = vmatpush1.bf16.msra.mxu0 %v261
  %360 = vmatprep.subr.bf16.mxu0 0
  %361 = vmatpush1.bf16.msra.mxu0 %v262
  %362 = vmatprep.subr.bf16.mxu0 0
  %363 = vmatpush1.bf16.msra.mxu0 %v263
  %364 = vmatprep.subr.bf16.mxu0 0
  %365 = vmatpush1.bf16.msra.mxu0 %v264
  %366 = vmatprep.subr.bf16.mxu0 0
  %367 = vmatpush1.bf16.msra.mxu0 %v265
  %368 = vmatprep.subr.bf16.mxu0 0
  %369 = vmatpush1.bf16.msra.mxu0 %v266
  %370 = vmatprep.subr.bf16.mxu0 0
  %371 = vmatpush1.bf16.msra.mxu0 %v267
  %372 = vmatprep.mubr.bf16.mxu0 %v103
  %373 = vmatmul.mubr.bf16.gmra.mrb[0].mxu0 %v102
  %v374 = vpop.f32.mrb[0].mxu0
  %v375 = vadd.f32 %v335, %v374
  %v376 = vpop.f32.mrb[0].mxu0
  %v377 = vpop.f32.mrb[0].mxu0
  %v378 = vpop.f32.mrb[0].mxu0
  %379 = vdwg.mxu0
  %v380 = vmax.f32 %v375, 0.0
  %v381 = vpack.c.bf16 %v380, %v380
  %v382 = vld [vmem:[%s3] sm:$0xf]
  %v383 = vld [vmem:[%s3 + $0x4] sm:$0xf]
  %v384 = vld [vmem:[%s3 + $0x8] sm:$0xf]
  %v385 = vld [vmem:[%s3 + $0xc] sm:$0xf]
  %v386 = vld [vmem:[%s3 + $0x10] sm:$0xf]
  %v387 = vld [vmem:[%s3 + $0x14] sm:$0xf]
  %v388 = vld [vmem:[%s3 + $0x18] sm:$0xf]
  %v389 = vld [vmem:[%s3 + $0x1c] sm:$0xf]
  %v390 = vld [vmem:[%s3 + $0x20] sm:$0xf]
  %v391 = vld [vmem:[%s3 + $0x24] sm:$0xf]
  %v392 = vld [vmem:[%s3 + $0x28] sm:$0xf]
  %v393 = vld [vmem:[%s3 + $0x2c] sm:$0xf]
  %v394 = vld [vmem:[%s3 + $0x30] sm:$0xf]
  %v395 = vld [vmem:[%s3 + $0x34] sm:$0xf]
  %v396 = vld [vmem:[%s3 + $0x38] sm:$0xf]
  %v397 = vld [vmem:[%s3 + $0x3c] sm:$0xf]
  %v398 = vld [vmem:[%s4] sm:$0x1]
  %v400 = vlaneseq
  %v401 = vshrl.u32 %v400, 7
  %v402 = vsub.s32 0, %v401
  %v403 = vrot.slane %v398, %v402
  %v421 = vunpack.c.l.b16 %v382
  %v422 = vunpack.c.l.b16 %v383
  %v423 = vunpack.c.l.b16 %v384
  %v424 = vunpack.c.l.b16 %v385
  %v425 = vunpack.c.l.b16 %v386
  %v426 = vunpack.c.l.b16 %v387
  %v427 = vunpack.c.l.b16 %v388
  %v428 = vunpack.c.l.b16 %v389
  %v429 = vunpack.c.l.b16 %v390
  %v430 = vunpack.c.l.b16 %v391
  %v431 = vunpack.c.l.b16 %v392
  %v432 = vunpack.c.l.b16 %v393
  %v433 = vunpack.c.l.b16 %v394
  %v434 = vunpack.c.l.b16 %v395
  %v435 = vunpack.c.l.b16 %v396
  %v436 = vunpack.c.l.b16 %v397
  %v437 = vpack.c.b16 %v422, %v421
  %v438 = vpack.c.b16 %v424, %v423
  %v439 = vpack.c.b16 %v426, %v425
  %v440 = vpack.c.b16 %v428, %v427
  %v441 = vpack.c.b16 %v430, %v429
  %v442 = vpack.c.b16 %v432, %v431
  %v443 = vpack.c.b16 %v434, %v433
  %v444 = vpack.c.b16 %v436, %v435
  %453 = vmatprep.subr.bf16.mxu0 0
  %454 = vmatpush1.bf16.msra.mxu0 %v437
  %455 = vmatprep.subr.bf16.mxu0 0
  %456 = vmatpush1.bf16.msra.mxu0 %v438
  %457 = vmatprep.subr.bf16.mxu0 0
  %458 = vmatpush1.bf16.msra.mxu0 %v439
  %459 = vmatprep.subr.bf16.mxu0 0
  %460 = vmatpush1.bf16.msra.mxu0 %v440
  %461 = vmatprep.subr.bf16.mxu0 0
  %462 = vmatpush1.bf16.msra.mxu0 %v441
  %463 = vmatprep.subr.bf16.mxu0 0
  %464 = vmatpush1.bf16.msra.mxu0 %v442
  %465 = vmatprep.subr.bf16.mxu0 0
  %466 = vmatpush1.bf16.msra.mxu0 %v443
  %467 = vmatprep.subr.bf16.mxu0 0
  %468 = vmatpush1.bf16.msra.mxu0 %v444
  %469 = vmatprep.subr.bf16.mxu0 0
  %470 = vmatpush1.bf16.msra.mxu0 0
  %471 = vmatprep.subr.bf16.mxu0 0
  %472 = vmatpush1.bf16.msra.mxu0 0
  %473 = vmatprep.subr.bf16.mxu0 0
  %474 = vmatpush1.bf16.msra.mxu0 0
  %475 = vmatprep.subr.bf16.mxu0 0
  %476 = vmatpush1.bf16.msra.mxu0 0
  %477 = vmatprep.subr.bf16.mxu0 0
  %478 = vmatpush1.bf16.msra.mxu0 0
  %479 = vmatprep.subr.bf16.mxu0 0
  %480 = vmatpush1.bf16.msra.mxu0 0
  %481 = vmatprep.subr.bf16.mxu0 0
  %482 = vmatpush1.bf16.msra.mxu0 0
  %483 = vmatprep.subr.bf16.mxu0 0
  %484 = vmatpush1.bf16.msra.mxu0 0
  %485 = vmatprep.mubr.bf16.mxu0 0
  %486 = vmatmul.mubr.bf16.gmra.mrb[0].mxu0 %v381
  %v487 = vpop.f32.mrb[0].mxu0
  %v488 = vadd.f32 %v403, %v487
  %v489 = vpop.f32.mrb[0].mxu0
  %v490 = vpop.f32.mrb[0].mxu0
  %v491 = vpop.f32.mrb[0].mxu0
  %492 = vdwg.mxu0
  %v493 = vmax.f32 %v488, 0.0
  %v494 = vpack.c.bf16 %v493, %v493
  %495 = vst [vmem:[%s5] sm:$0xf] %v494
  // Predicated region
  $region22: #{simple_cnn_header_forward.5} parent=0 // pred_check
    _
  $region23: #{simple_cnn_header_forward.5} parent=0 // pred_check_branch
    %497 = sbr.rel (0) target = $region25
  $region24: #{simple_cnn_header_forward.5} parent=0 // pred_region
    _
  $region25: #{simple_cnn_header_forward.5} parent=0 // pred_fallthru
    _
  // Predicated region
  $region26: #{simple_cnn_header_forward.5} parent=0 // pred_check
    _
  $region27: #{simple_cnn_header_forward.5} parent=0 // pred_check_branch
    %499 = sbr.rel (0) target = $region29
  $region28: #{simple_cnn_header_forward.5} parent=0 // pred_region
    _
  $region29: #{simple_cnn_header_forward.5} parent=0 // pred_fallthru
    _

</llo_original>
